<compile_context>
chip_gen: v6e
topology: v6e:2x2x1
jax: 0.10.0
libtpu: 0.0.40
codegen_flags: <defaults>
</compile_context>

<pallas_src>
import jax
import jax.numpy as jnp
from jax.experimental import pallas as pl
from jax.experimental.pallas import tpu as pltpu

# ------------------------- config (small synthetic BERT) -------------------------
VOCAB = 50
MAX_POS = 16
HIDDEN = 32
NUM_HEADS = 4
HEAD_DIM = HIDDEN // NUM_HEADS
INTER = 64
N_LAYERS = 2
LN_EPS = 1e-12
NUM_TOWERS = 2            # shared bert + mrpc bert

DATASET_NAMES = ["mrpc", "sst2"]       # num_task = 2, taskdic["mrpc"] = 0
NUM_TASK = len(DATASET_NAMES)
TASK_ID = DATASET_NAMES.index("mrpc")


# ------------------------------ in-kernel helpers --------------------------------
def _layernorm(x, g, b):
    mu = jnp.mean(x, axis=-1, keepdims=True)
    var = jnp.mean((x - mu) ** 2, axis=-1, keepdims=True)
    return (x - mu) * jax.lax.rsqrt(var + LN_EPS) * g + b


def _gelu(x):
    # TODO(synk): HF bert-base uses exact erf-GELU; tanh approximation kept (safe Mosaic lowering).
    c = jnp.float32(0.7978845608028654)  # sqrt(2/pi)
    return 0.5 * x * (1.0 + jnp.tanh(c * (x + 0.044715 * x * x * x)))


# --------------------------------- Pallas kernels --------------------------------
def _tower_kernel(onehot_ref, bias_ref, posk_ref, wemb_ref, elng_ref, elnb_ref,
                  wq_ref, bq_ref, wk_ref, bk_ref, wv_ref, bv_ref,
                  wo_ref, bo_ref, ln1g_ref, ln1b_ref,
                  w1_ref, b1_ref, w2_ref, b2_ref, ln2g_ref, ln2b_ref,
                  cls_ref):
    """One full BERT tower (grid step = tower index). Activations stay in VMEM."""
    f32 = jnp.float32
    bf16 = jnp.bfloat16
    T = onehot_ref.shape[0]          # B * S
    Bk = cls_ref.shape[0]            # batch
    S = T // Bk
    scale = jnp.float32(1.0 / (HEAD_DIM ** 0.5))
    bias = bias_ref[...]             # (T, T) block-diagonal + padding mask bias

    # ---- embeddings: one-hot(ids) @ word_emb (MXU gather) + (pos + token-type) + LN ----
    emb = jnp.dot(onehot_ref[...], wemb_ref[...], preferred_element_type=f32)   # (T, H)
    x = _layernorm(emb + posk_ref[...], elng_ref[...], elnb_ref[...])            # (T, H) f32

    # ---- encoder layers: static unroll, x resident, weights indexed per layer ----
    for l in range(N_LAYERS):
        x_bf = x.astype(bf16)
        q = jnp.dot(x_bf, wq_ref[l], preferred_element_type=f32) + bq_ref[l]     # (T, H)
        k = jnp.dot(x_bf, wk_ref[l], preferred_element_type=f32) + bk_ref[l]
        v = jnp.dot(x_bf, wv_ref[l], preferred_element_type=f32) + bv_ref[l]

        attn = None
        for h in range(NUM_HEADS):
            lo = h * HEAD_DIM
            hi = lo + HEAD_DIM
            qh = q[:, lo:hi].astype(bf16)                                        # (T, HD)
            kh = k[:, lo:hi].astype(bf16)
            vh = v[:, lo:hi].astype(bf16)
            s = jnp.einsum("qd,kd->qk", qh, kh,
                           preferred_element_type=f32) * scale + bias            # (T, T)
            m = jnp.max(s, axis=-1, keepdims=True)
            p = jnp.exp(s - m)
            p = p * pl.reciprocal(jnp.sum(p, axis=-1, keepdims=True), approx=True)
            ctx = jnp.dot(p.astype(bf16), vh, preferred_element_type=f32)        # (T, HD)
            # accumulate the output projection per head -> no lane concatenate
            ho = jnp.dot(ctx.astype(bf16), wo_ref[l, lo:hi, :],
                         preferred_element_type=f32)                             # (T, H)
            attn = ho if attn is None else attn + ho
        attn = attn + bo_ref[l]

        h1 = _layernorm(x + attn, ln1g_ref[l], ln1b_ref[l])
        ff = jnp.dot(h1.astype(bf16), w1_ref[l], preferred_element_type=f32) + b1_ref[l]
        ff = _gelu(ff)
        ff = jnp.dot(ff.astype(bf16), w2_ref[l], preferred_element_type=f32) + b2_ref[l]
        x = _layernorm(h1 + ff, ln2g_ref[l], ln2b_ref[l])

    # ---- write the [CLS] row (position 0) of every batch element ----
    for b in range(Bk):
        cls_ref[b:b + 1, :] = x[b * S:b * S + 1, :].astype(cls_ref.dtype)


def _head_kernel(shared_ref, task_ref, wts_ref, wtt_ref, bt_ref, wc_ref, bc_ref,
                 out_ref, cls_ref):
    f32 = jnp.float32
    bf16 = jnp.bfloat16
    shared = shared_ref[...]                           # (B, H) f32
    task = task_ref[...]                               # (B, H) f32
    # out = concat(shared, task) @ Wt + bt  -> computed without the lane concat:
    out = (jnp.dot(shared.astype(bf16), wts_ref[...], preferred_element_type=f32)
           + jnp.dot(task.astype(bf16), wtt_ref[...], preferred_element_type=f32)
           + bt_ref[...])
    out_ref[...] = out.astype(out_ref.dtype)
    # GradientReverseFunction forward == identity (x * 1.0); only backward flips sign.
    cls_ref[...] = (jnp.dot(shared.astype(bf16), wc_ref[...], preferred_element_type=f32)
                    + bc_ref[...]).astype(cls_ref.dtype)


# --------------------------------- parameters --------------------------------------
def init_bert_params(key):
    n_keys = 3 + N_LAYERS * 6
    keys = jax.random.split(key, n_keys)
    p = {
        "word_emb": 0.02 * jax.random.normal(keys[0], (VOCAB, HIDDEN), jnp.float32),
        "pos_emb": 0.02 * jax.random.normal(keys[1], (MAX_POS, HIDDEN), jnp.float32),
        "tok_emb": 0.02 * jax.random.normal(keys[2], (2, HIDDEN), jnp.float32),
        "emb_ln_g": jnp.ones((1, HIDDEN), jnp.float32),
        "emb_ln_b": jnp.zeros((1, HIDDEN), jnp.float32),
        "layers": [],
    }
    ki = 3
    for _ in range(N_LAYERS):
        lk = keys[ki:ki + 6]
        ki += 6
        lp = {
            "wq": 0.02 * jax.random.normal(lk[0], (HIDDEN, HIDDEN), jnp.float32),
            "bq": jnp.zeros((1, HIDDEN), jnp.float32),
            "wk": 0.02 * jax.random.normal(lk[1], (HIDDEN, HIDDEN), jnp.float32),
            "bk": jnp.zeros((1, HIDDEN), jnp.float32),
            "wv": 0.02 * jax.random.normal(lk[2], (HIDDEN, HIDDEN), jnp.float32),
            "bv": jnp.zeros((1, HIDDEN), jnp.float32),
            "wo": 0.02 * jax.random.normal(lk[3], (HIDDEN, HIDDEN), jnp.float32),
            "bo": jnp.zeros((1, HIDDEN), jnp.float32),
            "ln1_g": jnp.ones((1, HIDDEN), jnp.float32),
            "ln1_b": jnp.zeros((1, HIDDEN), jnp.float32),
            "w1": 0.02 * jax.random.normal(lk[4], (HIDDEN, INTER), jnp.float32),
            "b1": jnp.zeros((1, INTER), jnp.float32),
            "w2": 0.02 * jax.random.normal(lk[5], (INTER, HIDDEN), jnp.float32),
            "b2": jnp.zeros((1, HIDDEN), jnp.float32),
            "ln2_g": jnp.ones((1, HIDDEN), jnp.float32),
            "ln2_b": jnp.zeros((1, HIDDEN), jnp.float32),
        }
        p["layers"].append(lp)
    return p


def init_all_params(key):
    k_shared, k_mrpc, k_lin, k_clf = jax.random.split(key, 4)
    return {
        "shared_bert": init_bert_params(k_shared),
        "mrpc_bert": init_bert_params(k_mrpc),
        # nn.Linear(2H, 2): stored as (in, out) so y = x @ W + b
        "linear_for_mrpc_w": 0.02 * jax.random.normal(k_lin, (2 * HIDDEN, 2), jnp.float32),
        "linear_for_mrpc_b": jnp.zeros((1, 2), jnp.float32),
        # nn.Linear(H, num_task)
        "classifier_w": 0.02 * jax.random.normal(k_clf, (HIDDEN, NUM_TASK), jnp.float32),
        "classifier_b": jnp.zeros((1, NUM_TASK), jnp.float32),
    }


def pack_tower_params(tower_params_list):
    """Stack per-tower parameter trees along a leading tower axis.
    Matmul weights -> bf16 (MXU-native); biases / LN / pos embeddings stay f32."""
    def stack_top(name, dtype=None):
        a = jnp.stack([p[name] for p in tower_params_list], axis=0)
        return a.astype(dtype) if dtype is not None else a

    def stack_layers(name, dtype=None):
        a = jnp.stack(
            [jnp.stack([lp[name] for lp in p["layers"]], axis=0) for p in tower_params_list],
            axis=0)
        return a.astype(dtype) if dtype is not None else a

    packed = {
        "word_emb": stack_top("word_emb", jnp.bfloat16),    # (2, VOCAB, H)
        "pos_emb": stack_top("pos_emb"),                    # (2, MAX_POS, H)
        "tok_emb": stack_top("tok_emb"),                    # (2, 2, H)
        "emb_ln_g": stack_top("emb_ln_g"),                  # (2, 1, H)
        "emb_ln_b": stack_top("emb_ln_b"),
    }
    for nm in ("wq", "wk", "wv", "wo", "w1", "w2"):
        packed[nm] = stack_layers(nm, jnp.bfloat16)         # (2, L, ...)
    for nm in ("bq", "bk", "bv", "bo", "ln1_g", "ln1_b", "b1", "b2", "ln2_g", "ln2_b"):
        packed[nm] = stack_layers(nm)
    return packed


def pack_head_params(p):
    return {
        "wt_s": p["linear_for_mrpc_w"][:HIDDEN].astype(jnp.bfloat16),   # (H, 2)
        "wt_t": p["linear_for_mrpc_w"][HIDDEN:].astype(jnp.bfloat16),   # (H, 2)
        "bt": p["linear_for_mrpc_b"],                                   # (1, 2)
        "wc": p["classifier_w"].astype(jnp.bfloat16),                   # (H, NUM_TASK)
        "bc": p["classifier_b"],                                        # (1, NUM_TASK)
    }


# --------------------------------- forward -----------------------------------------
@jax.jit
def bert_multitask_forward_mrpc(packed, head, input_ids, input_mask):
    B, S = input_ids.shape
    T = B * S

    # Tiny host-side (XLA) prep — everything else happens inside the fused kernel.
    onehot = (input_ids.reshape(T, 1)
              == jnp.arange(VOCAB, dtype=input_ids.dtype)[None, :]).astype(jnp.bfloat16)
    # positional + token-type(0) embedding per tower, tiled over batch: (2, T, H)
    posk = packed["pos_emb"][:, :S, :] + packed["tok_emb"][:, 0:1, :]
    posk = jnp.tile(posk, (1, B, 1))
    # block-diagonal additive attention bias over the flattened T axis:
    #   0 if (same batch element AND key not padded) else -1e4   -> identical softmax
    batch_id = jnp.repeat(jnp.arange(B, dtype=jnp.int32), S)
    keep = input_mask.reshape(T) > 0.5
    attn_bias = jnp.where((batch_id[:, None] == batch_id[None, :]) & keep[None, :],
                          0.0, -10000.0).astype(jnp.float32)                     # (T, T)

    def tower_spec(x):
        n = x.ndim
        return pl.BlockSpec((None,) + x.shape[1:], lambda t, n=n: (t,) + (0,) * (n - 1))

    def bcast_spec(x):
        n = x.ndim
        return pl.BlockSpec(x.shape, lambda t, n=n: (0,) * n)

    tower_args = (
        onehot, attn_bias, posk,
        packed["word_emb"], packed["emb_ln_g"], packed["emb_ln_b"],
        packed["wq"], packed["bq"], packed["wk"], packed["bk"],
        packed["wv"], packed["bv"], packed["wo"], packed["bo"],
        packed["ln1_g"], packed["ln1_b"],
        packed["w1"], packed["b1"], packed["w2"], packed["b2"],
        packed["ln2_g"], packed["ln2_b"],
    )
    in_specs = ([bcast_spec(onehot), bcast_spec(attn_bias)]
                + [tower_spec(a) for a in tower_args[2:]])

    cls_all = pl.pallas_call(
        _tower_kernel,
        grid=(NUM_TOWERS,),
        in_specs=in_specs,
        out_specs=pl.BlockSpec((None, B, HIDDEN), lambda t: (t, 0, 0)),
        out_shape=jax.ShapeDtypeStruct((NUM_TOWERS, B, HIDDEN), jnp.float32),
        compiler_params=pltpu.CompilerParams(dimension_semantics=("parallel",)),
    )(*tower_args)

    clf_feature_shared = cls_all[0]      # shared bert  [CLS]  (B, H)
    out_mrpc = cls_all[1]                # mrpc bert    [CLS]  (B, H)

    out, cls_type = pl.pallas_call(
        _head_kernel,
        out_shape=(jax.ShapeDtypeStruct((B, 2), jnp.float32),
                   jax.ShapeDtypeStruct((B, NUM_TASK), jnp.float32)),
    )(clf_feature_shared, out_mrpc,
      head["wt_s"], head["wt_t"], head["bt"], head["wc"], head["bc"])

    return out, cls_type, clf_feature_shared, out_mrpc


# ------------------------------------ main -----------------------------------------
if __name__ == "__main__":
    B, S = 2, 8
    key = jax.random.PRNGKey(0)
    k_params, k_ids = jax.random.split(key)

    raw_params = init_all_params(k_params)
    packed = pack_tower_params([raw_params["shared_bert"], raw_params["mrpc_bert"]])
    head = pack_head_params(raw_params)

    input_ids = jax.random.randint(k_ids, (B, S), 0, VOCAB, dtype=jnp.int32)
    # attention mask: second example is padded after position 5
    lengths = jnp.array([S, 5], dtype=jnp.int32)
    input_mask = (jnp.arange(S)[None, :] < lengths[:, None]).astype(jnp.float32)

    out, cls_type, clf_feature_shared, out_mrpc = bert_multitask_forward_mrpc(
        packed, head, input_ids, input_mask
    )
    type_id = TASK_ID  # python int, like the PyTorch module

    jax.block_until_ready((out, cls_type, clf_feature_shared, out_mrpc))
    assert out.shape == (B, 2)
    assert cls_type.shape == (B, NUM_TASK)
    assert clf_feature_shared.shape == (B, HIDDEN)
    assert out_mrpc.shape == (B, HIDDEN)
    assert type_id == 0
    print("KERNEL_OK")
</pallas_src>

<mosaic_0001>
module attributes {stable_mosaic.version = 11 : i64} {
  func.func @_head_kernel(%arg0: memref<2x32xf32, #tpu.memory_space<vmem>>, %arg1: memref<2x32xf32, #tpu.memory_space<vmem>>, %arg2: memref<32x2xbf16, #tpu.memory_space<vmem>>, %arg3: memref<32x2xbf16, #tpu.memory_space<vmem>>, %arg4: memref<1x2xf32, #tpu.memory_space<vmem>>, %arg5: memref<32x2xbf16, #tpu.memory_space<vmem>>, %arg6: memref<1x2xf32, #tpu.memory_space<vmem>>, %arg7: memref<2x2xf32, #tpu.memory_space<vmem>>, %arg8: memref<2x2xf32, #tpu.memory_space<vmem>>) attributes {dimension_semantics = [], scalar_prefetch = 0 : i64, scratch_operands = 0 : i64, tpu.core_type = #tpu.core_type<tc>} {
    %c0 = arith.constant 0 : index
    %c0_0 = arith.constant 0 : index
    %0 = vector.load %arg0[%c0, %c0_0] : memref<2x32xf32, #tpu.memory_space<vmem>>, vector<2x32xf32>
    %c0_1 = arith.constant 0 : index
    %c0_2 = arith.constant 0 : index
    %1 = vector.load %arg1[%c0_1, %c0_2] : memref<2x32xf32, #tpu.memory_space<vmem>>, vector<2x32xf32>
    %2 = arith.truncf %0 : vector<2x32xf32> to vector<2x32xbf16>
    %c0_3 = arith.constant 0 : index
    %c0_4 = arith.constant 0 : index
    %3 = vector.load %arg2[%c0_3, %c0_4] : memref<32x2xbf16, #tpu.memory_space<vmem>>, vector<32x2xbf16>
    %cst = arith.constant dense<0.000000e+00> : vector<2x2xf32>
    %4 = tpu.matmul %2, %3, %cst {dimension_numbers = #tpu.dot_dimension_numbers<[1], [0], [0], [1], [0, 0, 1, 1], [], []>} : vector<2x32xbf16>, vector<32x2xbf16>, vector<2x2xf32> -> vector<2x2xf32>
    %5 = arith.truncf %1 : vector<2x32xf32> to vector<2x32xbf16>
    %c0_5 = arith.constant 0 : index
    %c0_6 = arith.constant 0 : index
    %6 = vector.load %arg3[%c0_5, %c0_6] : memref<32x2xbf16, #tpu.memory_space<vmem>>, vector<32x2xbf16>
    %cst_7 = arith.constant dense<0.000000e+00> : vector<2x2xf32>
    %7 = tpu.matmul %5, %6, %cst_7 {dimension_numbers = #tpu.dot_dimension_numbers<[1], [0], [0], [1], [0, 0, 1, 1], [], []>} : vector<2x32xbf16>, vector<32x2xbf16>, vector<2x2xf32> -> vector<2x2xf32>
    %8 = arith.addf %4, %7 : vector<2x2xf32>
    %c0_8 = arith.constant 0 : index
    %c0_9 = arith.constant 0 : index
    %9 = vector.load %arg4[%c0_8, %c0_9] : memref<1x2xf32, #tpu.memory_space<vmem>>, vector<1x2xf32>
    %10 = vector.broadcast %9 : vector<1x2xf32> to vector<2x2xf32>
    %11 = arith.addf %8, %10 : vector<2x2xf32>
    %c0_10 = arith.constant 0 : index
    %c0_11 = arith.constant 0 : index
    %12 = vector.load %arg7[%c0_10, %c0_11] : memref<2x2xf32, #tpu.memory_space<vmem>>, vector<2x2xf32>
    tpu.vector_store %arg7[%c0_10, %c0_11], %11 {strides = array<i32>} : memref<2x2xf32, #tpu.memory_space<vmem>>, vector<2x2xf32>,
    %13 = arith.truncf %0 : vector<2x32xf32> to vector<2x32xbf16>
    %c0_12 = arith.constant 0 : index
    %c0_13 = arith.constant 0 : index
    %14 = vector.load %arg5[%c0_12, %c0_13] : memref<32x2xbf16, #tpu.memory_space<vmem>>, vector<32x2xbf16>
    %cst_14 = arith.constant dense<0.000000e+00> : vector<2x2xf32>
    %15 = tpu.matmul %13, %14, %cst_14 {dimension_numbers = #tpu.dot_dimension_numbers<[1], [0], [0], [1], [0, 0, 1, 1], [], []>} : vector<2x32xbf16>, vector<32x2xbf16>, vector<2x2xf32> -> vector<2x2xf32>
    %c0_15 = arith.constant 0 : index
    %c0_16 = arith.constant 0 : index
    %16 = vector.load %arg6[%c0_15, %c0_16] : memref<1x2xf32, #tpu.memory_space<vmem>>, vector<1x2xf32>
    %17 = vector.broadcast %16 : vector<1x2xf32> to vector<2x2xf32>
    %18 = arith.addf %15, %17 : vector<2x2xf32>
    %c0_17 = arith.constant 0 : index
    %c0_18 = arith.constant 0 : index
    %19 = vector.load %arg8[%c0_17, %c0_18] : memref<2x2xf32, #tpu.memory_space<vmem>>, vector<2x2xf32>
    tpu.vector_store %arg8[%c0_17, %c0_18], %18 {strides = array<i32>} : memref<2x2xf32, #tpu.memory_space<vmem>>, vector<2x2xf32>,
    return
  }
}

module attributes {stable_mosaic.version = 11 : i64} {
  func.func @_tower_kernel(%arg0: i32, %arg1: memref<16x50xbf16, #tpu.memory_space<vmem>>, %arg2: memref<16x16xf32, #tpu.memory_space<vmem>>, %arg3: memref<1x16x32xf32, #tpu.memory_space<vmem>>, %arg4: memref<1x50x32xbf16, #tpu.memory_space<vmem>>, %arg5: memref<1x1x32xf32, #tpu.memory_space<vmem>>, %arg6: memref<1x1x32xf32, #tpu.memory_space<vmem>>, %arg7: memref<1x2x32x32xbf16, #tpu.memory_space<vmem>>, %arg8: memref<1x2x1x32xf32, #tpu.memory_space<vmem>>, %arg9: memref<1x2x32x32xbf16, #tpu.memory_space<vmem>>, %arg10: memref<1x2x1x32xf32, #tpu.memory_space<vmem>>, %arg11: memref<1x2x32x32xbf16, #tpu.memory_space<vmem>>, %arg12: memref<1x2x1x32xf32, #tpu.memory_space<vmem>>, %arg13: memref<1x2x32x32xbf16, #tpu.memory_space<vmem>>, %arg14: memref<1x2x1x32xf32, #tpu.memory_space<vmem>>, %arg15: memref<1x2x1x32xf32, #tpu.memory_space<vmem>>, %arg16: memref<1x2x1x32xf32, #tpu.memory_space<vmem>>, %arg17: memref<1x2x32x64xbf16, #tpu.memory_space<vmem>>, %arg18: memref<1x2x1x64xf32, #tpu.memory_space<vmem>>, %arg19: memref<1x2x64x32xbf16, #tpu.memory_space<vmem>>, %arg20: memref<1x2x1x32xf32, #tpu.memory_space<vmem>>, %arg21: memref<1x2x1x32xf32, #tpu.memory_space<vmem>>, %arg22: memref<1x2x1x32xf32, #tpu.memory_space<vmem>>, %arg23: memref<1x2x32xf32, #tpu.memory_space<vmem>>) attributes {dimension_semantics = [#tpu.dimension_semantics<parallel>], iteration_bounds = array<i64: 2>, scalar_prefetch = 0 : i64, scratch_operands = 0 : i64, tpu.core_type = #tpu.core_type<tc>, window_params = [{pipeline_mode = #tpu.pipeline_mode<synchronous>, transform_indices = @transform_0, window_bounds = array<i64: 16, 50>}, {pipeline_mode = #tpu.pipeline_mode<synchronous>, transform_indices = @transform_1, window_bounds = array<i64: 16, 16>}, {transform_indices = @transform_2, window_bounds = array<i64: 1, 16, 32>}, {transform_indices = @transform_3, window_bounds = array<i64: 1, 50, 32>}, {transform_indices = @transform_4, window_bounds = array<i64: 1, 1, 32>}, {transform_indices = @transform_5, window_bounds = array<i64: 1, 1, 32>}, {transform_indices = @transform_6, window_bounds = array<i64: 1, 2, 32, 32>}, {transform_indices = @transform_7, window_bounds = array<i64: 1, 2, 1, 32>}, {transform_indices = @transform_8, window_bounds = array<i64: 1, 2, 32, 32>}, {transform_indices = @transform_9, window_bounds = array<i64: 1, 2, 1, 32>}, {transform_indices = @transform_10, window_bounds = array<i64: 1, 2, 32, 32>}, {transform_indices = @transform_11, window_bounds = array<i64: 1, 2, 1, 32>}, {transform_indices = @transform_12, window_bounds = array<i64: 1, 2, 32, 32>}, {transform_indices = @transform_13, window_bounds = array<i64: 1, 2, 1, 32>}, {transform_indices = @transform_14, window_bounds = array<i64: 1, 2, 1, 32>}, {transform_indices = @transform_15, window_bounds = array<i64: 1, 2, 1, 32>}, {transform_indices = @transform_16, window_bounds = array<i64: 1, 2, 32, 64>}, {transform_indices = @transform_17, window_bounds = array<i64: 1, 2, 1, 64>}, {transform_indices = @transform_18, window_bounds = array<i64: 1, 2, 64, 32>}, {transform_indices = @transform_19, window_bounds = array<i64: 1, 2, 1, 32>}, {transform_indices = @transform_20, window_bounds = array<i64: 1, 2, 1, 32>}, {transform_indices = @transform_21, window_bounds = array<i64: 1, 2, 1, 32>}, {transform_indices = @transform_22, window_bounds = array<i64: 1, 2, 32>}]} {
    %c0 = arith.constant 0 : index
    %c0_0 = arith.constant 0 : index
    %0 = vector.load %arg2[%c0, %c0_0] : memref<16x16xf32, #tpu.memory_space<vmem>>, vector<16x16xf32>
    %c0_1 = arith.constant 0 : index
    %c0_2 = arith.constant 0 : index
    %1 = vector.load %arg1[%c0_1, %c0_2] : memref<16x50xbf16, #tpu.memory_space<vmem>>, vector<16x50xbf16>
    %c0_3 = arith.constant 0 : index
    %c0_4 = arith.constant 0 : index
    %c0_5 = arith.constant 0 : index
    %2 = vector.load %arg4[%c0_3, %c0_4, %c0_5] : memref<1x50x32xbf16, #tpu.memory_space<vmem>>, vector<1x50x32xbf16>
    %3 = vector.shape_cast %2 : vector<1x50x32xbf16> to vector<50x32xbf16>
    %cst = arith.constant dense<0.000000e+00> : vector<16x32xf32>
    %4 = tpu.matmul %1, %3, %cst {dimension_numbers = #tpu.dot_dimension_numbers<[1], [0], [0], [1], [0, 0, 1, 1], [], []>} : vector<16x50xbf16>, vector<50x32xbf16>, vector<16x32xf32> -> vector<16x32xf32>
    %c0_6 = arith.constant 0 : index
    %c0_7 = arith.constant 0 : index
    %c0_8 = arith.constant 0 : index
    %5 = vector.load %arg3[%c0_6, %c0_7, %c0_8] : memref<1x16x32xf32, #tpu.memory_space<vmem>>, vector<1x16x32xf32>
    %6 = vector.shape_cast %5 : vector<1x16x32xf32> to vector<16x32xf32>
    %7 = arith.addf %4, %6 : vector<16x32xf32>
    %c0_9 = arith.constant 0 : index
    %c0_10 = arith.constant 0 : index
    %c0_11 = arith.constant 0 : index
    %8 = vector.load %arg5[%c0_9, %c0_10, %c0_11] : memref<1x1x32xf32, #tpu.memory_space<vmem>>, vector<1x1x32xf32>
    %9 = vector.shape_cast %8 : vector<1x1x32xf32> to vector<1x32xf32>
    %c0_12 = arith.constant 0 : index
    %c0_13 = arith.constant 0 : index
    %c0_14 = arith.constant 0 : index
    %10 = vector.load %arg6[%c0_12, %c0_13, %c0_14] : memref<1x1x32xf32, #tpu.memory_space<vmem>>, vector<1x1x32xf32>
    %11 = vector.shape_cast %10 : vector<1x1x32xf32> to vector<1x32xf32>
    %cst_15 = arith.constant dense<0.000000e+00> : vector<16xf32>
    %12 = vector.multi_reduction <add>, %7, %cst_15 [1] : vector<16x32xf32> to vector<16xf32>
    %13 = vector.shape_cast %12 : vector<16xf32> to vector<16x1xf32>
    %cst_16 = arith.constant 3.200000e+01 : f32
    %14 = vector.broadcast %cst_16 : f32 to vector<16x1xf32>
    %15 = arith.divf %13, %14 : vector<16x1xf32>
    %16 = vector.broadcast %15 : vector<16x1xf32> to vector<16x32xf32>
    %17 = arith.subf %7, %16 : vector<16x32xf32>
    %18 = arith.mulf %17, %17 : vector<16x32xf32>
    %cst_17 = arith.constant dense<0.000000e+00> : vector<16xf32>
    %19 = vector.multi_reduction <add>, %18, %cst_17 [1] : vector<16x32xf32> to vector<16xf32>
    %20 = vector.shape_cast %19 : vector<16xf32> to vector<16x1xf32>
    %cst_18 = arith.constant 3.200000e+01 : f32
    %21 = vector.broadcast %cst_18 : f32 to vector<16x1xf32>
    %22 = arith.divf %20, %21 : vector<16x1xf32>
    %23 = vector.broadcast %15 : vector<16x1xf32> to vector<16x32xf32>
    %24 = arith.subf %7, %23 : vector<16x32xf32>
    %cst_19 = arith.constant 9.99999996E-13 : f32
    %25 = vector.broadcast %cst_19 : f32 to vector<16x1xf32>
    %26 = arith.addf %22, %25 : vector<16x1xf32>
    %27 = math.rsqrt %26 : vector<16x1xf32>
    %28 = vector.broadcast %27 : vector<16x1xf32> to vector<16x32xf32>
    %29 = arith.mulf %24, %28 : vector<16x32xf32>
    %30 = vector.broadcast %9 : vector<1x32xf32> to vector<16x32xf32>
    %31 = arith.mulf %29, %30 : vector<16x32xf32>
    %32 = vector.broadcast %11 : vector<1x32xf32> to vector<16x32xf32>
    %33 = arith.addf %31, %32 : vector<16x32xf32>
    %34 = arith.truncf %33 : vector<16x32xf32> to vector<16x32xbf16>
    %c0_20 = arith.constant 0 : index
    %c0_21 = arith.constant 0 : index
    %c0_22 = arith.constant 0 : index
    %c0_23 = arith.constant 0 : index
    %35 = vector.load %arg7[%c0_20, %c0_21, %c0_22, %c0_23] : memref<1x2x32x32xbf16, #tpu.memory_space<vmem>>, vector<1x1x32x32xbf16>
    %36 = vector.shape_cast %35 : vector<1x1x32x32xbf16> to vector<32x32xbf16>
    %cst_24 = arith.constant dense<0.000000e+00> : vector<16x32xf32>
    %37 = tpu.matmul %34, %36, %cst_24 {dimension_numbers = #tpu.dot_dimension_numbers<[1], [0], [0], [1], [0, 0, 1, 1], [], []>} : vector<16x32xbf16>, vector<32x32xbf16>, vector<16x32xf32> -> vector<16x32xf32>
    %c0_25 = arith.constant 0 : index
    %c0_26 = arith.constant 0 : index
    %c0_27 = arith.constant 0 : index
    %c0_28 = arith.constant 0 : index
    %38 = vector.load %arg8[%c0_25, %c0_26, %c0_27, %c0_28] : memref<1x2x1x32xf32, #tpu.memory_space<vmem>>, vector<1x1x1x32xf32>
    %39 = vector.shape_cast %38 : vector<1x1x1x32xf32> to vector<1x32xf32>
    %40 = vector.broadcast %39 : vector<1x32xf32> to vector<16x32xf32>
    %41 = arith.addf %37, %40 : vector<16x32xf32>
    %c0_29 = arith.constant 0 : index
    %c0_30 = arith.constant 0 : index
    %c0_31 = arith.constant 0 : index
    %c0_32 = arith.constant 0 : index
    %42 = vector.load %arg9[%c0_29, %c0_30, %c0_31, %c0_32] : memref<1x2x32x32xbf16, #tpu.memory_space<vmem>>, vector<1x1x32x32xbf16>
    %43 = vector.shape_cast %42 : vector<1x1x32x32xbf16> to vector<32x32xbf16>
    %cst_33 = arith.constant dense<0.000000e+00> : vector<16x32xf32>
    %44 = tpu.matmul %34, %43, %cst_33 {dimension_numbers = #tpu.dot_dimension_numbers<[1], [0], [0], [1], [0, 0, 1, 1], [], []>} : vector<16x32xbf16>, vector<32x32xbf16>, vector<16x32xf32> -> vector<16x32xf32>
    %c0_34 = arith.constant 0 : index
    %c0_35 = arith.constant 0 : index
    %c0_36 = arith.constant 0 : index
    %c0_37 = arith.constant 0 : index
    %45 = vector.load %arg10[%c0_34, %c0_35, %c0_36, %c0_37] : memref<1x2x1x32xf32, #tpu.memory_space<vmem>>, vector<1x1x1x32xf32>
    %46 = vector.shape_cast %45 : vector<1x1x1x32xf32> to vector<1x32xf32>
    %47 = vector.broadcast %46 : vector<1x32xf32> to vector<16x32xf32>
    %48 = arith.addf %44, %47 : vector<16x32xf32>
    %c0_38 = arith.constant 0 : index
    %c0_39 = arith.constant 0 : index
    %c0_40 = arith.constant 0 : index
    %c0_41 = arith.constant 0 : index
    %49 = vector.load %arg11[%c0_38, %c0_39, %c0_40, %c0_41] : memref<1x2x32x32xbf16, #tpu.memory_space<vmem>>, vector<1x1x32x32xbf16>
    %50 = vector.shape_cast %49 : vector<1x1x32x32xbf16> to vector<32x32xbf16>
    %cst_42 = arith.constant dense<0.000000e+00> : vector<16x32xf32>
    %51 = tpu.matmul %34, %50, %cst_42 {dimension_numbers = #tpu.dot_dimension_numbers<[1], [0], [0], [1], [0, 0, 1, 1], [], []>} : vector<16x32xbf16>, vector<32x32xbf16>, vector<16x32xf32> -> vector<16x32xf32>
    %c0_43 = arith.constant 0 : index
    %c0_44 = arith.constant 0 : index
    %c0_45 = arith.constant 0 : index
    %c0_46 = arith.constant 0 : index
    %52 = vector.load %arg12[%c0_43, %c0_44, %c0_45, %c0_46] : memref<1x2x1x32xf32, #tpu.memory_space<vmem>>, vector<1x1x1x32xf32>
    %53 = vector.shape_cast %52 : vector<1x1x1x32xf32> to vector<1x32xf32>
    %54 = vector.broadcast %53 : vector<1x32xf32> to vector<16x32xf32>
    %55 = arith.addf %51, %54 : vector<16x32xf32>
    %56 = vector.extract_strided_slice %41 {offsets = [0, 0], sizes = [16, 8], strides = [1, 1]} : vector<16x32xf32> to vector<16x8xf32>
    %57 = arith.truncf %56 : vector<16x8xf32> to vector<16x8xbf16>
    %58 = vector.extract_strided_slice %48 {offsets = [0, 0], sizes = [16, 8], strides = [1, 1]} : vector<16x32xf32> to vector<16x8xf32>
    %59 = arith.truncf %58 : vector<16x8xf32> to vector<16x8xbf16>
    %60 = vector.extract_strided_slice %55 {offsets = [0, 0], sizes = [16, 8], strides = [1, 1]} : vector<16x32xf32> to vector<16x8xf32>
    %61 = arith.truncf %60 : vector<16x8xf32> to vector<16x8xbf16>
    "tpu.trace_start"() <{level = 10 : i32, message = "qd,kd->qk"}> : () -> ()
    %cst_47 = arith.constant dense<0.000000e+00> : vector<16x16xf32>
    %62 = tpu.matmul %57, %59, %cst_47 {dimension_numbers = #tpu.dot_dimension_numbers<[1], [1], [0], [0], [0, 0, 1, 0], [], []>} : vector<16x8xbf16>, vector<16x8xbf16>, vector<16x16xf32> -> vector<16x16xf32>
    "tpu.trace_stop"() : () -> ()
    %cst_48 = arith.constant 0.353553385 : f32
    %63 = vector.broadcast %cst_48 : f32 to vector<16x16xf32>
    %64 = arith.mulf %62, %63 : vector<16x16xf32>
    %65 = arith.addf %64, %0 : vector<16x16xf32>
    %cst_49 = arith.constant dense<0xFF800000> : vector<16xf32>
    %66 = vector.multi_reduction <maximumf>, %65, %cst_49 [1] : vector<16x16xf32> to vector<16xf32>
    %67 = vector.shape_cast %66 : vector<16xf32> to vector<16x1xf32>
    %68 = vector.broadcast %67 : vector<16x1xf32> to vector<16x16xf32>
    %69 = arith.subf %65, %68 : vector<16x16xf32>
    %70 = math.exp %69 : vector<16x16xf32>
    %cst_50 = arith.constant dense<0.000000e+00> : vector<16xf32>
    %71 = vector.multi_reduction <add>, %70, %cst_50 [1] : vector<16x16xf32> to vector<16xf32>
    %72 = vector.shape_cast %71 : vector<16xf32> to vector<16x1xf32>
    %73 = tpu.reciprocal %72 {approx = true} : vector<16x1xf32> -> vector<16x1xf32>
    %74 = vector.broadcast %73 : vector<16x1xf32> to vector<16x16xf32>
    %75 = arith.mulf %70, %74 : vector<16x16xf32>
    %76 = arith.truncf %75 : vector<16x16xf32> to vector<16x16xbf16>
    %cst_51 = arith.constant dense<0.000000e+00> : vector<16x8xf32>
    %77 = tpu.matmul %76, %61, %cst_51 {dimension_numbers = #tpu.dot_dimension_numbers<[1], [0], [0], [1], [0, 0, 1, 1], [], []>} : vector<16x16xbf16>, vector<16x8xbf16>, vector<16x8xf32> -> vector<16x8xf32>
    %78 = arith.truncf %77 : vector<16x8xf32> to vector<16x8xbf16>
    %c0_52 = arith.constant 0 : index
    %c0_53 = arith.constant 0 : index
    %c0_54 = arith.constant 0 : index
    %c0_55 = arith.constant 0 : index
    %79 = vector.load %arg13[%c0_52, %c0_53, %c0_54, %c0_55] : memref<1x2x32x32xbf16, #tpu.memory_space<vmem>>, vector<1x1x8x32xbf16>
    %80 = vector.shape_cast %79 : vector<1x1x8x32xbf16> to vector<8x32xbf16>
    %cst_56 = arith.constant dense<0.000000e+00> : vector<16x32xf32>
    %81 = tpu.matmul %78, %80, %cst_56 {dimension_numbers = #tpu.dot_dimension_numbers<[1], [0], [0], [1], [0, 0, 1, 1], [], []>} : vector<16x8xbf16>, vector<8x32xbf16>, vector<16x32xf32> -> vector<16x32xf32>
    %82 = vector.extract_strided_slice %41 {offsets = [0, 8], sizes = [16, 8], strides = [1, 1]} : vector<16x32xf32> to vector<16x8xf32>
    %83 = arith.truncf %82 : vector<16x8xf32> to vector<16x8xbf16>
    %84 = vector.extract_strided_slice %48 {offsets = [0, 8], sizes = [16, 8], strides = [1, 1]} : vector<16x32xf32> to vector<16x8xf32>
    %85 = arith.truncf %84 : vector<16x8xf32> to vector<16x8xbf16>
    %86 = vector.extract_strided_slice %55 {offsets = [0, 8], sizes = [16, 8], strides = [1, 1]} : vector<16x32xf32> to vector<16x8xf32>
    %87 = arith.truncf %86 : vector<16x8xf32> to vector<16x8xbf16>
    "tpu.trace_start"() <{level = 10 : i32, message = "qd,kd->qk"}> : () -> ()
    %cst_57 = arith.constant dense<0.000000e+00> : vector<16x16xf32>
    %88 = tpu.matmul %83, %85, %cst_57 {dimension_numbers = #tpu.dot_dimension_numbers<[1], [1], [0], [0], [0, 0, 1, 0], [], []>} : vector<16x8xbf16>, vector<16x8xbf16>, vector<16x16xf32> -> vector<16x16xf32>
    "tpu.trace_stop"() : () -> ()
    %cst_58 = arith.constant 0.353553385 : f32
    %89 = vector.broadcast %cst_58 : f32 to vector<16x16xf32>
    %90 = arith.mulf %88, %89 : vector<16x16xf32>
    %91 = arith.addf %90, %0 : vector<16x16xf32>
    %cst_59 = arith.constant dense<0xFF800000> : vector<16xf32>
    %92 = vector.multi_reduction <maximumf>, %91, %cst_59 [1] : vector<16x16xf32> to vector<16xf32>
    %93 = vector.shape_cast %92 : vector<16xf32> to vector<16x1xf32>
    %94 = vector.broadcast %93 : vector<16x1xf32> to vector<16x16xf32>
    %95 = arith.subf %91, %94 : vector<16x16xf32>
    %96 = math.exp %95 : vector<16x16xf32>
    %cst_60 = arith.constant dense<0.000000e+00> : vector<16xf32>
    %97 = vector.multi_reduction <add>, %96, %cst_60 [1] : vector<16x16xf32> to vector<16xf32>
    %98 = vector.shape_cast %97 : vector<16xf32> to vector<16x1xf32>
    %99 = tpu.reciprocal %98 {approx = true} : vector<16x1xf32> -> vector<16x1xf32>
    %100 = vector.broadcast %99 : vector<16x1xf32> to vector<16x16xf32>
    %101 = arith.mulf %96, %100 : vector<16x16xf32>
    %102 = arith.truncf %101 : vector<16x16xf32> to vector<16x16xbf16>
    %cst_61 = arith.constant dense<0.000000e+00> : vector<16x8xf32>
    %103 = tpu.matmul %102, %87, %cst_61 {dimension_numbers = #tpu.dot_dimension_numbers<[1], [0], [0], [1], [0, 0, 1, 1], [], []>} : vector<16x16xbf16>, vector<16x8xbf16>, vector<16x8xf32> -> vector<16x8xf32>
    %104 = arith.truncf %103 : vector<16x8xf32> to vector<16x8xbf16>
    %c0_62 = arith.constant 0 : index
    %c0_63 = arith.constant 0 : index
    %c8 = arith.constant 8 : index
    %c0_64 = arith.constant 0 : index
    %105 = vector.load %arg13[%c0_62, %c0_63, %c8, %c0_64] : memref<1x2x32x32xbf16, #tpu.memory_space<vmem>>, vector<1x1x8x32xbf16>
    %106 = vector.shape_cast %105 : vector<1x1x8x32xbf16> to vector<8x32xbf16>
    %cst_65 = arith.constant dense<0.000000e+00> : vector<16x32xf32>
    %107 = tpu.matmul %104, %106, %cst_65 {dimension_numbers = #tpu.dot_dimension_numbers<[1], [0], [0], [1], [0, 0, 1, 1], [], []>} : vector<16x8xbf16>, vector<8x32xbf16>, vector<16x32xf32> -> vector<16x32xf32>
    %108 = arith.addf %81, %107 : vector<16x32xf32>
    %109 = vector.extract_strided_slice %41 {offsets = [0, 16], sizes = [16, 8], strides = [1, 1]} : vector<16x32xf32> to vector<16x8xf32>
    %110 = arith.truncf %109 : vector<16x8xf32> to vector<16x8xbf16>
    %111 = vector.extract_strided_slice %48 {offsets = [0, 16], sizes = [16, 8], strides = [1, 1]} : vector<16x32xf32> to vector<16x8xf32>
    %112 = arith.truncf %111 : vector<16x8xf32> to vector<16x8xbf16>
    %113 = vector.extract_strided_slice %55 {offsets = [0, 16], sizes = [16, 8], strides = [1, 1]} : vector<16x32xf32> to vector<16x8xf32>
    %114 = arith.truncf %113 : vector<16x8xf32> to vector<16x8xbf16>
    "tpu.trace_start"() <{level = 10 : i32, message = "qd,kd->qk"}> : () -> ()
    %cst_66 = arith.constant dense<0.000000e+00> : vector<16x16xf32>
    %115 = tpu.matmul %110, %112, %cst_66 {dimension_numbers = #tpu.dot_dimension_numbers<[1], [1], [0], [0], [0, 0, 1, 0], [], []>} : vector<16x8xbf16>, vector<16x8xbf16>, vector<16x16xf32> -> vector<16x16xf32>
    "tpu.trace_stop"() : () -> ()
    %cst_67 = arith.constant 0.353553385 : f32
    %116 = vector.broadcast %cst_67 : f32 to vector<16x16xf32>
    %117 = arith.mulf %115, %116 : vector<16x16xf32>
    %118 = arith.addf %117, %0 : vector<16x16xf32>
    %cst_68 = arith.constant dense<0xFF800000> : vector<16xf32>
    %119 = vector.multi_reduction <maximumf>, %118, %cst_68 [1] : vector<16x16xf32> to vector<16xf32>
    %120 = vector.shape_cast %119 : vector<16xf32> to vector<16x1xf32>
    %121 = vector.broadcast %120 : vector<16x1xf32> to vector<16x16xf32>
    %122 = arith.subf %118, %121 : vector<16x16xf32>
    %123 = math.exp %122 : vector<16x16xf32>
    %cst_69 = arith.constant dense<0.000000e+00> : vector<16xf32>
    %124 = vector.multi_reduction <add>, %123, %cst_69 [1] : vector<16x16xf32> to vector<16xf32>
    %125 = vector.shape_cast %124 : vector<16xf32> to vector<16x1xf32>
    %126 = tpu.reciprocal %125 {approx = true} : vector<16x1xf32> -> vector<16x1xf32>
    %127 = vector.broadcast %126 : vector<16x1xf32> to vector<16x16xf32>
    %128 = arith.mulf %123, %127 : vector<16x16xf32>
    %129 = arith.truncf %128 : vector<16x16xf32> to vector<16x16xbf16>
    %cst_70 = arith.constant dense<0.000000e+00> : vector<16x8xf32>
    %130 = tpu.matmul %129, %114, %cst_70 {dimension_numbers = #tpu.dot_dimension_numbers<[1], [0], [0], [1], [0, 0, 1, 1], [], []>} : vector<16x16xbf16>, vector<16x8xbf16>, vector<16x8xf32> -> vector<16x8xf32>
    %131 = arith.truncf %130 : vector<16x8xf32> to vector<16x8xbf16>
    %c0_71 = arith.constant 0 : index
    %c0_72 = arith.constant 0 : index
    %c16 = arith.constant 16 : index
    %c0_73 = arith.constant 0 : index
    %132 = vector.load %arg13[%c0_71, %c0_72, %c16, %c0_73] : memref<1x2x32x32xbf16, #tpu.memory_space<vmem>>, vector<1x1x8x32xbf16>
    %133 = vector.shape_cast %132 : vector<1x1x8x32xbf16> to vector<8x32xbf16>
    %cst_74 = arith.constant dense<0.000000e+00> : vector<16x32xf32>
    %134 = tpu.matmul %131, %133, %cst_74 {dimension_numbers = #tpu.dot_dimension_numbers<[1], [0], [0], [1], [0, 0, 1, 1], [], []>} : vector<16x8xbf16>, vector<8x32xbf16>, vector<16x32xf32> -> vector<16x32xf32>
    %135 = arith.addf %108, %134 : vector<16x32xf32>
    %136 = vector.extract_strided_slice %41 {offsets = [0, 24], sizes = [16, 8], strides = [1, 1]} : vector<16x32xf32> to vector<16x8xf32>
    %137 = arith.truncf %136 : vector<16x8xf32> to vector<16x8xbf16>
    %138 = vector.extract_strided_slice %48 {offsets = [0, 24], sizes = [16, 8], strides = [1, 1]} : vector<16x32xf32> to vector<16x8xf32>
    %139 = arith.truncf %138 : vector<16x8xf32> to vector<16x8xbf16>
    %140 = vector.extract_strided_slice %55 {offsets = [0, 24], sizes = [16, 8], strides = [1, 1]} : vector<16x32xf32> to vector<16x8xf32>
    %141 = arith.truncf %140 : vector<16x8xf32> to vector<16x8xbf16>
    "tpu.trace_start"() <{level = 10 : i32, message = "qd,kd->qk"}> : () -> ()
    %cst_75 = arith.constant dense<0.000000e+00> : vector<16x16xf32>
    %142 = tpu.matmul %137, %139, %cst_75 {dimension_numbers = #tpu.dot_dimension_numbers<[1], [1], [0], [0], [0, 0, 1, 0], [], []>} : vector<16x8xbf16>, vector<16x8xbf16>, vector<16x16xf32> -> vector<16x16xf32>
    "tpu.trace_stop"() : () -> ()
    %cst_76 = arith.constant 0.353553385 : f32
    %143 = vector.broadcast %cst_76 : f32 to vector<16x16xf32>
    %144 = arith.mulf %142, %143 : vector<16x16xf32>
    %145 = arith.addf %144, %0 : vector<16x16xf32>
    %cst_77 = arith.constant dense<0xFF800000> : vector<16xf32>
    %146 = vector.multi_reduction <maximumf>, %145, %cst_77 [1] : vector<16x16xf32> to vector<16xf32>
    %147 = vector.shape_cast %146 : vector<16xf32> to vector<16x1xf32>
    %148 = vector.broadcast %147 : vector<16x1xf32> to vector<16x16xf32>
    %149 = arith.subf %145, %148 : vector<16x16xf32>
    %150 = math.exp %149 : vector<16x16xf32>
    %cst_78 = arith.constant dense<0.000000e+00> : vector<16xf32>
    %151 = vector.multi_reduction <add>, %150, %cst_78 [1] : vector<16x16xf32> to vector<16xf32>
    %152 = vector.shape_cast %151 : vector<16xf32> to vector<16x1xf32>
    %153 = tpu.reciprocal %152 {approx = true} : vector<16x1xf32> -> vector<16x1xf32>
    %154 = vector.broadcast %153 : vector<16x1xf32> to vector<16x16xf32>
    %155 = arith.mulf %150, %154 : vector<16x16xf32>
    %156 = arith.truncf %155 : vector<16x16xf32> to vector<16x16xbf16>
    %cst_79 = arith.constant dense<0.000000e+00> : vector<16x8xf32>
    %157 = tpu.matmul %156, %141, %cst_79 {dimension_numbers = #tpu.dot_dimension_numbers<[1], [0], [0], [1], [0, 0, 1, 1], [], []>} : vector<16x16xbf16>, vector<16x8xbf16>, vector<16x8xf32> -> vector<16x8xf32>
    %158 = arith.truncf %157 : vector<16x8xf32> to vector<16x8xbf16>
    %c0_80 = arith.constant 0 : index
    %c0_81 = arith.constant 0 : index
    %c24 = arith.constant 24 : index
    %c0_82 = arith.constant 0 : index
    %159 = vector.load %arg13[%c0_80, %c0_81, %c24, %c0_82] : memref<1x2x32x32xbf16, #tpu.memory_space<vmem>>, vector<1x1x8x32xbf16>
    %160 = vector.shape_cast %159 : vector<1x1x8x32xbf16> to vector<8x32xbf16>
    %cst_83 = arith.constant dense<0.000000e+00> : vector<16x32xf32>
    %161 = tpu.matmul %158, %160, %cst_83 {dimension_numbers = #tpu.dot_dimension_numbers<[1], [0], [0], [1], [0, 0, 1, 1], [], []>} : vector<16x8xbf16>, vector<8x32xbf16>, vector<16x32xf32> -> vector<16x32xf32>
    %162 = arith.addf %135, %161 : vector<16x32xf32>
    %c0_84 = arith.constant 0 : index
    %c0_85 = arith.constant 0 : index
    %c0_86 = arith.constant 0 : index
    %c0_87 = arith.constant 0 : index
    %163 = vector.load %arg14[%c0_84, %c0_85, %c0_86, %c0_87] : memref<1x2x1x32xf32, #tpu.memory_space<vmem>>, vector<1x1x1x32xf32>
    %164 = vector.shape_cast %163 : vector<1x1x1x32xf32> to vector<1x32xf32>
    %165 = vector.broadcast %164 : vector<1x32xf32> to vector<16x32xf32>
    %166 = arith.addf %162, %165 : vector<16x32xf32>
    %167 = arith.addf %33, %166 : vector<16x32xf32>
    %c0_88 = arith.constant 0 : index
    %c0_89 = arith.constant 0 : index
    %c0_90 = arith.constant 0 : index
    %c0_91 = arith.constant 0 : index
    %168 = vector.load %arg15[%c0_88, %c0_89, %c0_90, %c0_91] : memref<1x2x1x32xf32, #tpu.memory_space<vmem>>, vector<1x1x1x32xf32>
    %169 = vector.shape_cast %168 : vector<1x1x1x32xf32> to vector<1x32xf32>
    %c0_92 = arith.constant 0 : index
    %c0_93 = arith.constant 0 : index
    %c0_94 = arith.constant 0 : index
    %c0_95 = arith.constant 0 : index
    %170 = vector.load %arg16[%c0_92, %c0_93, %c0_94, %c0_95] : memref<1x2x1x32xf32, #tpu.memory_space<vmem>>, vector<1x1x1x32xf32>
    %171 = vector.shape_cast %170 : vector<1x1x1x32xf32> to vector<1x32xf32>
    %cst_96 = arith.constant dense<0.000000e+00> : vector<16xf32>
    %172 = vector.multi_reduction <add>, %167, %cst_96 [1] : vector<16x32xf32> to vector<16xf32>
    %173 = vector.shape_cast %172 : vector<16xf32> to vector<16x1xf32>
    %cst_97 = arith.constant 3.200000e+01 : f32
    %174 = vector.broadcast %cst_97 : f32 to vector<16x1xf32>
    %175 = arith.divf %173, %174 : vector<16x1xf32>
    %176 = vector.broadcast %175 : vector<16x1xf32> to vector<16x32xf32>
    %177 = arith.subf %167, %176 : vector<16x32xf32>
    %178 = arith.mulf %177, %177 : vector<16x32xf32>
    %cst_98 = arith.constant dense<0.000000e+00> : vector<16xf32>
    %179 = vector.multi_reduction <add>, %178, %cst_98 [1] : vector<16x32xf32> to vector<16xf32>
    %180 = vector.shape_cast %179 : vector<16xf32> to vector<16x1xf32>
    %cst_99 = arith.constant 3.200000e+01 : f32
    %181 = vector.broadcast %cst_99 : f32 to vector<16x1xf32>
    %182 = arith.divf %180, %181 : vector<16x1xf32>
    %183 = vector.broadcast %175 : vector<16x1xf32> to vector<16x32xf32>
    %184 = arith.subf %167, %183 : vector<16x32xf32>
    %cst_100 = arith.constant 9.99999996E-13 : f32
    %185 = vector.broadcast %cst_100 : f32 to vector<16x1xf32>
    %186 = arith.addf %182, %185 : vector<16x1xf32>
    %187 = math.rsqrt %186 : vector<16x1xf32>
    %188 = vector.broadcast %187 : vector<16x1xf32> to vector<16x32xf32>
    %189 = arith.mulf %184, %188 : vector<16x32xf32>
    %190 = vector.broadcast %169 : vector<1x32xf32> to vector<16x32xf32>
    %191 = arith.mulf %189, %190 : vector<16x32xf32>
    %192 = vector.broadcast %171 : vector<1x32xf32> to vector<16x32xf32>
    %193 = arith.addf %191, %192 : vector<16x32xf32>
    %194 = arith.truncf %193 : vector<16x32xf32> to vector<16x32xbf16>
    %c0_101 = arith.constant 0 : index
    %c0_102 = arith.constant 0 : index
    %c0_103 = arith.constant 0 : index
    %c0_104 = arith.constant 0 : index
    %195 = vector.load %arg17[%c0_101, %c0_102, %c0_103, %c0_104] : memref<1x2x32x64xbf16, #tpu.memory_space<vmem>>, vector<1x1x32x64xbf16>
    %196 = vector.shape_cast %195 : vector<1x1x32x64xbf16> to vector<32x64xbf16>
    %cst_105 = arith.constant dense<0.000000e+00> : vector<16x64xf32>
    %197 = tpu.matmul %194, %196, %cst_105 {dimension_numbers = #tpu.dot_dimension_numbers<[1], [0], [0], [1], [0, 0, 1, 1], [], []>} : vector<16x32xbf16>, vector<32x64xbf16>, vector<16x64xf32> -> vector<16x64xf32>
    %c0_106 = arith.constant 0 : index
    %c0_107 = arith.constant 0 : index
    %c0_108 = arith.constant 0 : index
    %c0_109 = arith.constant 0 : index
    %198 = vector.load %arg18[%c0_106, %c0_107, %c0_108, %c0_109] : memref<1x2x1x64xf32, #tpu.memory_space<vmem>>, vector<1x1x1x64xf32>
    %199 = vector.shape_cast %198 : vector<1x1x1x64xf32> to vector<1x64xf32>
    %200 = vector.broadcast %199 : vector<1x64xf32> to vector<16x64xf32>
    %201 = arith.addf %197, %200 : vector<16x64xf32>
    %cst_110 = arith.constant 5.000000e-01 : f32
    %202 = vector.broadcast %cst_110 : f32 to vector<16x64xf32>
    %203 = arith.mulf %202, %201 : vector<16x64xf32>
    %cst_111 = arith.constant 4.471500e-02 : f32
    %204 = vector.broadcast %cst_111 : f32 to vector<16x64xf32>
    %205 = arith.mulf %204, %201 : vector<16x64xf32>
    %206 = arith.mulf %205, %201 : vector<16x64xf32>
    %207 = arith.mulf %206, %201 : vector<16x64xf32>
    %208 = arith.addf %201, %207 : vector<16x64xf32>
    %cst_112 = arith.constant 0.797884583 : f32
    %209 = vector.broadcast %cst_112 : f32 to vector<16x64xf32>
    %210 = arith.mulf %209, %208 : vector<16x64xf32>
    %211 = math.tanh %210 : vector<16x64xf32>
    %cst_113 = arith.constant 1.000000e+00 : f32
    %212 = vector.broadcast %cst_113 : f32 to vector<16x64xf32>
    %213 = arith.addf %212, %211 : vector<16x64xf32>
    %214 = arith.mulf %203, %213 : vector<16x64xf32>
    %215 = arith.truncf %214 : vector<16x64xf32> to vector<16x64xbf16>
    %c0_114 = arith.constant 0 : index
    %c0_115 = arith.constant 0 : index
    %c0_116 = arith.constant 0 : index
    %c0_117 = arith.constant 0 : index
    %216 = vector.load %arg19[%c0_114, %c0_115, %c0_116, %c0_117] : memref<1x2x64x32xbf16, #tpu.memory_space<vmem>>, vector<1x1x64x32xbf16>
    %217 = vector.shape_cast %216 : vector<1x1x64x32xbf16> to vector<64x32xbf16>
    %cst_118 = arith.constant dense<0.000000e+00> : vector<16x32xf32>
    %218 = tpu.matmul %215, %217, %cst_118 {dimension_numbers = #tpu.dot_dimension_numbers<[1], [0], [0], [1], [0, 0, 1, 1], [], []>} : vector<16x64xbf16>, vector<64x32xbf16>, vector<16x32xf32> -> vector<16x32xf32>
    %c0_119 = arith.constant 0 : index
    %c0_120 = arith.constant 0 : index
    %c0_121 = arith.constant 0 : index
    %c0_122 = arith.constant 0 : index
    %219 = vector.load %arg20[%c0_119, %c0_120, %c0_121, %c0_122] : memref<1x2x1x32xf32, #tpu.memory_space<vmem>>, vector<1x1x1x32xf32>
    %220 = vector.shape_cast %219 : vector<1x1x1x32xf32> to vector<1x32xf32>
    %221 = vector.broadcast %220 : vector<1x32xf32> to vector<16x32xf32>
    %222 = arith.addf %218, %221 : vector<16x32xf32>
    %223 = arith.addf %193, %222 : vector<16x32xf32>
    %c0_123 = arith.constant 0 : index
    %c0_124 = arith.constant 0 : index
    %c0_125 = arith.constant 0 : index
    %c0_126 = arith.constant 0 : index
    %224 = vector.load %arg21[%c0_123, %c0_124, %c0_125, %c0_126] : memref<1x2x1x32xf32, #tpu.memory_space<vmem>>, vector<1x1x1x32xf32>
    %225 = vector.shape_cast %224 : vector<1x1x1x32xf32> to vector<1x32xf32>
    %c0_127 = arith.constant 0 : index
    %c0_128 = arith.constant 0 : index
    %c0_129 = arith.constant 0 : index
    %c0_130 = arith.constant 0 : index
    %226 = vector.load %arg22[%c0_127, %c0_128, %c0_129, %c0_130] : memref<1x2x1x32xf32, #tpu.memory_space<vmem>>, vector<1x1x1x32xf32>
    %227 = vector.shape_cast %226 : vector<1x1x1x32xf32> to vector<1x32xf32>
    %cst_131 = arith.constant dense<0.000000e+00> : vector<16xf32>
    %228 = vector.multi_reduction <add>, %223, %cst_131 [1] : vector<16x32xf32> to vector<16xf32>
    %229 = vector.shape_cast %228 : vector<16xf32> to vector<16x1xf32>
    %cst_132 = arith.constant 3.200000e+01 : f32
    %230 = vector.broadcast %cst_132 : f32 to vector<16x1xf32>
    %231 = arith.divf %229, %230 : vector<16x1xf32>
    %232 = vector.broadcast %231 : vector<16x1xf32> to vector<16x32xf32>
    %233 = arith.subf %223, %232 : vector<16x32xf32>
    %234 = arith.mulf %233, %233 : vector<16x32xf32>
    %cst_133 = arith.constant dense<0.000000e+00> : vector<16xf32>
    %235 = vector.multi_reduction <add>, %234, %cst_133 [1] : vector<16x32xf32> to vector<16xf32>
    %236 = vector.shape_cast %235 : vector<16xf32> to vector<16x1xf32>
    %cst_134 = arith.constant 3.200000e+01 : f32
    %237 = vector.broadcast %cst_134 : f32 to vector<16x1xf32>
    %238 = arith.divf %236, %237 : vector<16x1xf32>
    %239 = vector.broadcast %231 : vector<16x1xf32> to vector<16x32xf32>
    %240 = arith.subf %223, %239 : vector<16x32xf32>
    %cst_135 = arith.constant 9.99999996E-13 : f32
    %241 = vector.broadcast %cst_135 : f32 to vector<16x1xf32>
    %242 = arith.addf %238, %241 : vector<16x1xf32>
    %243 = math.rsqrt %242 : vector<16x1xf32>
    %244 = vector.broadcast %243 : vector<16x1xf32> to vector<16x32xf32>
    %245 = arith.mulf %240, %244 : vector<16x32xf32>
    %246 = vector.broadcast %225 : vector<1x32xf32> to vector<16x32xf32>
    %247 = arith.mulf %245, %246 : vector<16x32xf32>
    %248 = vector.broadcast %227 : vector<1x32xf32> to vector<16x32xf32>
    %249 = arith.addf %247, %248 : vector<16x32xf32>
    %250 = arith.truncf %249 : vector<16x32xf32> to vector<16x32xbf16>
    %c0_136 = arith.constant 0 : index
    %c1 = arith.constant 1 : index
    %c0_137 = arith.constant 0 : index
    %c0_138 = arith.constant 0 : index
    %251 = vector.load %arg7[%c0_136, %c1, %c0_137, %c0_138] : memref<1x2x32x32xbf16, #tpu.memory_space<vmem>>, vector<1x1x32x32xbf16>
    %252 = vector.shape_cast %251 : vector<1x1x32x32xbf16> to vector<32x32xbf16>
    %cst_139 = arith.constant dense<0.000000e+00> : vector<16x32xf32>
    %253 = tpu.matmul %250, %252, %cst_139 {dimension_numbers = #tpu.dot_dimension_numbers<[1], [0], [0], [1], [0, 0, 1, 1], [], []>} : vector<16x32xbf16>, vector<32x32xbf16>, vector<16x32xf32> -> vector<16x32xf32>
    %c0_140 = arith.constant 0 : index
    %c1_141 = arith.constant 1 : index
    %c0_142 = arith.constant 0 : index
    %c0_143 = arith.constant 0 : index
    %254 = vector.load %arg8[%c0_140, %c1_141, %c0_142, %c0_143] : memref<1x2x1x32xf32, #tpu.memory_space<vmem>>, vector<1x1x1x32xf32>
    %255 = vector.shape_cast %254 : vector<1x1x1x32xf32> to vector<1x32xf32>
    %256 = vector.broadcast %255 : vector<1x32xf32> to vector<16x32xf32>
    %257 = arith.addf %253, %256 : vector<16x32xf32>
    %c0_144 = arith.constant 0 : index
    %c1_145 = arith.constant 1 : index
    %c0_146 = arith.constant 0 : index
    %c0_147 = arith.constant 0 : index
    %258 = vector.load %arg9[%c0_144, %c1_145, %c0_146, %c0_147] : memref<1x2x32x32xbf16, #tpu.memory_space<vmem>>, vector<1x1x32x32xbf16>
    %259 = vector.shape_cast %258 : vector<1x1x32x32xbf16> to vector<32x32xbf16>
    %cst_148 = arith.constant dense<0.000000e+00> : vector<16x32xf32>
    %260 = tpu.matmul %250, %259, %cst_148 {dimension_numbers = #tpu.dot_dimension_numbers<[1], [0], [0], [1], [0, 0, 1, 1], [], []>} : vector<16x32xbf16>, vector<32x32xbf16>, vector<16x32xf32> -> vector<16x32xf32>
    %c0_149 = arith.constant 0 : index
    %c1_150 = arith.constant 1 : index
    %c0_151 = arith.constant 0 : index
    %c0_152 = arith.constant 0 : index
    %261 = vector.load %arg10[%c0_149, %c1_150, %c0_151, %c0_152] : memref<1x2x1x32xf32, #tpu.memory_space<vmem>>, vector<1x1x1x32xf32>
    %262 = vector.shape_cast %261 : vector<1x1x1x32xf32> to vector<1x32xf32>
    %263 = vector.broadcast %262 : vector<1x32xf32> to vector<16x32xf32>
    %264 = arith.addf %260, %263 : vector<16x32xf32>
    %c0_153 = arith.constant 0 : index
    %c1_154 = arith.constant 1 : index
    %c0_155 = arith.constant 0 : index
    %c0_156 = arith.constant 0 : index
    %265 = vector.load %arg11[%c0_153, %c1_154, %c0_155, %c0_156] : memref<1x2x32x32xbf16, #tpu.memory_space<vmem>>, vector<1x1x32x32xbf16>
    %266 = vector.shape_cast %265 : vector<1x1x32x32xbf16> to vector<32x32xbf16>
    %cst_157 = arith.constant dense<0.000000e+00> : vector<16x32xf32>
    %267 = tpu.matmul %250, %266, %cst_157 {dimension_numbers = #tpu.dot_dimension_numbers<[1], [0], [0], [1], [0, 0, 1, 1], [], []>} : vector<16x32xbf16>, vector<32x32xbf16>, vector<16x32xf32> -> vector<16x32xf32>
    %c0_158 = arith.constant 0 : index
    %c1_159 = arith.constant 1 : index
    %c0_160 = arith.constant 0 : index
    %c0_161 = arith.constant 0 : index
    %268 = vector.load %arg12[%c0_158, %c1_159, %c0_160, %c0_161] : memref<1x2x1x32xf32, #tpu.memory_space<vmem>>, vector<1x1x1x32xf32>
    %269 = vector.shape_cast %268 : vector<1x1x1x32xf32> to vector<1x32xf32>
    %270 = vector.broadcast %269 : vector<1x32xf32> to vector<16x32xf32>
    %271 = arith.addf %267, %270 : vector<16x32xf32>
    %272 = vector.extract_strided_slice %257 {offsets = [0, 0], sizes = [16, 8], strides = [1, 1]} : vector<16x32xf32> to vector<16x8xf32>
    %273 = arith.truncf %272 : vector<16x8xf32> to vector<16x8xbf16>
    %274 = vector.extract_strided_slice %264 {offsets = [0, 0], sizes = [16, 8], strides = [1, 1]} : vector<16x32xf32> to vector<16x8xf32>
    %275 = arith.truncf %274 : vector<16x8xf32> to vector<16x8xbf16>
    %276 = vector.extract_strided_slice %271 {offsets = [0, 0], sizes = [16, 8], strides = [1, 1]} : vector<16x32xf32> to vector<16x8xf32>
    %277 = arith.truncf %276 : vector<16x8xf32> to vector<16x8xbf16>
    "tpu.trace_start"() <{level = 10 : i32, message = "qd,kd->qk"}> : () -> ()
    %cst_162 = arith.constant dense<0.000000e+00> : vector<16x16xf32>
    %278 = tpu.matmul %273, %275, %cst_162 {dimension_numbers = #tpu.dot_dimension_numbers<[1], [1], [0], [0], [0, 0, 1, 0], [], []>} : vector<16x8xbf16>, vector<16x8xbf16>, vector<16x16xf32> -> vector<16x16xf32>
    "tpu.trace_stop"() : () -> ()
    %cst_163 = arith.constant 0.353553385 : f32
    %279 = vector.broadcast %cst_163 : f32 to vector<16x16xf32>
    %280 = arith.mulf %278, %279 : vector<16x16xf32>
    %281 = arith.addf %280, %0 : vector<16x16xf32>
    %cst_164 = arith.constant dense<0xFF800000> : vector<16xf32>
    %282 = vector.multi_reduction <maximumf>, %281, %cst_164 [1] : vector<16x16xf32> to vector<16xf32>
    %283 = vector.shape_cast %282 : vector<16xf32> to vector<16x1xf32>
    %284 = vector.broadcast %283 : vector<16x1xf32> to vector<16x16xf32>
    %285 = arith.subf %281, %284 : vector<16x16xf32>
    %286 = math.exp %285 : vector<16x16xf32>
    %cst_165 = arith.constant dense<0.000000e+00> : vector<16xf32>
    %287 = vector.multi_reduction <add>, %286, %cst_165 [1] : vector<16x16xf32> to vector<16xf32>
    %288 = vector.shape_cast %287 : vector<16xf32> to vector<16x1xf32>
    %289 = tpu.reciprocal %288 {approx = true} : vector<16x1xf32> -> vector<16x1xf32>
    %290 = vector.broadcast %289 : vector<16x1xf32> to vector<16x16xf32>
    %291 = arith.mulf %286, %290 : vector<16x16xf32>
    %292 = arith.truncf %291 : vector<16x16xf32> to vector<16x16xbf16>
    %cst_166 = arith.constant dense<0.000000e+00> : vector<16x8xf32>
    %293 = tpu.matmul %292, %277, %cst_166 {dimension_numbers = #tpu.dot_dimension_numbers<[1], [0], [0], [1], [0, 0, 1, 1], [], []>} : vector<16x16xbf16>, vector<16x8xbf16>, vector<16x8xf32> -> vector<16x8xf32>
    %294 = arith.truncf %293 : vector<16x8xf32> to vector<16x8xbf16>
    %c0_167 = arith.constant 0 : index
    %c1_168 = arith.constant 1 : index
    %c0_169 = arith.constant 0 : index
    %c0_170 = arith.constant 0 : index
    %295 = vector.load %arg13[%c0_167, %c1_168, %c0_169, %c0_170] : memref<1x2x32x32xbf16, #tpu.memory_space<vmem>>, vector<1x1x8x32xbf16>
    %296 = vector.shape_cast %295 : vector<1x1x8x32xbf16> to vector<8x32xbf16>
    %cst_171 = arith.constant dense<0.000000e+00> : vector<16x32xf32>
    %297 = tpu.matmul %294, %296, %cst_171 {dimension_numbers = #tpu.dot_dimension_numbers<[1], [0], [0], [1], [0, 0, 1, 1], [], []>} : vector<16x8xbf16>, vector<8x32xbf16>, vector<16x32xf32> -> vector<16x32xf32>
    %298 = vector.extract_strided_slice %257 {offsets = [0, 8], sizes = [16, 8], strides = [1, 1]} : vector<16x32xf32> to vector<16x8xf32>
    %299 = arith.truncf %298 : vector<16x8xf32> to vector<16x8xbf16>
    %300 = vector.extract_strided_slice %264 {offsets = [0, 8], sizes = [16, 8], strides = [1, 1]} : vector<16x32xf32> to vector<16x8xf32>
    %301 = arith.truncf %300 : vector<16x8xf32> to vector<16x8xbf16>
    %302 = vector.extract_strided_slice %271 {offsets = [0, 8], sizes = [16, 8], strides = [1, 1]} : vector<16x32xf32> to vector<16x8xf32>
    %303 = arith.truncf %302 : vector<16x8xf32> to vector<16x8xbf16>
    "tpu.trace_start"() <{level = 10 : i32, message = "qd,kd->qk"}> : () -> ()
    %cst_172 = arith.constant dense<0.000000e+00> : vector<16x16xf32>
    %304 = tpu.matmul %299, %301, %cst_172 {dimension_numbers = #tpu.dot_dimension_numbers<[1], [1], [0], [0], [0, 0, 1, 0], [], []>} : vector<16x8xbf16>, vector<16x8xbf16>, vector<16x16xf32> -> vector<16x16xf32>
    "tpu.trace_stop"() : () -> ()
    %cst_173 = arith.constant 0.353553385 : f32
    %305 = vector.broadcast %cst_173 : f32 to vector<16x16xf32>
    %306 = arith.mulf %304, %305 : vector<16x16xf32>
    %307 = arith.addf %306, %0 : vector<16x16xf32>
    %cst_174 = arith.constant dense<0xFF800000> : vector<16xf32>
    %308 = vector.multi_reduction <maximumf>, %307, %cst_174 [1] : vector<16x16xf32> to vector<16xf32>
    %309 = vector.shape_cast %308 : vector<16xf32> to vector<16x1xf32>
    %310 = vector.broadcast %309 : vector<16x1xf32> to vector<16x16xf32>
    %311 = arith.subf %307, %310 : vector<16x16xf32>
    %312 = math.exp %311 : vector<16x16xf32>
    %cst_175 = arith.constant dense<0.000000e+00> : vector<16xf32>
    %313 = vector.multi_reduction <add>, %312, %cst_175 [1] : vector<16x16xf32> to vector<16xf32>
    %314 = vector.shape_cast %313 : vector<16xf32> to vector<16x1xf32>
    %315 = tpu.reciprocal %314 {approx = true} : vector<16x1xf32> -> vector<16x1xf32>
    %316 = vector.broadcast %315 : vector<16x1xf32> to vector<16x16xf32>
    %317 = arith.mulf %312, %316 : vector<16x16xf32>
    %318 = arith.truncf %317 : vector<16x16xf32> to vector<16x16xbf16>
    %cst_176 = arith.constant dense<0.000000e+00> : vector<16x8xf32>
    %319 = tpu.matmul %318, %303, %cst_176 {dimension_numbers = #tpu.dot_dimension_numbers<[1], [0], [0], [1], [0, 0, 1, 1], [], []>} : vector<16x16xbf16>, vector<16x8xbf16>, vector<16x8xf32> -> vector<16x8xf32>
    %320 = arith.truncf %319 : vector<16x8xf32> to vector<16x8xbf16>
    %c0_177 = arith.constant 0 : index
    %c1_178 = arith.constant 1 : index
    %c8_179 = arith.constant 8 : index
    %c0_180 = arith.constant 0 : index
    %321 = vector.load %arg13[%c0_177, %c1_178, %c8_179, %c0_180] : memref<1x2x32x32xbf16, #tpu.memory_space<vmem>>, vector<1x1x8x32xbf16>
    %322 = vector.shape_cast %321 : vector<1x1x8x32xbf16> to vector<8x32xbf16>
    %cst_181 = arith.constant dense<0.000000e+00> : vector<16x32xf32>
    %323 = tpu.matmul %320, %322, %cst_181 {dimension_numbers = #tpu.dot_dimension_numbers<[1], [0], [0], [1], [0, 0, 1, 1], [], []>} : vector<16x8xbf16>, vector<8x32xbf16>, vector<16x32xf32> -> vector<16x32xf32>
    %324 = arith.addf %297, %323 : vector<16x32xf32>
    %325 = vector.extract_strided_slice %257 {offsets = [0, 16], sizes = [16, 8], strides = [1, 1]} : vector<16x32xf32> to vector<16x8xf32>
    %326 = arith.truncf %325 : vector<16x8xf32> to vector<16x8xbf16>
    %327 = vector.extract_strided_slice %264 {offsets = [0, 16], sizes = [16, 8], strides = [1, 1]} : vector<16x32xf32> to vector<16x8xf32>
    %328 = arith.truncf %327 : vector<16x8xf32> to vector<16x8xbf16>
    %329 = vector.extract_strided_slice %271 {offsets = [0, 16], sizes = [16, 8], strides = [1, 1]} : vector<16x32xf32> to vector<16x8xf32>
    %330 = arith.truncf %329 : vector<16x8xf32> to vector<16x8xbf16>
    "tpu.trace_start"() <{level = 10 : i32, message = "qd,kd->qk"}> : () -> ()
    %cst_182 = arith.constant dense<0.000000e+00> : vector<16x16xf32>
    %331 = tpu.matmul %326, %328, %cst_182 {dimension_numbers = #tpu.dot_dimension_numbers<[1], [1], [0], [0], [0, 0, 1, 0], [], []>} : vector<16x8xbf16>, vector<16x8xbf16>, vector<16x16xf32> -> vector<16x16xf32>
    "tpu.trace_stop"() : () -> ()
    %cst_183 = arith.constant 0.353553385 : f32
    %332 = vector.broadcast %cst_183 : f32 to vector<16x16xf32>
    %333 = arith.mulf %331, %332 : vector<16x16xf32>
    %334 = arith.addf %333, %0 : vector<16x16xf32>
    %cst_184 = arith.constant dense<0xFF800000> : vector<16xf32>
    %335 = vector.multi_reduction <maximumf>, %334, %cst_184 [1] : vector<16x16xf32> to vector<16xf32>
    %336 = vector.shape_cast %335 : vector<16xf32> to vector<16x1xf32>
    %337 = vector.broadcast %336 : vector<16x1xf32> to vector<16x16xf32>
    %338 = arith.subf %334, %337 : vector<16x16xf32>
    %339 = math.exp %338 : vector<16x16xf32>
    %cst_185 = arith.constant dense<0.000000e+00> : vector<16xf32>
    %340 = vector.multi_reduction <add>, %339, %cst_185 [1] : vector<16x16xf32> to vector<16xf32>
    %341 = vector.shape_cast %340 : vector<16xf32> to vector<16x1xf32>
    %342 = tpu.reciprocal %341 {approx = true} : vector<16x1xf32> -> vector<16x1xf32>
    %343 = vector.broadcast %342 : vector<16x1xf32> to vector<16x16xf32>
    %344 = arith.mulf %339, %343 : vector<16x16xf32>
    %345 = arith.truncf %344 : vector<16x16xf32> to vector<16x16xbf16>
    %cst_186 = arith.constant dense<0.000000e+00> : vector<16x8xf32>
    %346 = tpu.matmul %345, %330, %cst_186 {dimension_numbers = #tpu.dot_dimension_numbers<[1], [0], [0], [1], [0, 0, 1, 1], [], []>} : vector<16x16xbf16>, vector<16x8xbf16>, vector<16x8xf32> -> vector<16x8xf32>
    %347 = arith.truncf %346 : vector<16x8xf32> to vector<16x8xbf16>
    %c0_187 = arith.constant 0 : index
    %c1_188 = arith.constant 1 : index
    %c16_189 = arith.constant 16 : index
    %c0_190 = arith.constant 0 : index
    %348 = vector.load %arg13[%c0_187, %c1_188, %c16_189, %c0_190] : memref<1x2x32x32xbf16, #tpu.memory_space<vmem>>, vector<1x1x8x32xbf16>
    %349 = vector.shape_cast %348 : vector<1x1x8x32xbf16> to vector<8x32xbf16>
    %cst_191 = arith.constant dense<0.000000e+00> : vector<16x32xf32>
    %350 = tpu.matmul %347, %349, %cst_191 {dimension_numbers = #tpu.dot_dimension_numbers<[1], [0], [0], [1], [0, 0, 1, 1], [], []>} : vector<16x8xbf16>, vector<8x32xbf16>, vector<16x32xf32> -> vector<16x32xf32>
    %351 = arith.addf %324, %350 : vector<16x32xf32>
    %352 = vector.extract_strided_slice %257 {offsets = [0, 24], sizes = [16, 8], strides = [1, 1]} : vector<16x32xf32> to vector<16x8xf32>
    %353 = arith.truncf %352 : vector<16x8xf32> to vector<16x8xbf16>
    %354 = vector.extract_strided_slice %264 {offsets = [0, 24], sizes = [16, 8], strides = [1, 1]} : vector<16x32xf32> to vector<16x8xf32>
    %355 = arith.truncf %354 : vector<16x8xf32> to vector<16x8xbf16>
    %356 = vector.extract_strided_slice %271 {offsets = [0, 24], sizes = [16, 8], strides = [1, 1]} : vector<16x32xf32> to vector<16x8xf32>
    %357 = arith.truncf %356 : vector<16x8xf32> to vector<16x8xbf16>
    "tpu.trace_start"() <{level = 10 : i32, message = "qd,kd->qk"}> : () -> ()
    %cst_192 = arith.constant dense<0.000000e+00> : vector<16x16xf32>
    %358 = tpu.matmul %353, %355, %cst_192 {dimension_numbers = #tpu.dot_dimension_numbers<[1], [1], [0], [0], [0, 0, 1, 0], [], []>} : vector<16x8xbf16>, vector<16x8xbf16>, vector<16x16xf32> -> vector<16x16xf32>
    "tpu.trace_stop"() : () -> ()
    %cst_193 = arith.constant 0.353553385 : f32
    %359 = vector.broadcast %cst_193 : f32 to vector<16x16xf32>
    %360 = arith.mulf %358, %359 : vector<16x16xf32>
    %361 = arith.addf %360, %0 : vector<16x16xf32>
    %cst_194 = arith.constant dense<0xFF800000> : vector<16xf32>
    %362 = vector.multi_reduction <maximumf>, %361, %cst_194 [1] : vector<16x16xf32> to vector<16xf32>
    %363 = vector.shape_cast %362 : vector<16xf32> to vector<16x1xf32>
    %364 = vector.broadcast %363 : vector<16x1xf32> to vector<16x16xf32>
    %365 = arith.subf %361, %364 : vector<16x16xf32>
    %366 = math.exp %365 : vector<16x16xf32>
    %cst_195 = arith.constant dense<0.000000e+00> : vector<16xf32>
    %367 = vector.multi_reduction <add>, %366, %cst_195 [1] : vector<16x16xf32> to vector<16xf32>
    %368 = vector.shape_cast %367 : vector<16xf32> to vector<16x1xf32>
    %369 = tpu.reciprocal %368 {approx = true} : vector<16x1xf32> -> vector<16x1xf32>
    %370 = vector.broadcast %369 : vector<16x1xf32> to vector<16x16xf32>
    %371 = arith.mulf %366, %370 : vector<16x16xf32>
    %372 = arith.truncf %371 : vector<16x16xf32> to vector<16x16xbf16>
    %cst_196 = arith.constant dense<0.000000e+00> : vector<16x8xf32>
    %373 = tpu.matmul %372, %357, %cst_196 {dimension_numbers = #tpu.dot_dimension_numbers<[1], [0], [0], [1], [0, 0, 1, 1], [], []>} : vector<16x16xbf16>, vector<16x8xbf16>, vector<16x8xf32> -> vector<16x8xf32>
    %374 = arith.truncf %373 : vector<16x8xf32> to vector<16x8xbf16>
    %c0_197 = arith.constant 0 : index
    %c1_198 = arith.constant 1 : index
    %c24_199 = arith.constant 24 : index
    %c0_200 = arith.constant 0 : index
    %375 = vector.load %arg13[%c0_197, %c1_198, %c24_199, %c0_200] : memref<1x2x32x32xbf16, #tpu.memory_space<vmem>>, vector<1x1x8x32xbf16>
    %376 = vector.shape_cast %375 : vector<1x1x8x32xbf16> to vector<8x32xbf16>
    %cst_201 = arith.constant dense<0.000000e+00> : vector<16x32xf32>
    %377 = tpu.matmul %374, %376, %cst_201 {dimension_numbers = #tpu.dot_dimension_numbers<[1], [0], [0], [1], [0, 0, 1, 1], [], []>} : vector<16x8xbf16>, vector<8x32xbf16>, vector<16x32xf32> -> vector<16x32xf32>
    %378 = arith.addf %351, %377 : vector<16x32xf32>
    %c0_202 = arith.constant 0 : index
    %c1_203 = arith.constant 1 : index
    %c0_204 = arith.constant 0 : index
    %c0_205 = arith.constant 0 : index
    %379 = vector.load %arg14[%c0_202, %c1_203, %c0_204, %c0_205] : memref<1x2x1x32xf32, #tpu.memory_space<vmem>>, vector<1x1x1x32xf32>
    %380 = vector.shape_cast %379 : vector<1x1x1x32xf32> to vector<1x32xf32>
    %381 = vector.broadcast %380 : vector<1x32xf32> to vector<16x32xf32>
    %382 = arith.addf %378, %381 : vector<16x32xf32>
    %383 = arith.addf %249, %382 : vector<16x32xf32>
    %c0_206 = arith.constant 0 : index
    %c1_207 = arith.constant 1 : index
    %c0_208 = arith.constant 0 : index
    %c0_209 = arith.constant 0 : index
    %384 = vector.load %arg15[%c0_206, %c1_207, %c0_208, %c0_209] : memref<1x2x1x32xf32, #tpu.memory_space<vmem>>, vector<1x1x1x32xf32>
    %385 = vector.shape_cast %384 : vector<1x1x1x32xf32> to vector<1x32xf32>
    %c0_210 = arith.constant 0 : index
    %c1_211 = arith.constant 1 : index
    %c0_212 = arith.constant 0 : index
    %c0_213 = arith.constant 0 : index
    %386 = vector.load %arg16[%c0_210, %c1_211, %c0_212, %c0_213] : memref<1x2x1x32xf32, #tpu.memory_space<vmem>>, vector<1x1x1x32xf32>
    %387 = vector.shape_cast %386 : vector<1x1x1x32xf32> to vector<1x32xf32>
    %cst_214 = arith.constant dense<0.000000e+00> : vector<16xf32>
    %388 = vector.multi_reduction <add>, %383, %cst_214 [1] : vector<16x32xf32> to vector<16xf32>
    %389 = vector.shape_cast %388 : vector<16xf32> to vector<16x1xf32>
    %cst_215 = arith.constant 3.200000e+01 : f32
    %390 = vector.broadcast %cst_215 : f32 to vector<16x1xf32>
    %391 = arith.divf %389, %390 : vector<16x1xf32>
    %392 = vector.broadcast %391 : vector<16x1xf32> to vector<16x32xf32>
    %393 = arith.subf %383, %392 : vector<16x32xf32>
    %394 = arith.mulf %393, %393 : vector<16x32xf32>
    %cst_216 = arith.constant dense<0.000000e+00> : vector<16xf32>
    %395 = vector.multi_reduction <add>, %394, %cst_216 [1] : vector<16x32xf32> to vector<16xf32>
    %396 = vector.shape_cast %395 : vector<16xf32> to vector<16x1xf32>
    %cst_217 = arith.constant 3.200000e+01 : f32
    %397 = vector.broadcast %cst_217 : f32 to vector<16x1xf32>
    %398 = arith.divf %396, %397 : vector<16x1xf32>
    %399 = vector.broadcast %391 : vector<16x1xf32> to vector<16x32xf32>
    %400 = arith.subf %383, %399 : vector<16x32xf32>
    %cst_218 = arith.constant 9.99999996E-13 : f32
    %401 = vector.broadcast %cst_218 : f32 to vector<16x1xf32>
    %402 = arith.addf %398, %401 : vector<16x1xf32>
    %403 = math.rsqrt %402 : vector<16x1xf32>
    %404 = vector.broadcast %403 : vector<16x1xf32> to vector<16x32xf32>
    %405 = arith.mulf %400, %404 : vector<16x32xf32>
    %406 = vector.broadcast %385 : vector<1x32xf32> to vector<16x32xf32>
    %407 = arith.mulf %405, %406 : vector<16x32xf32>
    %408 = vector.broadcast %387 : vector<1x32xf32> to vector<16x32xf32>
    %409 = arith.addf %407, %408 : vector<16x32xf32>
    %410 = arith.truncf %409 : vector<16x32xf32> to vector<16x32xbf16>
    %c0_219 = arith.constant 0 : index
    %c1_220 = arith.constant 1 : index
    %c0_221 = arith.constant 0 : index
    %c0_222 = arith.constant 0 : index
    %411 = vector.load %arg17[%c0_219, %c1_220, %c0_221, %c0_222] : memref<1x2x32x64xbf16, #tpu.memory_space<vmem>>, vector<1x1x32x64xbf16>
    %412 = vector.shape_cast %411 : vector<1x1x32x64xbf16> to vector<32x64xbf16>
    %cst_223 = arith.constant dense<0.000000e+00> : vector<16x64xf32>
    %413 = tpu.matmul %410, %412, %cst_223 {dimension_numbers = #tpu.dot_dimension_numbers<[1], [0], [0], [1], [0, 0, 1, 1], [], []>} : vector<16x32xbf16>, vector<32x64xbf16>, vector<16x64xf32> -> vector<16x64xf32>
    %c0_224 = arith.constant 0 : index
    %c1_225 = arith.constant 1 : index
    %c0_226 = arith.constant 0 : index
    %c0_227 = arith.constant 0 : index
    %414 = vector.load %arg18[%c0_224, %c1_225, %c0_226, %c0_227] : memref<1x2x1x64xf32, #tpu.memory_space<vmem>>, vector<1x1x1x64xf32>
    %415 = vector.shape_cast %414 : vector<1x1x1x64xf32> to vector<1x64xf32>
    %416 = vector.broadcast %415 : vector<1x64xf32> to vector<16x64xf32>
    %417 = arith.addf %413, %416 : vector<16x64xf32>
    %cst_228 = arith.constant 5.000000e-01 : f32
    %418 = vector.broadcast %cst_228 : f32 to vector<16x64xf32>
    %419 = arith.mulf %418, %417 : vector<16x64xf32>
    %cst_229 = arith.constant 4.471500e-02 : f32
    %420 = vector.broadcast %cst_229 : f32 to vector<16x64xf32>
    %421 = arith.mulf %420, %417 : vector<16x64xf32>
    %422 = arith.mulf %421, %417 : vector<16x64xf32>
    %423 = arith.mulf %422, %417 : vector<16x64xf32>
    %424 = arith.addf %417, %423 : vector<16x64xf32>
    %cst_230 = arith.constant 0.797884583 : f32
    %425 = vector.broadcast %cst_230 : f32 to vector<16x64xf32>
    %426 = arith.mulf %425, %424 : vector<16x64xf32>
    %427 = math.tanh %426 : vector<16x64xf32>
    %cst_231 = arith.constant 1.000000e+00 : f32
    %428 = vector.broadcast %cst_231 : f32 to vector<16x64xf32>
    %429 = arith.addf %428, %427 : vector<16x64xf32>
    %430 = arith.mulf %419, %429 : vector<16x64xf32>
    %431 = arith.truncf %430 : vector<16x64xf32> to vector<16x64xbf16>
    %c0_232 = arith.constant 0 : index
    %c1_233 = arith.constant 1 : index
    %c0_234 = arith.constant 0 : index
    %c0_235 = arith.constant 0 : index
    %432 = vector.load %arg19[%c0_232, %c1_233, %c0_234, %c0_235] : memref<1x2x64x32xbf16, #tpu.memory_space<vmem>>, vector<1x1x64x32xbf16>
    %433 = vector.shape_cast %432 : vector<1x1x64x32xbf16> to vector<64x32xbf16>
    %cst_236 = arith.constant dense<0.000000e+00> : vector<16x32xf32>
    %434 = tpu.matmul %431, %433, %cst_236 {dimension_numbers = #tpu.dot_dimension_numbers<[1], [0], [0], [1], [0, 0, 1, 1], [], []>} : vector<16x64xbf16>, vector<64x32xbf16>, vector<16x32xf32> -> vector<16x32xf32>
    %c0_237 = arith.constant 0 : index
    %c1_238 = arith.constant 1 : index
    %c0_239 = arith.constant 0 : index
    %c0_240 = arith.constant 0 : index
    %435 = vector.load %arg20[%c0_237, %c1_238, %c0_239, %c0_240] : memref<1x2x1x32xf32, #tpu.memory_space<vmem>>, vector<1x1x1x32xf32>
    %436 = vector.shape_cast %435 : vector<1x1x1x32xf32> to vector<1x32xf32>
    %437 = vector.broadcast %436 : vector<1x32xf32> to vector<16x32xf32>
    %438 = arith.addf %434, %437 : vector<16x32xf32>
    %439 = arith.addf %409, %438 : vector<16x32xf32>
    %c0_241 = arith.constant 0 : index
    %c1_242 = arith.constant 1 : index
    %c0_243 = arith.constant 0 : index
    %c0_244 = arith.constant 0 : index
    %440 = vector.load %arg21[%c0_241, %c1_242, %c0_243, %c0_244] : memref<1x2x1x32xf32, #tpu.memory_space<vmem>>, vector<1x1x1x32xf32>
    %441 = vector.shape_cast %440 : vector<1x1x1x32xf32> to vector<1x32xf32>
    %c0_245 = arith.constant 0 : index
    %c1_246 = arith.constant 1 : index
    %c0_247 = arith.constant 0 : index
    %c0_248 = arith.constant 0 : index
    %442 = vector.load %arg22[%c0_245, %c1_246, %c0_247, %c0_248] : memref<1x2x1x32xf32, #tpu.memory_space<vmem>>, vector<1x1x1x32xf32>
    %443 = vector.shape_cast %442 : vector<1x1x1x32xf32> to vector<1x32xf32>
    %cst_249 = arith.constant dense<0.000000e+00> : vector<16xf32>
    %444 = vector.multi_reduction <add>, %439, %cst_249 [1] : vector<16x32xf32> to vector<16xf32>
    %445 = vector.shape_cast %444 : vector<16xf32> to vector<16x1xf32>
    %cst_250 = arith.constant 3.200000e+01 : f32
    %446 = vector.broadcast %cst_250 : f32 to vector<16x1xf32>
    %447 = arith.divf %445, %446 : vector<16x1xf32>
    %448 = vector.broadcast %447 : vector<16x1xf32> to vector<16x32xf32>
    %449 = arith.subf %439, %448 : vector<16x32xf32>
    %450 = arith.mulf %449, %449 : vector<16x32xf32>
    %cst_251 = arith.constant dense<0.000000e+00> : vector<16xf32>
    %451 = vector.multi_reduction <add>, %450, %cst_251 [1] : vector<16x32xf32> to vector<16xf32>
    %452 = vector.shape_cast %451 : vector<16xf32> to vector<16x1xf32>
    %cst_252 = arith.constant 3.200000e+01 : f32
    %453 = vector.broadcast %cst_252 : f32 to vector<16x1xf32>
    %454 = arith.divf %452, %453 : vector<16x1xf32>
    %455 = vector.broadcast %447 : vector<16x1xf32> to vector<16x32xf32>
    %456 = arith.subf %439, %455 : vector<16x32xf32>
    %cst_253 = arith.constant 9.99999996E-13 : f32
    %457 = vector.broadcast %cst_253 : f32 to vector<16x1xf32>
    %458 = arith.addf %454, %457 : vector<16x1xf32>
    %459 = math.rsqrt %458 : vector<16x1xf32>
    %460 = vector.broadcast %459 : vector<16x1xf32> to vector<16x32xf32>
    %461 = arith.mulf %456, %460 : vector<16x32xf32>
    %462 = vector.broadcast %441 : vector<1x32xf32> to vector<16x32xf32>
    %463 = arith.mulf %461, %462 : vector<16x32xf32>
    %464 = vector.broadcast %443 : vector<1x32xf32> to vector<16x32xf32>
    %465 = arith.addf %463, %464 : vector<16x32xf32>
    %466 = vector.extract_strided_slice %465 {offsets = [0, 0], sizes = [1, 32], strides = [1, 1]} : vector<16x32xf32> to vector<1x32xf32>
    %c0_254 = arith.constant 0 : index
    %c0_255 = arith.constant 0 : index
    %c0_256 = arith.constant 0 : index
    %467 = vector.load %arg23[%c0_254, %c0_255, %c0_256] : memref<1x2x32xf32, #tpu.memory_space<vmem>>, vector<1x1x32xf32>
    %468 = vector.shape_cast %467 : vector<1x1x32xf32> to vector<1x32xf32>
    %469 = vector.shape_cast %466 : vector<1x32xf32> to vector<1x1x32xf32>
    tpu.vector_store %arg23[%c0_254, %c0_255, %c0_256], %469 {strides = array<i32>} : memref<1x2x32xf32, #tpu.memory_space<vmem>>, vector<1x1x32xf32>,
    %470 = vector.extract_strided_slice %465 {offsets = [8, 0], sizes = [1, 32], strides = [1, 1]} : vector<16x32xf32> to vector<1x32xf32>
    %c0_257 = arith.constant 0 : index
    %c1_258 = arith.constant 1 : index
    %c0_259 = arith.constant 0 : index
    %471 = vector.load %arg23[%c0_257, %c1_258, %c0_259] : memref<1x2x32xf32, #tpu.memory_space<vmem>>, vector<1x1x32xf32>
    %472 = vector.shape_cast %471 : vector<1x1x32xf32> to vector<1x32xf32>
    %473 = vector.shape_cast %470 : vector<1x32xf32> to vector<1x1x32xf32>
    tpu.vector_store %arg23[%c0_257, %c1_258, %c0_259], %473 {strides = array<i32>} : memref<1x2x32xf32, #tpu.memory_space<vmem>>, vector<1x1x32xf32>,
    return
  }
  func.func @transform_0(%arg0: i32) -> (i32, i32) {
    %c0_i32 = arith.constant 0 : i32
    %c0_i32_0 = arith.constant 0 : i32
    %c0_i32_1 = arith.constant 0 : i32
    return %c0_i32, %c0_i32_0 : i32, i32
  }
  func.func @transform_1(%arg0: i32) -> (i32, i32) {
    %c0_i32 = arith.constant 0 : i32
    %c0_i32_0 = arith.constant 0 : i32
    %c0_i32_1 = arith.constant 0 : i32
    return %c0_i32, %c0_i32_0 : i32, i32
  }
  func.func @transform_2(%arg0: i32) -> (i32, i32, i32) {
    %c0_i32 = arith.constant 0 : i32
    %c0_i32_0 = arith.constant 0 : i32
    %c0_i32_1 = arith.constant 0 : i32
    return %arg0, %c0_i32, %c0_i32_0 : i32, i32, i32
  }
  func.func @transform_3(%arg0: i32) -> (i32, i32, i32) {
    %c0_i32 = arith.constant 0 : i32
    %c0_i32_0 = arith.constant 0 : i32
    %c0_i32_1 = arith.constant 0 : i32
    return %arg0, %c0_i32, %c0_i32_0 : i32, i32, i32
  }
  func.func @transform_4(%arg0: i32) -> (i32, i32, i32) {
    %c0_i32 = arith.constant 0 : i32
    %c0_i32_0 = arith.constant 0 : i32
    %c0_i32_1 = arith.constant 0 : i32
    return %arg0, %c0_i32, %c0_i32_0 : i32, i32, i32
  }
  func.func @transform_5(%arg0: i32) -> (i32, i32, i32) {
    %c0_i32 = arith.constant 0 : i32
    %c0_i32_0 = arith.constant 0 : i32
    %c0_i32_1 = arith.constant 0 : i32
    return %arg0, %c0_i32, %c0_i32_0 : i32, i32, i32
  }
  func.func @transform_6(%arg0: i32) -> (i32, i32, i32, i32) {
    %c0_i32 = arith.constant 0 : i32
    %c0_i32_0 = arith.constant 0 : i32
    %c0_i32_1 = arith.constant 0 : i32
    %c0_i32_2 = arith.constant 0 : i32
    return %arg0, %c0_i32, %c0_i32_0, %c0_i32_1 : i32, i32, i32, i32
  }
  func.func @transform_7(%arg0: i32) -> (i32, i32, i32, i32) {
    %c0_i32 = arith.constant 0 : i32
    %c0_i32_0 = arith.constant 0 : i32
    %c0_i32_1 = arith.constant 0 : i32
    %c0_i32_2 = arith.constant 0 : i32
    return %arg0, %c0_i32, %c0_i32_0, %c0_i32_1 : i32, i32, i32, i32
  }
  func.func @transform_8(%arg0: i32) -> (i32, i32, i32, i32) {
    %c0_i32 = arith.constant 0 : i32
    %c0_i32_0 = arith.constant 0 : i32
    %c0_i32_1 = arith.constant 0 : i32
    %c0_i32_2 = arith.constant 0 : i32
    return %arg0, %c0_i32, %c0_i32_0, %c0_i32_1 : i32, i32, i32, i32
  }
  func.func @transform_9(%arg0: i32) -> (i32, i32, i32, i32) {
    %c0_i32 = arith.constant 0 : i32
    %c0_i32_0 = arith.constant 0 : i32
    %c0_i32_1 = arith.constant 0 : i32
    %c0_i32_2 = arith.constant 0 : i32
    return %arg0, %c0_i32, %c0_i32_0, %c0_i32_1 : i32, i32, i32, i32
  }
  func.func @transform_10(%arg0: i32) -> (i32, i32, i32, i32) {
    %c0_i32 = arith.constant 0 : i32
    %c0_i32_0 = arith.constant 0 : i32
    %c0_i32_1 = arith.constant 0 : i32
    %c0_i32_2 = arith.constant 0 : i32
    return %arg0, %c0_i32, %c0_i32_0, %c0_i32_1 : i32, i32, i32, i32
  }
  func.func @transform_11(%arg0: i32) -> (i32, i32, i32, i32) {
    %c0_i32 = arith.constant 0 : i32
    %c0_i32_0 = arith.constant 0 : i32
    %c0_i32_1 = arith.constant 0 : i32
    %c0_i32_2 = arith.constant 0 : i32
    return %arg0, %c0_i32, %c0_i32_0, %c0_i32_1 : i32, i32, i32, i32
  }
  func.func @transform_12(%arg0: i32) -> (i32, i32, i32, i32) {
    %c0_i32 = arith.constant 0 : i32
    %c0_i32_0 = arith.constant 0 : i32
    %c0_i32_1 = arith.constant 0 : i32
    %c0_i32_2 = arith.constant 0 : i32
    return %arg0, %c0_i32, %c0_i32_0, %c0_i32_1 : i32, i32, i32, i32
  }
  func.func @transform_13(%arg0: i32) -> (i32, i32, i32, i32) {
    %c0_i32 = arith.constant 0 : i32
    %c0_i32_0 = arith.constant 0 : i32
    %c0_i32_1 = arith.constant 0 : i32
    %c0_i32_2 = arith.constant 0 : i32
    return %arg0, %c0_i32, %c0_i32_0, %c0_i32_1 : i32, i32, i32, i32
  }
  func.func @transform_14(%arg0: i32) -> (i32, i32, i32, i32) {
    %c0_i32 = arith.constant 0 : i32
    %c0_i32_0 = arith.constant 0 : i32
    %c0_i32_1 = arith.constant 0 : i32
    %c0_i32_2 = arith.constant 0 : i32
    return %arg0, %c0_i32, %c0_i32_0, %c0_i32_1 : i32, i32, i32, i32
  }
  func.func @transform_15(%arg0: i32) -> (i32, i32, i32, i32) {
    %c0_i32 = arith.constant 0 : i32
    %c0_i32_0 = arith.constant 0 : i32
    %c0_i32_1 = arith.constant 0 : i32
    %c0_i32_2 = arith.constant 0 : i32
    return %arg0, %c0_i32, %c0_i32_0, %c0_i32_1 : i32, i32, i32, i32
  }
  func.func @transform_16(%arg0: i32) -> (i32, i32, i32, i32) {
    %c0_i32 = arith.constant 0 : i32
    %c0_i32_0 = arith.constant 0 : i32
    %c0_i32_1 = arith.constant 0 : i32
    %c0_i32_2 = arith.constant 0 : i32
    return %arg0, %c0_i32, %c0_i32_0, %c0_i32_1 : i32, i32, i32, i32
  }
  func.func @transform_17(%arg0: i32) -> (i32, i32, i32, i32) {
    %c0_i32 = arith.constant 0 : i32
    %c0_i32_0 = arith.constant 0 : i32
    %c0_i32_1 = arith.constant 0 : i32
    %c0_i32_2 = arith.constant 0 : i32
    return %arg0, %c0_i32, %c0_i32_0, %c0_i32_1 : i32, i32, i32, i32
  }
  func.func @transform_18(%arg0: i32) -> (i32, i32, i32, i32) {
    %c0_i32 = arith.constant 0 : i32
    %c0_i32_0 = arith.constant 0 : i32
    %c0_i32_1 = arith.constant 0 : i32
    %c0_i32_2 = arith.constant 0 : i32
    return %arg0, %c0_i32, %c0_i32_0, %c0_i32_1 : i32, i32, i32, i32
  }
  func.func @transform_19(%arg0: i32) -> (i32, i32, i32, i32) {
    %c0_i32 = arith.constant 0 : i32
    %c0_i32_0 = arith.constant 0 : i32
    %c0_i32_1 = arith.constant 0 : i32
    %c0_i32_2 = arith.constant 0 : i32
    return %arg0, %c0_i32, %c0_i32_0, %c0_i32_1 : i32, i32, i32, i32
  }
  func.func @transform_20(%arg0: i32) -> (i32, i32, i32, i32) {
    %c0_i32 = arith.constant 0 : i32
    %c0_i32_0 = arith.constant 0 : i32
    %c0_i32_1 = arith.constant 0 : i32
    %c0_i32_2 = arith.constant 0 : i32
    return %arg0, %c0_i32, %c0_i32_0, %c0_i32_1 : i32, i32, i32, i32
  }
  func.func @transform_21(%arg0: i32) -> (i32, i32, i32, i32) {
    %c0_i32 = arith.constant 0 : i32
    %c0_i32_0 = arith.constant 0 : i32
    %c0_i32_1 = arith.constant 0 : i32
    %c0_i32_2 = arith.constant 0 : i32
    return %arg0, %c0_i32, %c0_i32_0, %c0_i32_1 : i32, i32, i32, i32
  }
  func.func @transform_22(%arg0: i32) -> (i32, i32, i32) {
    %c0_i32 = arith.constant 0 : i32
    %c0_i32_0 = arith.constant 0 : i32
    %c0_i32_1 = arith.constant 0 : i32
    return %arg0, %c0_i32, %c0_i32_0 : i32, i32, i32
  }
}

</mosaic_0001>

<llo_original>
// kernel: eq.22
$region0: #{eq.22}
  %s0 = inlined_call_operand.vmem [shape: s32[2,8], index: 0, kind: input, shape index: {}]
  %s1 = inlined_call_operand.vmem [shape: s32[16], index: 1, kind: output, shape index: {}]
  $region1: #{eq.22} parent=0
    #allocation0 [shape = 'u8[4096]{0}', space=vmem, size = 0x1000, scoped, tag = 'scoped mem for output reshape']
    #allocation1 [shape = 'u8[4096]{0}', space=vmem, size = 0x1000, scoped, tag = 'scoped mem for input reshape']
    %s3 = sshll.u32 1, 2
    %s4 = ssub.s32 %s3, 1
    %v5 = vld [vmem:[%s0] sm:%s4]
    %6 = vst [vmem:[#allocation1] sm:%s4] %v5
    %v7 = vld [vmem:[#allocation1] sm:$0x1]
    %vm8 = vcmask 64512
    %9 = vst.msk [vmem:[#allocation0] sm:$0x1] %vm8, %v7
    %s10 = scalar_lea.vmem [#allocation1], 1
    %v11 = vld [vmem:[%s10] sm:$0x1]
    %12 = vrot.lane.b32.xlu0 %v11, 8
    %v13 = vpop.permute.xlu0 %12
    %vm14 = vcmask 130112
    %15 = vst.msk [vmem:[#allocation0] sm:$0x1] %vm14, %v13
    %s17 = sshll.u32 1, 1
    %s18 = ssub.s32 %s17, 1
    %v20 = vld [vmem:[#allocation0] sm:%s18]
    %s21 = sshll.u32 1, 1
    %s22 = ssub.s32 %s21, 1
    %23 = vst [vmem:[%s1] sm:%s22] %v20

// kernel: bert_multitask_forward_mrpc.3
$region0: #{bert_multitask_forward_mrpc.3}
  #allocation0 [shape = 'u32[]', space=smem, size = 0x4, offset = 0x4, fixed_abs, tag = 'smem constant byte address 0x4 - core index']
  #allocation1 [shape = 'u32[144,128]{1,0:T(1,128)}', space=vmem, size = 0x12000, scoped, tag = 'internal scratch']
  %s0 = inlined_call_operand.vmem [shape: f32[2,32], index: 0, kind: input, shape index: {}]
  %s1 = inlined_call_operand.vmem [shape: f32[2,32], index: 1, kind: input, shape index: {}]
  %s2 = inlined_call_operand.vmem [shape: bf16[32,2], index: 2, kind: input, shape index: {}]
  %s3 = inlined_call_operand.vmem [shape: bf16[32,2], index: 3, kind: input, shape index: {}]
  %s4 = inlined_call_operand.vmem [shape: f32[1,2], index: 4, kind: input, shape index: {}]
  %s5 = inlined_call_operand.vmem [shape: bf16[32,2], index: 5, kind: input, shape index: {}]
  %s6 = inlined_call_operand.vmem [shape: f32[1,2], index: 6, kind: input, shape index: {}]
  %s7 = inlined_call_operand.hbm [shape: f32[2,2], index: 7, kind: output, shape index: {0}]
  %s8 = inlined_call_operand.hbm [shape: f32[2,2], index: 8, kind: output, shape index: {1}]
  %9 = xla_tuple %s7, %s8
  %s10 = sld [smem:[#allocation0]]
  $region46: #{bert_multitask_forward_mrpc.3} parent=0
    _
  %s12 = ssub.s32 1, %s10
  %s13 = scalar_select 0, %s12, %s10
  $region1: #{bert_multitask_forward_mrpc.3} parent=0
    #allocation2 [shape = 'u8[1024]{0}', space=vmem, size = 0x400, scoped, tag = 'output window, operand 0, single buffered']
    #allocation3 [shape = 's32[1]{0}', space=sflag, size = 0x4, scoped, tag = 'scoped memory for bert_multitask_forward_mrpc.3']
    #allocation4 [shape = 'u8[1024]{0}', space=vmem, size = 0x400, scoped, tag = 'output window, operand 1, single buffered']
    #allocation5 [shape = 's32[1]{0}', space=sflag, size = 0x4, scoped, tag = 'scoped memory for bert_multitask_forward_mrpc.3']
    %14 = vsyncpa [#allocation3], 0
    %15 = vsyncpa [#allocation5], 0
    // Predicated region
    $region2: #{bert_multitask_forward_mrpc.3} parent=1 // pred_check
      _
    $region3: #{bert_multitask_forward_mrpc.3} parent=1 // pred_check_branch
      %17 = sbr.rel (0) target = $region5
    $region4: #{bert_multitask_forward_mrpc.3} parent=1 // pred_region
      _
    $region5: #{bert_multitask_forward_mrpc.3} parent=1 // pred_fallthru
      _
    // Predicated region
    $region6: #{bert_multitask_forward_mrpc.3} parent=1 // pred_check
      _
    $region7: #{bert_multitask_forward_mrpc.3} parent=1 // pred_check_branch
      %19 = sbr.rel (0) target = $region9
    $region8: #{bert_multitask_forward_mrpc.3} parent=1 // pred_region
      _
    $region9: #{bert_multitask_forward_mrpc.3} parent=1 // pred_fallthru
      _
    // Predicated region
    $region10: #{bert_multitask_forward_mrpc.3} parent=1 // pred_check
      _
    $region11: #{bert_multitask_forward_mrpc.3} parent=1 // pred_check_branch
      %21 = sbr.rel (0) target = $region13
    $region12: #{bert_multitask_forward_mrpc.3} parent=1 // pred_region
      _
    $region13: #{bert_multitask_forward_mrpc.3} parent=1 // pred_fallthru
      _
    // Predicated region
    $region14: #{bert_multitask_forward_mrpc.3} parent=1 // pred_check
      _
    $region15: #{bert_multitask_forward_mrpc.3} parent=1 // pred_check_branch
      %23 = sbr.rel (0) target = $region17
    $region16: #{bert_multitask_forward_mrpc.3} parent=1 // pred_region
      _
    $region17: #{bert_multitask_forward_mrpc.3} parent=1 // pred_fallthru
      _
    // Predicated region
    $region18: #{bert_multitask_forward_mrpc.3} parent=1 // pred_check
      _
    $region19: #{bert_multitask_forward_mrpc.3} parent=1 // pred_check_branch
      %25 = sbr.rel (0) target = $region21
    $region20: #{bert_multitask_forward_mrpc.3} parent=1 // pred_region
      _
    $region21: #{bert_multitask_forward_mrpc.3} parent=1 // pred_fallthru
      _
    // Predicated region
    $region22: #{bert_multitask_forward_mrpc.3} parent=1 // pred_check
      _
    $region23: #{bert_multitask_forward_mrpc.3} parent=1 // pred_check_branch
      %27 = sbr.rel (0) target = $region25
    $region24: #{bert_multitask_forward_mrpc.3} parent=1 // pred_region
      _
    $region25: #{bert_multitask_forward_mrpc.3} parent=1 // pred_fallthru
      _
    // Predicated region
    $region26: #{bert_multitask_forward_mrpc.3} parent=1 // pred_check
      _
    $region27: #{bert_multitask_forward_mrpc.3} parent=1 // pred_check_branch
      %29 = sbr.rel (0) target = $region29
    $region28: #{bert_multitask_forward_mrpc.3} parent=1 // pred_region
      _
    $region29: #{bert_multitask_forward_mrpc.3} parent=1 // pred_fallthru
      _
    %v31 = vld [vmem:[%s0] sm:$0x3]
    %v32 = vld [vmem:[%s1] sm:$0x3]
    %v33 = vpack.c.bf16 %v31, %v31
    %v34 = vld [vmem:[%s2] sm:$0xf]
    %v35 = vld [vmem:[%s2 + $0x4] sm:$0xf]
    %v36 = vld [vmem:[%s2 + $0x8] sm:$0xf]
    %v37 = vld [vmem:[%s2 + $0xc] sm:$0xf]
    %v38 = vpack.c.bf16 %v32, %v32
    %v39 = vld [vmem:[%s3] sm:$0xf]
    %v40 = vld [vmem:[%s3 + $0x4] sm:$0xf]
    %v41 = vld [vmem:[%s3 + $0x8] sm:$0xf]
    %v42 = vld [vmem:[%s3 + $0xc] sm:$0xf]
    %v47 = vunpack.c.l.b16 %v39
    %v48 = vunpack.c.l.b16 %v40
    %v49 = vunpack.c.l.b16 %v41
    %v50 = vunpack.c.l.b16 %v42
    %v51 = vpack.c.b16 %v48, %v47
    %v52 = vpack.c.b16 %v50, %v49
    %vm55 = vcmask 261120
    %v57 = vsel %vm55, %v38, 0
    %59 = vmatprep.subr.bf16.mxu0 0
    %60 = vmatpush1.bf16.msra.mxu0 0
    %61 = vmatprep.subr.bf16.mxu0 0
    %62 = vmatpush1.bf16.msra.mxu0 0
    %63 = vmatprep.subr.bf16.mxu0 0
    %64 = vmatpush1.bf16.msra.mxu0 0
    %65 = vmatprep.subr.bf16.mxu0 0
    %66 = vmatpush1.bf16.msra.mxu0 0
    %67 = vmatprep.subr.bf16.mxu0 0
    %68 = vmatpush1.bf16.msra.mxu0 0
    %69 = vmatprep.subr.bf16.mxu0 0
    %70 = vmatpush1.bf16.msra.mxu0 0
    %71 = vmatprep.subr.bf16.mxu0 0
    %72 = vmatpush1.bf16.msra.mxu0 %v52
    %73 = vmatprep.subr.bf16.mxu0 0
    %74 = vmatpush1.bf16.msra.mxu0 %v51
    %75 = vmatprep.subr.bf16.mxu0 0
    %76 = vmatpush2.bf16.msra.mxu0 0
    %77 = vmatprep.subr.bf16.mxu0 0
    %78 = vmatpush2.bf16.msra.mxu0 0
    %79 = vmatprep.subr.bf16.mxu0 0
    %80 = vmatpush2.bf16.msra.mxu0 0
    %81 = vmatprep.subr.bf16.mxu0 0
    %82 = vmatpush2.bf16.msra.mxu0 0
    %83 = vmatprep.subr.bf16.mxu0 0
    %84 = vmatpush2.bf16.msra.mxu0 0
    %85 = vmatprep.subr.bf16.mxu0 0
    %86 = vmatpush2.bf16.msra.mxu0 0
    %87 = vmatprep.subr.bf16.mxu0 0
    %88 = vmatpush2.bf16.msra.mxu0 0
    %89 = vmatprep.subr.bf16.mxu0 0
    %90 = vmatpush2.bf16.msra.mxu0 0
    %91 = vmatprep.mubr.bf16.mxu0 0
    %92 = vmatmul.mubr.bf16.gmra.mxu0 %v57
    %v93 = vpop.f32.mrf.mxu0
    %v94 = vadd.f32 0.0, %v93
    %v95 = vpop.f32.mrf.mxu0
    %v96 = vpop.f32.mrf.mxu0
    %v97 = vpop.f32.mrf.mxu0
    %98 = vdwg.mxu0
    %v103 = vunpack.c.l.b16 %v34
    %v104 = vunpack.c.l.b16 %v35
    %v105 = vunpack.c.l.b16 %v36
    %v106 = vunpack.c.l.b16 %v37
    %v107 = vpack.c.b16 %v104, %v103
    %v108 = vpack.c.b16 %v106, %v105
    %v112 = vsel %vm55, %v33, 0
    %114 = vmatprep.subr.bf16.mxu0 0
    %115 = vmatpush1.bf16.msra.mxu0 0
    %116 = vmatprep.subr.bf16.mxu0 0
    %117 = vmatpush1.bf16.msra.mxu0 0
    %118 = vmatprep.subr.bf16.mxu0 0
    %119 = vmatpush1.bf16.msra.mxu0 0
    %120 = vmatprep.subr.bf16.mxu0 0
    %121 = vmatpush1.bf16.msra.mxu0 0
    %122 = vmatprep.subr.bf16.mxu0 0
    %123 = vmatpush1.bf16.msra.mxu0 0
    %124 = vmatprep.subr.bf16.mxu0 0
    %125 = vmatpush1.bf16.msra.mxu0 0
    %126 = vmatprep.subr.bf16.mxu0 0
    %127 = vmatpush1.bf16.msra.mxu0 %v108
    %128 = vmatprep.subr.bf16.mxu0 0
    %129 = vmatpush1.bf16.msra.mxu0 %v107
    %130 = vmatprep.subr.bf16.mxu0 0
    %131 = vmatpush2.bf16.msra.mxu0 0
    %132 = vmatprep.subr.bf16.mxu0 0
    %133 = vmatpush2.bf16.msra.mxu0 0
    %134 = vmatprep.subr.bf16.mxu0 0
    %135 = vmatpush2.bf16.msra.mxu0 0
    %136 = vmatprep.subr.bf16.mxu0 0
    %137 = vmatpush2.bf16.msra.mxu0 0
    %138 = vmatprep.subr.bf16.mxu0 0
    %139 = vmatpush2.bf16.msra.mxu0 0
    %140 = vmatprep.subr.bf16.mxu0 0
    %141 = vmatpush2.bf16.msra.mxu0 0
    %142 = vmatprep.subr.bf16.mxu0 0
    %143 = vmatpush2.bf16.msra.mxu0 0
    %144 = vmatprep.subr.bf16.mxu0 0
    %145 = vmatpush2.bf16.msra.mxu0 0
    %146 = vmatprep.mubr.bf16.mxu0 0
    %147 = vmatmul.mubr.bf16.gmra.mxu0 %v112
    %v148 = vpop.f32.mrf.mxu0
    %v149 = vadd.f32 %v94, %v148
    %v150 = vpop.f32.mrf.mxu0
    %v151 = vpop.f32.mrf.mxu0
    %v152 = vpop.f32.mrf.mxu0
    %153 = vdwg.mxu0
    %v154 = vld [vmem:[%s4] sm:$0x1]
    %v156 = vlaneseq
    %v157 = vshrl.u32 %v156, 7
    %v158 = vsub.s32 0, %v157
    %v159 = vrot.slane %v154, %v158
    %v161 = vadd.f32 %v149, %v159
    %vm162 = vcmask 9216
    %163 = vst.msk [vmem:[#allocation2] sm:$0x3] %vm162, %v161
    %v164 = vld [vmem:[%s5] sm:$0xf]
    %v165 = vld [vmem:[%s5 + $0x4] sm:$0xf]
    %v166 = vld [vmem:[%s5 + $0x8] sm:$0xf]
    %v167 = vld [vmem:[%s5 + $0xc] sm:$0xf]
    %v168 = vld [vmem:[%s6] sm:$0x1]
    %v170 = vlaneseq
    %v171 = vshrl.u32 %v170, 7
    %v172 = vsub.s32 0, %v171
    %v173 = vrot.slane %v168, %v172
    %v179 = vunpack.c.l.b16 %v164
    %v180 = vunpack.c.l.b16 %v165
    %v181 = vunpack.c.l.b16 %v166
    %v182 = vunpack.c.l.b16 %v167
    %v183 = vpack.c.b16 %v180, %v179
    %v184 = vpack.c.b16 %v182, %v181
    %187 = vmatprep.subr.bf16.mxu0 0
    %188 = vmatpush1.bf16.msra.mxu0 0
    %189 = vmatprep.subr.bf16.mxu0 0
    %190 = vmatpush1.bf16.msra.mxu0 0
    %191 = vmatprep.subr.bf16.mxu0 0
    %192 = vmatpush1.bf16.msra.mxu0 0
    %193 = vmatprep.subr.bf16.mxu0 0
    %194 = vmatpush1.bf16.msra.mxu0 0
    %195 = vmatprep.subr.bf16.mxu0 0
    %196 = vmatpush1.bf16.msra.mxu0 0
    %197 = vmatprep.subr.bf16.mxu0 0
    %198 = vmatpush1.bf16.msra.mxu0 0
    %199 = vmatprep.subr.bf16.mxu0 0
    %200 = vmatpush1.bf16.msra.mxu0 %v184
    %201 = vmatprep.subr.bf16.mxu0 0
    %202 = vmatpush1.bf16.msra.mxu0 %v183
    %203 = vmatprep.subr.bf16.mxu0 0
    %204 = vmatpush2.bf16.msra.mxu0 0
    %205 = vmatprep.subr.bf16.mxu0 0
    %206 = vmatpush2.bf16.msra.mxu0 0
    %207 = vmatprep.subr.bf16.mxu0 0
    %208 = vmatpush2.bf16.msra.mxu0 0
    %209 = vmatprep.subr.bf16.mxu0 0
    %210 = vmatpush2.bf16.msra.mxu0 0
    %211 = vmatprep.subr.bf16.mxu0 0
    %212 = vmatpush2.bf16.msra.mxu0 0
    %213 = vmatprep.subr.bf16.mxu0 0
    %214 = vmatpush2.bf16.msra.mxu0 0
    %215 = vmatprep.subr.bf16.mxu0 0
    %216 = vmatpush2.bf16.msra.mxu0 0
    %217 = vmatprep.subr.bf16.mxu0 0
    %218 = vmatpush2.bf16.msra.mxu0 0
    %219 = vmatprep.mubr.bf16.mxu0 0
    %220 = vmatmul.mubr.bf16.gmra.mxu0 %v112
    %v221 = vpop.f32.mrf.mxu0
    %v222 = vadd.f32 %v173, %v221
    %v223 = vpop.f32.mrf.mxu0
    %v224 = vpop.f32.mrf.mxu0
    %v225 = vpop.f32.mrf.mxu0
    %226 = vdwg.mxu0
    %227 = vst.msk [vmem:[#allocation4] sm:$0x3] %vm162, %v222
    // Predicated region
    $region30: #{bert_multitask_forward_mrpc.3} parent=1 // pred_check
      _
    $region31: #{bert_multitask_forward_mrpc.3} parent=1 // pred_check_branch
      %229 = sbr.rel (0) target = $region33
    $region32: #{bert_multitask_forward_mrpc.3} parent=1 // pred_region
      %s231 = ssub.s32 32, 32
      %232 = vsyncadd [#allocation3], %s231
      %s234 = sshll.u32 [#allocation2], 4
      %s235 = int_to_ptr.vmem [resolvable:$true] %s234
      %237 = dma.vmem_to_hbm [thread:$0]  %s235, 32, %s7, [#allocation3]
    $region33: #{bert_multitask_forward_mrpc.3} parent=1 // pred_fallthru
      _
    // Predicated region
    $region34: #{bert_multitask_forward_mrpc.3} parent=1 // pred_check
      _
    $region35: #{bert_multitask_forward_mrpc.3} parent=1 // pred_check_branch
      %239 = sbr.rel (0) target = $region37
    $region36: #{bert_multitask_forward_mrpc.3} parent=1 // pred_region
      %s241 = ssub.s32 32, 32
      %242 = vsyncadd [#allocation5], %s241
      %s244 = sshll.u32 [#allocation4], 4
      %s245 = int_to_ptr.vmem [resolvable:$true] %s244
      %247 = dma.vmem_to_hbm [thread:$0]  %s245, 32, %s8, [#allocation5]
    $region37: #{bert_multitask_forward_mrpc.3} parent=1 // pred_fallthru
      _
    // Predicated region
    $region38: #{bert_multitask_forward_mrpc.3} parent=1 // pred_check
      _
    $region39: #{bert_multitask_forward_mrpc.3} parent=1 // pred_check_branch
      %249 = sbr.rel (0) target = $region41
    $region40: #{bert_multitask_forward_mrpc.3} parent=1 // pred_region
      %250 = dma.done [#allocation3], 32
    $region41: #{bert_multitask_forward_mrpc.3} parent=1 // pred_fallthru
      _
    // Predicated region
    $region42: #{bert_multitask_forward_mrpc.3} parent=1 // pred_check
      _
    $region43: #{bert_multitask_forward_mrpc.3} parent=1 // pred_check_branch
      %252 = sbr.rel (0) target = $region45
    $region44: #{bert_multitask_forward_mrpc.3} parent=1 // pred_region
      %253 = dma.done [#allocation5], 32
    $region45: #{bert_multitask_forward_mrpc.3} parent=1 // pred_fallthru
      _
    %254 = vsyncpa [#allocation3], 1
    %255 = vsyncpa [#allocation5], 1

// kernel: bert_multitask_forward_mrpc.2
$region0: #{bert_multitask_forward_mrpc.2}
  #allocation0 [shape = 'u32[]', space=smem, size = 0x4, offset = 0x4, fixed_abs, tag = 'smem constant byte address 0x4 - core index']
  #allocation1 [shape = 'u32[144,128]{1,0:T(1,128)}', space=vmem, size = 0x12000, scoped, tag = 'internal scratch']
  %s0 = inlined_call_operand.vmem [shape: bf16[16,50], index: 0, kind: input, shape index: {}]
  %s1 = inlined_call_operand.vmem [shape: f32[16,16], index: 1, kind: input, shape index: {}]
  %s2 = inlined_call_operand.vmem [shape: f32[2,16,32], index: 2, kind: input, shape index: {}]
  %s3 = inlined_call_operand.vmem [shape: bf16[2,50,32], index: 3, kind: input, shape index: {}]
  %s4 = inlined_call_operand.vmem [shape: f32[2,1,32], index: 4, kind: input, shape index: {}]
  %s5 = inlined_call_operand.vmem [shape: f32[2,1,32], index: 5, kind: input, shape index: {}]
  %s6 = inlined_call_operand.vmem [shape: bf16[2,2,32,32], index: 6, kind: input, shape index: {}]
  %s7 = inlined_call_operand.vmem [shape: f32[2,2,1,32], index: 7, kind: input, shape index: {}]
  %s8 = inlined_call_operand.vmem [shape: bf16[2,2,32,32], index: 8, kind: input, shape index: {}]
  %s9 = inlined_call_operand.vmem [shape: f32[2,2,1,32], index: 9, kind: input, shape index: {}]
  %s10 = inlined_call_operand.vmem [shape: bf16[2,2,32,32], index: 10, kind: input, shape index: {}]
  %s11 = inlined_call_operand.vmem [shape: f32[2,2,1,32], index: 11, kind: input, shape index: {}]
  %s12 = inlined_call_operand.vmem [shape: bf16[2,2,32,32], index: 12, kind: input, shape index: {}]
  %s13 = inlined_call_operand.vmem [shape: f32[2,2,1,32], index: 13, kind: input, shape index: {}]
  %s14 = inlined_call_operand.vmem [shape: f32[2,2,1,32], index: 14, kind: input, shape index: {}]
  %s15 = inlined_call_operand.vmem [shape: f32[2,2,1,32], index: 15, kind: input, shape index: {}]
  %s16 = inlined_call_operand.vmem [shape: bf16[2,2,32,64], index: 16, kind: input, shape index: {}]
  %s17 = inlined_call_operand.vmem [shape: f32[2,2,1,64], index: 17, kind: input, shape index: {}]
  %s18 = inlined_call_operand.vmem [shape: bf16[2,2,64,32], index: 18, kind: input, shape index: {}]
  %s19 = inlined_call_operand.vmem [shape: f32[2,2,1,32], index: 19, kind: input, shape index: {}]
  %s20 = inlined_call_operand.vmem [shape: f32[2,2,1,32], index: 20, kind: input, shape index: {}]
  %s21 = inlined_call_operand.hbm [shape: f32[2,2,1,32], index: 21, kind: input, shape index: {}]
  %s22 = inlined_call_operand.vmem [shape: f32[2,2,32], index: 22, kind: output, shape index: {}]
  %s23 = sld [smem:[#allocation0]]
  $region125: #{bert_multitask_forward_mrpc.2} parent=0
    _
  %s25 = ssub.s32 1, %s23
  %s26 = scalar_select 0, %s25, %s23
  $region1: #{bert_multitask_forward_mrpc.2} parent=0
    #allocation2 [shape = 'u8[2048]{0}', space=vmem, size = 0x800, scoped, tag = 'input window, operand 21']
    #allocation3 [shape = 's32[2]{0}', space=sflag, size = 0x8, scoped, tag = 'scoped memory for bert_multitask_forward_mrpc.2']
    %27 = vsyncpa [#allocation3], 0
    %s28 = scalar_lea.sflag [#allocation3], 1
    %29 = vsyncpa %s28, 0
    loop: start=0, step=1, limit=4
    $region2: #{bert_multitask_forward_mrpc.2} parent=1 // loop_pre_header
      _
    $region3: #{bert_multitask_forward_mrpc.2} parent=1 // loop_header
      %s31 = sphi 0, %s35
      %p32 = scmp.ge.s32.totalorder %s31, 4
      %s39 = sphi 0, %s39
      %s41 = sphi 0, %s39
      %s42 = sphi 0, %s41
      %s56 = sphi 0, %s42
      %s60 = sphi 0, %s60
      %s62 = sphi 0, %s60
      %s63 = sphi 0, %s62
      %s77 = sphi 0, %s63
      %s83 = sphi 0, %s85
      %s86 = sphi 0, %s83
      %s87 = sphi 0, %s86
      %s103 = sphi 0, %s87
      %s109 = sphi 0, %s111
      %s112 = sphi 0, %s109
      %s113 = sphi 0, %s112
      %s129 = sphi 0, %s113
      %s135 = sphi 0, %s137
      %s138 = sphi 0, %s135
      %s139 = sphi 0, %s138
      %s155 = sphi 0, %s139
      %s161 = sphi 0, %s163
      %s164 = sphi 0, %s161
      %s165 = sphi 0, %s164
      %s181 = sphi 0, %s165
      %s187 = sphi 0, %s189
      %s190 = sphi 0, %s187
      %s191 = sphi 0, %s190
      %s207 = sphi 0, %s191
      %s213 = sphi 0, %s215
      %s216 = sphi 0, %s213
      %s217 = sphi 0, %s216
      %s233 = sphi 0, %s217
      %s239 = sphi 0, %s241
      %s242 = sphi 0, %s239
      %s243 = sphi 0, %s242
      %s259 = sphi 0, %s243
      %s265 = sphi 0, %s267
      %s268 = sphi 0, %s265
      %s269 = sphi 0, %s268
      %s285 = sphi 0, %s269
      %s291 = sphi 0, %s293
      %s294 = sphi 0, %s291
      %s295 = sphi 0, %s294
      %s311 = sphi 0, %s295
      %s317 = sphi 0, %s319
      %s320 = sphi 0, %s317
      %s321 = sphi 0, %s320
      %s337 = sphi 0, %s321
      %s343 = sphi 0, %s345
      %s346 = sphi 0, %s343
      %s347 = sphi 0, %s346
      %s363 = sphi 0, %s347
      %s369 = sphi 0, %s371
      %s372 = sphi 0, %s369
      %s373 = sphi 0, %s372
      %s389 = sphi 0, %s373
      %s395 = sphi 0, %s397
      %s398 = sphi 0, %s395
      %s399 = sphi 0, %s398
      %s415 = sphi 0, %s399
      %s421 = sphi 0, %s423
      %s424 = sphi 0, %s421
      %s425 = sphi 0, %s424
      %s441 = sphi 0, %s425
      %s447 = sphi 0, %s449
      %s450 = sphi 0, %s447
      %s451 = sphi 0, %s450
      %s467 = sphi 0, %s451
      %s473 = sphi 0, %s475
      %s476 = sphi 0, %s473
      %s477 = sphi 0, %s476
      %s493 = sphi 0, %s477
      %s499 = sphi 0, %s501
      %s502 = sphi 0, %s499
      %s503 = sphi 0, %s502
      %s519 = sphi 0, %s503
      %s525 = sphi 0, %s527
      %s528 = sphi 0, %s525
      %s529 = sphi 0, %s528
      %s545 = sphi 0, %s529
      %s551 = sphi 0, %s553
      %s554 = sphi 0, %s551
      %s555 = sphi 0, %s554
      %s571 = sphi 0, %s555
      %s577 = sphi 0, %s579
      %s580 = sphi 0, %s577
      %s581 = sphi 0, %s580
      %s597 = sphi 0, %s581
      %s603 = sphi 0, %s605
      %s606 = sphi 0, %s603
      %s607 = sphi 0, %s606
      %s623 = sphi 0, %s607
    $region4: #{bert_multitask_forward_mrpc.2} parent=1 // loop_header_branch
      %34 = sbr.rel (%p32) target = $region8
    $region5: #{bert_multitask_forward_mrpc.2} parent=1 // loop_body
      %s36 = ssub.s32 %s31, 1
      %s37 = ssub.s32 %s31, 2
      %s38 = sadd.s32 %s31, 1
      %s40 = sadd.s32 %s39, 1
      %p43 = scmp.eq.s32.totalorder %s31, 1
      %p44 = scmp.ne.s32.totalorder %s39, %s41
      %p45 = scmp.eq.s32.totalorder %s31, 0
      %p46 = por %p44, %p45
      %p47 = scmp.ne.s32.totalorder %s39, %s41
      %p48 = scmp.eq.s32.totalorder %s36, 1
      %p49 = por %p47, %p48
      %p50 = scmp.ne.s32.totalorder %s41, %s42
      %p51 = scmp.eq.s32.totalorder %s36, 0
      %p52 = por %p50, %p51
      %p53 = scmp.ne.s32.totalorder %s41, %s42
      %p54 = scmp.eq.s32.totalorder %s37, 1
      %p55 = por %p53, %p54
      %p57 = scmp.ne.s32.totalorder %s42, %s56
      %p58 = scmp.eq.s32.totalorder %s37, 0
      %p59 = por %p57, %p58
      %s61 = sadd.s32 %s60, 1
      %p64 = scmp.eq.s32.totalorder %s31, 1
      %p65 = scmp.ne.s32.totalorder %s60, %s62
      %p66 = scmp.eq.s32.totalorder %s31, 0
      %p67 = por %p65, %p66
      %p68 = scmp.ne.s32.totalorder %s60, %s62
      %p69 = scmp.eq.s32.totalorder %s36, 1
      %p70 = por %p68, %p69
      %p71 = scmp.ne.s32.totalorder %s62, %s63
      %p72 = scmp.eq.s32.totalorder %s36, 0
      %p73 = por %p71, %p72
      %p74 = scmp.ne.s32.totalorder %s62, %s63
      %p75 = scmp.eq.s32.totalorder %s37, 1
      %p76 = por %p74, %p75
      %p78 = scmp.ne.s32.totalorder %s63, %s77
      %p79 = scmp.eq.s32.totalorder %s37, 0
      %p80 = por %p78, %p79
      %s81 = ssub.s32 %s31, %s38
      %p82 = scmp.eq.s32.totalorder %s81, 0
      %s84 = sadd.s32 %s83, 1
      %s85 = scalar_select %p82, %s83, %s84
      %p88 = pneg %p82
      %p89 = scmp.eq.s32.totalorder %s31, 1
      %p90 = por %p88, %p89
      %p91 = scmp.ne.s32.totalorder %s83, %s86
      %p92 = scmp.eq.s32.totalorder %s31, 0
      %p93 = por %p91, %p92
      %p94 = scmp.ne.s32.totalorder %s83, %s86
      %p95 = scmp.eq.s32.totalorder %s36, 1
      %p96 = por %p94, %p95
      %p97 = scmp.ne.s32.totalorder %s86, %s87
      %p98 = scmp.eq.s32.totalorder %s36, 0
      %p99 = por %p97, %p98
      %p100 = scmp.ne.s32.totalorder %s86, %s87
      %p101 = scmp.eq.s32.totalorder %s37, 1
      %p102 = por %p100, %p101
      %p104 = scmp.ne.s32.totalorder %s87, %s103
      %p105 = scmp.eq.s32.totalorder %s37, 0
      %p106 = por %p104, %p105
      %s107 = ssub.s32 %s31, %s38
      %p108 = scmp.eq.s32.totalorder %s107, 0
      %s110 = sadd.s32 %s109, 1
      %s111 = scalar_select %p108, %s109, %s110
      %p114 = pneg %p108
      %p115 = scmp.eq.s32.totalorder %s31, 1
      %p116 = por %p114, %p115
      %p117 = scmp.ne.s32.totalorder %s109, %s112
      %p118 = scmp.eq.s32.totalorder %s31, 0
      %p119 = por %p117, %p118
      %p120 = scmp.ne.s32.totalorder %s109, %s112
      %p121 = scmp.eq.s32.totalorder %s36, 1
      %p122 = por %p120, %p121
      %p123 = scmp.ne.s32.totalorder %s112, %s113
      %p124 = scmp.eq.s32.totalorder %s36, 0
      %p125 = por %p123, %p124
      %p126 = scmp.ne.s32.totalorder %s112, %s113
      %p127 = scmp.eq.s32.totalorder %s37, 1
      %p128 = por %p126, %p127
      %p130 = scmp.ne.s32.totalorder %s113, %s129
      %p131 = scmp.eq.s32.totalorder %s37, 0
      %p132 = por %p130, %p131
      %s133 = ssub.s32 %s31, %s38
      %p134 = scmp.eq.s32.totalorder %s133, 0
      %s136 = sadd.s32 %s135, 1
      %s137 = scalar_select %p134, %s135, %s136
      %p140 = pneg %p134
      %p141 = scmp.eq.s32.totalorder %s31, 1
      %p142 = por %p140, %p141
      %p143 = scmp.ne.s32.totalorder %s135, %s138
      %p144 = scmp.eq.s32.totalorder %s31, 0
      %p145 = por %p143, %p144
      %p146 = scmp.ne.s32.totalorder %s135, %s138
      %p147 = scmp.eq.s32.totalorder %s36, 1
      %p148 = por %p146, %p147
      %p149 = scmp.ne.s32.totalorder %s138, %s139
      %p150 = scmp.eq.s32.totalorder %s36, 0
      %p151 = por %p149, %p150
      %p152 = scmp.ne.s32.totalorder %s138, %s139
      %p153 = scmp.eq.s32.totalorder %s37, 1
      %p154 = por %p152, %p153
      %p156 = scmp.ne.s32.totalorder %s139, %s155
      %p157 = scmp.eq.s32.totalorder %s37, 0
      %p158 = por %p156, %p157
      %s159 = ssub.s32 %s31, %s38
      %p160 = scmp.eq.s32.totalorder %s159, 0
      %s162 = sadd.s32 %s161, 1
      %s163 = scalar_select %p160, %s161, %s162
      %p166 = pneg %p160
      %p167 = scmp.eq.s32.totalorder %s31, 1
      %p168 = por %p166, %p167
      %p169 = scmp.ne.s32.totalorder %s161, %s164
      %p170 = scmp.eq.s32.totalorder %s31, 0
      %p171 = por %p169, %p170
      %p172 = scmp.ne.s32.totalorder %s161, %s164
      %p173 = scmp.eq.s32.totalorder %s36, 1
      %p174 = por %p172, %p173
      %p175 = scmp.ne.s32.totalorder %s164, %s165
      %p176 = scmp.eq.s32.totalorder %s36, 0
      %p177 = por %p175, %p176
      %p178 = scmp.ne.s32.totalorder %s164, %s165
      %p179 = scmp.eq.s32.totalorder %s37, 1
      %p180 = por %p178, %p179
      %p182 = scmp.ne.s32.totalorder %s165, %s181
      %p183 = scmp.eq.s32.totalorder %s37, 0
      %p184 = por %p182, %p183
      %s185 = ssub.s32 %s31, %s38
      %p186 = scmp.eq.s32.totalorder %s185, 0
      %s188 = sadd.s32 %s187, 1
      %s189 = scalar_select %p186, %s187, %s188
      %p192 = pneg %p186
      %p193 = scmp.eq.s32.totalorder %s31, 1
      %p194 = por %p192, %p193
      %p195 = scmp.ne.s32.totalorder %s187, %s190
      %p196 = scmp.eq.s32.totalorder %s31, 0
      %p197 = por %p195, %p196
      %p198 = scmp.ne.s32.totalorder %s187, %s190
      %p199 = scmp.eq.s32.totalorder %s36, 1
      %p200 = por %p198, %p199
      %p201 = scmp.ne.s32.totalorder %s190, %s191
      %p202 = scmp.eq.s32.totalorder %s36, 0
      %p203 = por %p201, %p202
      %p204 = scmp.ne.s32.totalorder %s190, %s191
      %p205 = scmp.eq.s32.totalorder %s37, 1
      %p206 = por %p204, %p205
      %p208 = scmp.ne.s32.totalorder %s191, %s207
      %p209 = scmp.eq.s32.totalorder %s37, 0
      %p210 = por %p208, %p209
      %s211 = ssub.s32 %s31, %s38
      %p212 = scmp.eq.s32.totalorder %s211, 0
      %s214 = sadd.s32 %s213, 1
      %s215 = scalar_select %p212, %s213, %s214
      %p218 = pneg %p212
      %p219 = scmp.eq.s32.totalorder %s31, 1
      %p220 = por %p218, %p219
      %p221 = scmp.ne.s32.totalorder %s213, %s216
      %p222 = scmp.eq.s32.totalorder %s31, 0
      %p223 = por %p221, %p222
      %p224 = scmp.ne.s32.totalorder %s213, %s216
      %p225 = scmp.eq.s32.totalorder %s36, 1
      %p226 = por %p224, %p225
      %p227 = scmp.ne.s32.totalorder %s216, %s217
      %p228 = scmp.eq.s32.totalorder %s36, 0
      %p229 = por %p227, %p228
      %p230 = scmp.ne.s32.totalorder %s216, %s217
      %p231 = scmp.eq.s32.totalorder %s37, 1
      %p232 = por %p230, %p231
      %p234 = scmp.ne.s32.totalorder %s217, %s233
      %p235 = scmp.eq.s32.totalorder %s37, 0
      %p236 = por %p234, %p235
      %s237 = ssub.s32 %s31, %s38
      %p238 = scmp.eq.s32.totalorder %s237, 0
      %s240 = sadd.s32 %s239, 1
      %s241 = scalar_select %p238, %s239, %s240
      %p244 = pneg %p238
      %p245 = scmp.eq.s32.totalorder %s31, 1
      %p246 = por %p244, %p245
      %p247 = scmp.ne.s32.totalorder %s239, %s242
      %p248 = scmp.eq.s32.totalorder %s31, 0
      %p249 = por %p247, %p248
      %p250 = scmp.ne.s32.totalorder %s239, %s242
      %p251 = scmp.eq.s32.totalorder %s36, 1
      %p252 = por %p250, %p251
      %p253 = scmp.ne.s32.totalorder %s242, %s243
      %p254 = scmp.eq.s32.totalorder %s36, 0
      %p255 = por %p253, %p254
      %p256 = scmp.ne.s32.totalorder %s242, %s243
      %p257 = scmp.eq.s32.totalorder %s37, 1
      %p258 = por %p256, %p257
      %p260 = scmp.ne.s32.totalorder %s243, %s259
      %p261 = scmp.eq.s32.totalorder %s37, 0
      %p262 = por %p260, %p261
      %s263 = ssub.s32 %s31, %s38
      %p264 = scmp.eq.s32.totalorder %s263, 0
      %s266 = sadd.s32 %s265, 1
      %s267 = scalar_select %p264, %s265, %s266
      %p270 = pneg %p264
      %p271 = scmp.eq.s32.totalorder %s31, 1
      %p272 = por %p270, %p271
      %p273 = scmp.ne.s32.totalorder %s265, %s268
      %p274 = scmp.eq.s32.totalorder %s31, 0
      %p275 = por %p273, %p274
      %p276 = scmp.ne.s32.totalorder %s265, %s268
      %p277 = scmp.eq.s32.totalorder %s36, 1
      %p278 = por %p276, %p277
      %p279 = scmp.ne.s32.totalorder %s268, %s269
      %p280 = scmp.eq.s32.totalorder %s36, 0
      %p281 = por %p279, %p280
      %p282 = scmp.ne.s32.totalorder %s268, %s269
      %p283 = scmp.eq.s32.totalorder %s37, 1
      %p284 = por %p282, %p283
      %p286 = scmp.ne.s32.totalorder %s269, %s285
      %p287 = scmp.eq.s32.totalorder %s37, 0
      %p288 = por %p286, %p287
      %s289 = ssub.s32 %s31, %s38
      %p290 = scmp.eq.s32.totalorder %s289, 0
      %s292 = sadd.s32 %s291, 1
      %s293 = scalar_select %p290, %s291, %s292
      %p296 = pneg %p290
      %p297 = scmp.eq.s32.totalorder %s31, 1
      %p298 = por %p296, %p297
      %p299 = scmp.ne.s32.totalorder %s291, %s294
      %p300 = scmp.eq.s32.totalorder %s31, 0
      %p301 = por %p299, %p300
      %p302 = scmp.ne.s32.totalorder %s291, %s294
      %p303 = scmp.eq.s32.totalorder %s36, 1
      %p304 = por %p302, %p303
      %p305 = scmp.ne.s32.totalorder %s294, %s295
      %p306 = scmp.eq.s32.totalorder %s36, 0
      %p307 = por %p305, %p306
      %p308 = scmp.ne.s32.totalorder %s294, %s295
      %p309 = scmp.eq.s32.totalorder %s37, 1
      %p310 = por %p308, %p309
      %p312 = scmp.ne.s32.totalorder %s295, %s311
      %p313 = scmp.eq.s32.totalorder %s37, 0
      %p314 = por %p312, %p313
      %s315 = ssub.s32 %s31, %s38
      %p316 = scmp.eq.s32.totalorder %s315, 0
      %s318 = sadd.s32 %s317, 1
      %s319 = scalar_select %p316, %s317, %s318
      %p322 = pneg %p316
      %p323 = scmp.eq.s32.totalorder %s31, 1
      %p324 = por %p322, %p323
      %p325 = scmp.ne.s32.totalorder %s317, %s320
      %p326 = scmp.eq.s32.totalorder %s31, 0
      %p327 = por %p325, %p326
      %p328 = scmp.ne.s32.totalorder %s317, %s320
      %p329 = scmp.eq.s32.totalorder %s36, 1
      %p330 = por %p328, %p329
      %p331 = scmp.ne.s32.totalorder %s320, %s321
      %p332 = scmp.eq.s32.totalorder %s36, 0
      %p333 = por %p331, %p332
      %p334 = scmp.ne.s32.totalorder %s320, %s321
      %p335 = scmp.eq.s32.totalorder %s37, 1
      %p336 = por %p334, %p335
      %p338 = scmp.ne.s32.totalorder %s321, %s337
      %p339 = scmp.eq.s32.totalorder %s37, 0
      %p340 = por %p338, %p339
      %s341 = ssub.s32 %s31, %s38
      %p342 = scmp.eq.s32.totalorder %s341, 0
      %s344 = sadd.s32 %s343, 1
      %s345 = scalar_select %p342, %s343, %s344
      %p348 = pneg %p342
      %p349 = scmp.eq.s32.totalorder %s31, 1
      %p350 = por %p348, %p349
      %p351 = scmp.ne.s32.totalorder %s343, %s346
      %p352 = scmp.eq.s32.totalorder %s31, 0
      %p353 = por %p351, %p352
      %p354 = scmp.ne.s32.totalorder %s343, %s346
      %p355 = scmp.eq.s32.totalorder %s36, 1
      %p356 = por %p354, %p355
      %p357 = scmp.ne.s32.totalorder %s346, %s347
      %p358 = scmp.eq.s32.totalorder %s36, 0
      %p359 = por %p357, %p358
      %p360 = scmp.ne.s32.totalorder %s346, %s347
      %p361 = scmp.eq.s32.totalorder %s37, 1
      %p362 = por %p360, %p361
      %p364 = scmp.ne.s32.totalorder %s347, %s363
      %p365 = scmp.eq.s32.totalorder %s37, 0
      %p366 = por %p364, %p365
      %s367 = ssub.s32 %s31, %s38
      %p368 = scmp.eq.s32.totalorder %s367, 0
      %s370 = sadd.s32 %s369, 1
      %s371 = scalar_select %p368, %s369, %s370
      %p374 = pneg %p368
      %p375 = scmp.eq.s32.totalorder %s31, 1
      %p376 = por %p374, %p375
      %p377 = scmp.ne.s32.totalorder %s369, %s372
      %p378 = scmp.eq.s32.totalorder %s31, 0
      %p379 = por %p377, %p378
      %p380 = scmp.ne.s32.totalorder %s369, %s372
      %p381 = scmp.eq.s32.totalorder %s36, 1
      %p382 = por %p380, %p381
      %p383 = scmp.ne.s32.totalorder %s372, %s373
      %p384 = scmp.eq.s32.totalorder %s36, 0
      %p385 = por %p383, %p384
      %p386 = scmp.ne.s32.totalorder %s372, %s373
      %p387 = scmp.eq.s32.totalorder %s37, 1
      %p388 = por %p386, %p387
      %p390 = scmp.ne.s32.totalorder %s373, %s389
      %p391 = scmp.eq.s32.totalorder %s37, 0
      %p392 = por %p390, %p391
      %s393 = ssub.s32 %s31, %s38
      %p394 = scmp.eq.s32.totalorder %s393, 0
      %s396 = sadd.s32 %s395, 1
      %s397 = scalar_select %p394, %s395, %s396
      %p400 = pneg %p394
      %p401 = scmp.eq.s32.totalorder %s31, 1
      %p402 = por %p400, %p401
      %p403 = scmp.ne.s32.totalorder %s395, %s398
      %p404 = scmp.eq.s32.totalorder %s31, 0
      %p405 = por %p403, %p404
      %p406 = scmp.ne.s32.totalorder %s395, %s398
      %p407 = scmp.eq.s32.totalorder %s36, 1
      %p408 = por %p406, %p407
      %p409 = scmp.ne.s32.totalorder %s398, %s399
      %p410 = scmp.eq.s32.totalorder %s36, 0
      %p411 = por %p409, %p410
      %p412 = scmp.ne.s32.totalorder %s398, %s399
      %p413 = scmp.eq.s32.totalorder %s37, 1
      %p414 = por %p412, %p413
      %p416 = scmp.ne.s32.totalorder %s399, %s415
      %p417 = scmp.eq.s32.totalorder %s37, 0
      %p418 = por %p416, %p417
      %s419 = ssub.s32 %s31, %s38
      %p420 = scmp.eq.s32.totalorder %s419, 0
      %s422 = sadd.s32 %s421, 1
      %s423 = scalar_select %p420, %s421, %s422
      %p426 = pneg %p420
      %p427 = scmp.eq.s32.totalorder %s31, 1
      %p428 = por %p426, %p427
      %p429 = scmp.ne.s32.totalorder %s421, %s424
      %p430 = scmp.eq.s32.totalorder %s31, 0
      %p431 = por %p429, %p430
      %p432 = scmp.ne.s32.totalorder %s421, %s424
      %p433 = scmp.eq.s32.totalorder %s36, 1
      %p434 = por %p432, %p433
      %p435 = scmp.ne.s32.totalorder %s424, %s425
      %p436 = scmp.eq.s32.totalorder %s36, 0
      %p437 = por %p435, %p436
      %p438 = scmp.ne.s32.totalorder %s424, %s425
      %p439 = scmp.eq.s32.totalorder %s37, 1
      %p440 = por %p438, %p439
      %p442 = scmp.ne.s32.totalorder %s425, %s441
      %p443 = scmp.eq.s32.totalorder %s37, 0
      %p444 = por %p442, %p443
      %s445 = ssub.s32 %s31, %s38
      %p446 = scmp.eq.s32.totalorder %s445, 0
      %s448 = sadd.s32 %s447, 1
      %s449 = scalar_select %p446, %s447, %s448
      %p452 = pneg %p446
      %p453 = scmp.eq.s32.totalorder %s31, 1
      %p454 = por %p452, %p453
      %p455 = scmp.ne.s32.totalorder %s447, %s450
      %p456 = scmp.eq.s32.totalorder %s31, 0
      %p457 = por %p455, %p456
      %p458 = scmp.ne.s32.totalorder %s447, %s450
      %p459 = scmp.eq.s32.totalorder %s36, 1
      %p460 = por %p458, %p459
      %p461 = scmp.ne.s32.totalorder %s450, %s451
      %p462 = scmp.eq.s32.totalorder %s36, 0
      %p463 = por %p461, %p462
      %p464 = scmp.ne.s32.totalorder %s450, %s451
      %p465 = scmp.eq.s32.totalorder %s37, 1
      %p466 = por %p464, %p465
      %p468 = scmp.ne.s32.totalorder %s451, %s467
      %p469 = scmp.eq.s32.totalorder %s37, 0
      %p470 = por %p468, %p469
      %s471 = ssub.s32 %s31, %s38
      %p472 = scmp.eq.s32.totalorder %s471, 0
      %s474 = sadd.s32 %s473, 1
      %s475 = scalar_select %p472, %s473, %s474
      %p478 = pneg %p472
      %p479 = scmp.eq.s32.totalorder %s31, 1
      %p480 = por %p478, %p479
      %p481 = scmp.ne.s32.totalorder %s473, %s476
      %p482 = scmp.eq.s32.totalorder %s31, 0
      %p483 = por %p481, %p482
      %p484 = scmp.ne.s32.totalorder %s473, %s476
      %p485 = scmp.eq.s32.totalorder %s36, 1
      %p486 = por %p484, %p485
      %p487 = scmp.ne.s32.totalorder %s476, %s477
      %p488 = scmp.eq.s32.totalorder %s36, 0
      %p489 = por %p487, %p488
      %p490 = scmp.ne.s32.totalorder %s476, %s477
      %p491 = scmp.eq.s32.totalorder %s37, 1
      %p492 = por %p490, %p491
      %p494 = scmp.ne.s32.totalorder %s477, %s493
      %p495 = scmp.eq.s32.totalorder %s37, 0
      %p496 = por %p494, %p495
      %s497 = ssub.s32 %s31, %s38
      %p498 = scmp.eq.s32.totalorder %s497, 0
      %s500 = sadd.s32 %s499, 1
      %s501 = scalar_select %p498, %s499, %s500
      %p504 = pneg %p498
      %p505 = scmp.eq.s32.totalorder %s31, 1
      %p506 = por %p504, %p505
      %p507 = scmp.ne.s32.totalorder %s499, %s502
      %p508 = scmp.eq.s32.totalorder %s31, 0
      %p509 = por %p507, %p508
      %p510 = scmp.ne.s32.totalorder %s499, %s502
      %p511 = scmp.eq.s32.totalorder %s36, 1
      %p512 = por %p510, %p511
      %p513 = scmp.ne.s32.totalorder %s502, %s503
      %p514 = scmp.eq.s32.totalorder %s36, 0
      %p515 = por %p513, %p514
      %p516 = scmp.ne.s32.totalorder %s502, %s503
      %p517 = scmp.eq.s32.totalorder %s37, 1
      %p518 = por %p516, %p517
      %p520 = scmp.ne.s32.totalorder %s503, %s519
      %p521 = scmp.eq.s32.totalorder %s37, 0
      %p522 = por %p520, %p521
      %s523 = ssub.s32 %s31, %s38
      %p524 = scmp.eq.s32.totalorder %s523, 0
      %s526 = sadd.s32 %s525, 1
      %s527 = scalar_select %p524, %s525, %s526
      %p530 = pneg %p524
      %p531 = scmp.eq.s32.totalorder %s31, 1
      %p532 = por %p530, %p531
      %p533 = scmp.ne.s32.totalorder %s525, %s528
      %p534 = scmp.eq.s32.totalorder %s31, 0
      %p535 = por %p533, %p534
      %p536 = scmp.ne.s32.totalorder %s525, %s528
      %p537 = scmp.eq.s32.totalorder %s36, 1
      %p538 = por %p536, %p537
      %p539 = scmp.ne.s32.totalorder %s528, %s529
      %p540 = scmp.eq.s32.totalorder %s36, 0
      %p541 = por %p539, %p540
      %p542 = scmp.ne.s32.totalorder %s528, %s529
      %p543 = scmp.eq.s32.totalorder %s37, 1
      %p544 = por %p542, %p543
      %p546 = scmp.ne.s32.totalorder %s529, %s545
      %p547 = scmp.eq.s32.totalorder %s37, 0
      %p548 = por %p546, %p547
      %s549 = ssub.s32 %s31, %s38
      %p550 = scmp.eq.s32.totalorder %s549, 0
      %s552 = sadd.s32 %s551, 1
      %s553 = scalar_select %p550, %s551, %s552
      %p556 = pneg %p550
      %p557 = scmp.eq.s32.totalorder %s31, 1
      %p558 = por %p556, %p557
      %p559 = scmp.ne.s32.totalorder %s551, %s554
      %p560 = scmp.eq.s32.totalorder %s31, 0
      %p561 = por %p559, %p560
      %p562 = scmp.ne.s32.totalorder %s551, %s554
      %p563 = scmp.eq.s32.totalorder %s36, 1
      %p564 = por %p562, %p563
      %p565 = scmp.ne.s32.totalorder %s554, %s555
      %p566 = scmp.eq.s32.totalorder %s36, 0
      %p567 = por %p565, %p566
      %p568 = scmp.ne.s32.totalorder %s554, %s555
      %p569 = scmp.eq.s32.totalorder %s37, 1
      %p570 = por %p568, %p569
      %p572 = scmp.ne.s32.totalorder %s555, %s571
      %p573 = scmp.eq.s32.totalorder %s37, 0
      %p574 = por %p572, %p573
      %s575 = ssub.s32 %s31, %s38
      %p576 = scmp.eq.s32.totalorder %s575, 0
      %s578 = sadd.s32 %s577, 1
      %s579 = scalar_select %p576, %s577, %s578
      %p582 = pneg %p576
      %p583 = scmp.eq.s32.totalorder %s31, 1
      %p584 = por %p582, %p583
      %p585 = scmp.ne.s32.totalorder %s577, %s580
      %p586 = scmp.eq.s32.totalorder %s31, 0
      %p587 = por %p585, %p586
      %p588 = scmp.ne.s32.totalorder %s577, %s580
      %p589 = scmp.eq.s32.totalorder %s36, 1
      %p590 = por %p588, %p589
      %p591 = scmp.ne.s32.totalorder %s580, %s581
      %p592 = scmp.eq.s32.totalorder %s36, 0
      %p593 = por %p591, %p592
      %p594 = scmp.ne.s32.totalorder %s580, %s581
      %p595 = scmp.eq.s32.totalorder %s37, 1
      %p596 = por %p594, %p595
      %p598 = scmp.ne.s32.totalorder %s581, %s597
      %p599 = scmp.eq.s32.totalorder %s37, 0
      %p600 = por %p598, %p599
      %s601 = ssub.s32 %s31, %s38
      %p602 = scmp.eq.s32.totalorder %s601, 0
      %s604 = sadd.s32 %s603, 1
      %s605 = scalar_select %p602, %s603, %s604
      %p608 = pneg %p602
      %p609 = scmp.eq.s32.totalorder %s31, 1
      %p610 = por %p608, %p609
      %p611 = scmp.ne.s32.totalorder %s603, %s606
      %p612 = scmp.eq.s32.totalorder %s31, 0
      %p613 = por %p611, %p612
      %p614 = scmp.ne.s32.totalorder %s603, %s606
      %p615 = scmp.eq.s32.totalorder %s36, 1
      %p616 = por %p614, %p615
      %p617 = scmp.ne.s32.totalorder %s606, %s607
      %p618 = scmp.eq.s32.totalorder %s36, 0
      %p619 = por %p617, %p618
      %p620 = scmp.ne.s32.totalorder %s606, %s607
      %p621 = scmp.eq.s32.totalorder %s37, 1
      %p622 = por %p620, %p621
      %p624 = scmp.ne.s32.totalorder %s607, %s623
      %p625 = scmp.eq.s32.totalorder %s37, 0
      %p626 = por %p624, %p625
      %p627 = scmp.le.s32.totalorder 1, %s31
      %p628 = scmp.lt.s32.totalorder %s31, 3
      %p629 = pnand %p627, %p628
      %p630 = pneg %p629
      // Predicated region
      $region9: #{bert_multitask_forward_mrpc.2} parent=5 // pred_check
        _
      $region10: #{bert_multitask_forward_mrpc.2} parent=5 // pred_check_branch
        %632 = sbr.rel (%p629) target = $region12
      $region11: #{bert_multitask_forward_mrpc.2} parent=5 // pred_region
        %s633 = ssub.s32 %s31, 1
        // Predicated region
        $region13: #{bert_multitask_forward_mrpc.2} parent=11 // pred_check
          %p634 = pneg %p52
        $region14: #{bert_multitask_forward_mrpc.2} parent=11 // pred_check_branch
          %636 = sbr.rel (%p634) target = $region16
        $region15: #{bert_multitask_forward_mrpc.2} parent=11 // pred_region
          _
        $region16: #{bert_multitask_forward_mrpc.2} parent=11 // pred_fallthru
          _
        // Predicated region
        $region17: #{bert_multitask_forward_mrpc.2} parent=11 // pred_check
          %p637 = pneg %p73
        $region18: #{bert_multitask_forward_mrpc.2} parent=11 // pred_check_branch
          %639 = sbr.rel (%p637) target = $region20
        $region19: #{bert_multitask_forward_mrpc.2} parent=11 // pred_region
          _
        $region20: #{bert_multitask_forward_mrpc.2} parent=11 // pred_fallthru
          _
      $region12: #{bert_multitask_forward_mrpc.2} parent=5 // pred_fallthru
        _
      %p640 = scmp.lt.s32.totalorder %s31, 2
      // Predicated region
      $region21: #{bert_multitask_forward_mrpc.2} parent=5 // pred_check
        %p641 = pneg %p640
      $region22: #{bert_multitask_forward_mrpc.2} parent=5 // pred_check_branch
        %643 = sbr.rel (%p641) target = $region24
      $region23: #{bert_multitask_forward_mrpc.2} parent=5 // pred_region
        // Predicated region
        $region25: #{bert_multitask_forward_mrpc.2} parent=23 // pred_check
          %p644 = pneg %p93
        $region26: #{bert_multitask_forward_mrpc.2} parent=23 // pred_check_branch
          %646 = sbr.rel (%p644) target = $region28
        $region27: #{bert_multitask_forward_mrpc.2} parent=23 // pred_region
          %p647 = scmp.lt.s32.totalorder %s31, 1
          %s648 = scalar_select %p647, %s31, 1
          %s649 = smul.addr %s648, 2
          %s650 = smul.addr %s649, 8
          %s651 = scalar_lea.vmem %s2, %s650
        $region28: #{bert_multitask_forward_mrpc.2} parent=23 // pred_fallthru
          _
        // Predicated region
        $region29: #{bert_multitask_forward_mrpc.2} parent=23 // pred_check
          %p652 = pneg %p119
        $region30: #{bert_multitask_forward_mrpc.2} parent=23 // pred_check_branch
          %654 = sbr.rel (%p652) target = $region32
        $region31: #{bert_multitask_forward_mrpc.2} parent=23 // pred_region
          %p655 = scmp.lt.s32.totalorder %s31, 1
          %s656 = scalar_select %p655, %s31, 1
          %s657 = smul.addr %s656, 7
          %s658 = smul.addr %s657, 4
          %s659 = scalar_lea.vmem %s3, %s658
        $region32: #{bert_multitask_forward_mrpc.2} parent=23 // pred_fallthru
          _
        // Predicated region
        $region33: #{bert_multitask_forward_mrpc.2} parent=23 // pred_check
          %p660 = pneg %p145
        $region34: #{bert_multitask_forward_mrpc.2} parent=23 // pred_check_branch
          %662 = sbr.rel (%p660) target = $region36
        $region35: #{bert_multitask_forward_mrpc.2} parent=23 // pred_region
          %p663 = scmp.lt.s32.totalorder %s31, 1
          %s664 = scalar_select %p663, %s31, 1
          %s665 = scalar_lea.vmem %s4, %s664
        $region36: #{bert_multitask_forward_mrpc.2} parent=23 // pred_fallthru
          _
        // Predicated region
        $region37: #{bert_multitask_forward_mrpc.2} parent=23 // pred_check
          %p666 = pneg %p171
        $region38: #{bert_multitask_forward_mrpc.2} parent=23 // pred_check_branch
          %668 = sbr.rel (%p666) target = $region40
        $region39: #{bert_multitask_forward_mrpc.2} parent=23 // pred_region
          %p669 = scmp.lt.s32.totalorder %s31, 1
          %s670 = scalar_select %p669, %s31, 1
          %s671 = scalar_lea.vmem %s5, %s670
        $region40: #{bert_multitask_forward_mrpc.2} parent=23 // pred_fallthru
          _
        // Predicated region
        $region41: #{bert_multitask_forward_mrpc.2} parent=23 // pred_check
          %p672 = pneg %p197
        $region42: #{bert_multitask_forward_mrpc.2} parent=23 // pred_check_branch
          %674 = sbr.rel (%p672) target = $region44
        $region43: #{bert_multitask_forward_mrpc.2} parent=23 // pred_region
          %p675 = scmp.lt.s32.totalorder %s31, 1
          %s676 = scalar_select %p675, %s31, 1
          %s677 = smul.addr %s676, 8
          %s678 = smul.addr %s677, 4
          %s679 = scalar_lea.vmem %s6, %s678
        $region44: #{bert_multitask_forward_mrpc.2} parent=23 // pred_fallthru
          _
        // Predicated region
        $region45: #{bert_multitask_forward_mrpc.2} parent=23 // pred_check
          %p680 = pneg %p223
        $region46: #{bert_multitask_forward_mrpc.2} parent=23 // pred_check_branch
          %682 = sbr.rel (%p680) target = $region48
        $region47: #{bert_multitask_forward_mrpc.2} parent=23 // pred_region
          %p683 = scmp.lt.s32.totalorder %s31, 1
          %s684 = scalar_select %p683, %s31, 1
          %s685 = smul.addr %s684, 2
          %s686 = scalar_lea.vmem %s7, %s685
        $region48: #{bert_multitask_forward_mrpc.2} parent=23 // pred_fallthru
          _
        // Predicated region
        $region49: #{bert_multitask_forward_mrpc.2} parent=23 // pred_check
          %p687 = pneg %p249
        $region50: #{bert_multitask_forward_mrpc.2} parent=23 // pred_check_branch
          %689 = sbr.rel (%p687) target = $region52
        $region51: #{bert_multitask_forward_mrpc.2} parent=23 // pred_region
          %p690 = scmp.lt.s32.totalorder %s31, 1
          %s691 = scalar_select %p690, %s31, 1
          %s692 = smul.addr %s691, 8
          %s693 = smul.addr %s692, 4
          %s694 = scalar_lea.vmem %s8, %s693
        $region52: #{bert_multitask_forward_mrpc.2} parent=23 // pred_fallthru
          _
        // Predicated region
        $region53: #{bert_multitask_forward_mrpc.2} parent=23 // pred_check
          %p695 = pneg %p275
        $region54: #{bert_multitask_forward_mrpc.2} parent=23 // pred_check_branch
          %697 = sbr.rel (%p695) target = $region56
        $region55: #{bert_multitask_forward_mrpc.2} parent=23 // pred_region
          %p698 = scmp.lt.s32.totalorder %s31, 1
          %s699 = scalar_select %p698, %s31, 1
          %s700 = smul.addr %s699, 2
          %s701 = scalar_lea.vmem %s9, %s700
        $region56: #{bert_multitask_forward_mrpc.2} parent=23 // pred_fallthru
          _
        // Predicated region
        $region57: #{bert_multitask_forward_mrpc.2} parent=23 // pred_check
          %p702 = pneg %p301
        $region58: #{bert_multitask_forward_mrpc.2} parent=23 // pred_check_branch
          %704 = sbr.rel (%p702) target = $region60
        $region59: #{bert_multitask_forward_mrpc.2} parent=23 // pred_region
          %p705 = scmp.lt.s32.totalorder %s31, 1
          %s706 = scalar_select %p705, %s31, 1
          %s707 = smul.addr %s706, 8
          %s708 = smul.addr %s707, 4
          %s709 = scalar_lea.vmem %s10, %s708
        $region60: #{bert_multitask_forward_mrpc.2} parent=23 // pred_fallthru
          _
        // Predicated region
        $region61: #{bert_multitask_forward_mrpc.2} parent=23 // pred_check
          %p710 = pneg %p327
        $region62: #{bert_multitask_forward_mrpc.2} parent=23 // pred_check_branch
          %712 = sbr.rel (%p710) target = $region64
        $region63: #{bert_multitask_forward_mrpc.2} parent=23 // pred_region
          %p713 = scmp.lt.s32.totalorder %s31, 1
          %s714 = scalar_select %p713, %s31, 1
          %s715 = smul.addr %s714, 2
          %s716 = scalar_lea.vmem %s11, %s715
        $region64: #{bert_multitask_forward_mrpc.2} parent=23 // pred_fallthru
          _
        // Predicated region
        $region65: #{bert_multitask_forward_mrpc.2} parent=23 // pred_check
          %p717 = pneg %p353
        $region66: #{bert_multitask_forward_mrpc.2} parent=23 // pred_check_branch
          %719 = sbr.rel (%p717) target = $region68
        $region67: #{bert_multitask_forward_mrpc.2} parent=23 // pred_region
          %p720 = scmp.lt.s32.totalorder %s31, 1
          %s721 = scalar_select %p720, %s31, 1
          %s722 = smul.addr %s721, 8
          %s723 = smul.addr %s722, 4
          %s724 = scalar_lea.vmem %s12, %s723
        $region68: #{bert_multitask_forward_mrpc.2} parent=23 // pred_fallthru
          _
        // Predicated region
        $region69: #{bert_multitask_forward_mrpc.2} parent=23 // pred_check
          %p725 = pneg %p379
        $region70: #{bert_multitask_forward_mrpc.2} parent=23 // pred_check_branch
          %727 = sbr.rel (%p725) target = $region72
        $region71: #{bert_multitask_forward_mrpc.2} parent=23 // pred_region
          %p728 = scmp.lt.s32.totalorder %s31, 1
          %s729 = scalar_select %p728, %s31, 1
          %s730 = smul.addr %s729, 2
          %s731 = scalar_lea.vmem %s13, %s730
        $region72: #{bert_multitask_forward_mrpc.2} parent=23 // pred_fallthru
          _
        // Predicated region
        $region73: #{bert_multitask_forward_mrpc.2} parent=23 // pred_check
          %p732 = pneg %p405
        $region74: #{bert_multitask_forward_mrpc.2} parent=23 // pred_check_branch
          %734 = sbr.rel (%p732) target = $region76
        $region75: #{bert_multitask_forward_mrpc.2} parent=23 // pred_region
          %p735 = scmp.lt.s32.totalorder %s31, 1
          %s736 = scalar_select %p735, %s31, 1
          %s737 = smul.addr %s736, 2
          %s738 = scalar_lea.vmem %s14, %s737
        $region76: #{bert_multitask_forward_mrpc.2} parent=23 // pred_fallthru
          _
        // Predicated region
        $region77: #{bert_multitask_forward_mrpc.2} parent=23 // pred_check
          %p739 = pneg %p431
        $region78: #{bert_multitask_forward_mrpc.2} parent=23 // pred_check_branch
          %741 = sbr.rel (%p739) target = $region80
        $region79: #{bert_multitask_forward_mrpc.2} parent=23 // pred_region
          %p742 = scmp.lt.s32.totalorder %s31, 1
          %s743 = scalar_select %p742, %s31, 1
          %s744 = smul.addr %s743, 2
          %s745 = scalar_lea.vmem %s15, %s744
        $region80: #{bert_multitask_forward_mrpc.2} parent=23 // pred_fallthru
          _
        // Predicated region
        $region81: #{bert_multitask_forward_mrpc.2} parent=23 // pred_check
          %p746 = pneg %p457
        $region82: #{bert_multitask_forward_mrpc.2} parent=23 // pred_check_branch
          %748 = sbr.rel (%p746) target = $region84
        $region83: #{bert_multitask_forward_mrpc.2} parent=23 // pred_region
          %p749 = scmp.lt.s32.totalorder %s31, 1
          %s750 = scalar_select %p749, %s31, 1
          %s751 = smul.addr %s750, 8
          %s752 = smul.addr %s751, 4
          %s753 = scalar_lea.vmem %s16, %s752
        $region84: #{bert_multitask_forward_mrpc.2} parent=23 // pred_fallthru
          _
        // Predicated region
        $region85: #{bert_multitask_forward_mrpc.2} parent=23 // pred_check
          %p754 = pneg %p483
        $region86: #{bert_multitask_forward_mrpc.2} parent=23 // pred_check_branch
          %756 = sbr.rel (%p754) target = $region88
        $region87: #{bert_multitask_forward_mrpc.2} parent=23 // pred_region
          %p757 = scmp.lt.s32.totalorder %s31, 1
          %s758 = scalar_select %p757, %s31, 1
          %s759 = smul.addr %s758, 2
          %s760 = scalar_lea.vmem %s17, %s759
        $region88: #{bert_multitask_forward_mrpc.2} parent=23 // pred_fallthru
          _
        // Predicated region
        $region89: #{bert_multitask_forward_mrpc.2} parent=23 // pred_check
          %p761 = pneg %p509
        $region90: #{bert_multitask_forward_mrpc.2} parent=23 // pred_check_branch
          %763 = sbr.rel (%p761) target = $region92
        $region91: #{bert_multitask_forward_mrpc.2} parent=23 // pred_region
          %p764 = scmp.lt.s32.totalorder %s31, 1
          %s765 = scalar_select %p764, %s31, 1
          %s766 = smul.addr %s765, 16
          %s767 = smul.addr %s766, 4
          %s768 = scalar_lea.vmem %s18, %s767
        $region92: #{bert_multitask_forward_mrpc.2} parent=23 // pred_fallthru
          _
        // Predicated region
        $region93: #{bert_multitask_forward_mrpc.2} parent=23 // pred_check
          %p769 = pneg %p535
        $region94: #{bert_multitask_forward_mrpc.2} parent=23 // pred_check_branch
          %771 = sbr.rel (%p769) target = $region96
        $region95: #{bert_multitask_forward_mrpc.2} parent=23 // pred_region
          %p772 = scmp.lt.s32.totalorder %s31, 1
          %s773 = scalar_select %p772, %s31, 1
          %s774 = smul.addr %s773, 2
          %s775 = scalar_lea.vmem %s19, %s774
        $region96: #{bert_multitask_forward_mrpc.2} parent=23 // pred_fallthru
          _
        // Predicated region
        $region97: #{bert_multitask_forward_mrpc.2} parent=23 // pred_check
          %p776 = pneg %p561
        $region98: #{bert_multitask_forward_mrpc.2} parent=23 // pred_check_branch
          %778 = sbr.rel (%p776) target = $region100
        $region99: #{bert_multitask_forward_mrpc.2} parent=23 // pred_region
          %p779 = scmp.lt.s32.totalorder %s31, 1
          %s780 = scalar_select %p779, %s31, 1
          %s781 = smul.addr %s780, 2
          %s782 = scalar_lea.vmem %s20, %s781
        $region100: #{bert_multitask_forward_mrpc.2} parent=23 // pred_fallthru
          _
        // Predicated region
        $region101: #{bert_multitask_forward_mrpc.2} parent=23 // pred_check
          %p783 = pneg %p587
        $region102: #{bert_multitask_forward_mrpc.2} parent=23 // pred_check_branch
          %785 = sbr.rel (%p783) target = $region104
        $region103: #{bert_multitask_forward_mrpc.2} parent=23 // pred_region
          %s786 = sand.u32 %s577, 1
          %s787 = scalar_lea.sflag [#allocation3], %s786
          %s788 = sand.u32 %s577, 1
          %s789 = smul.addr %s788, 2
          %s790 = scalar_lea.vmem [#allocation2], %s789
          %s792 = ssub.s32 32, 32
          %793 = vsyncadd %s787, %s792
          %s794 = smul.addr %s31, 2
          %s795 = smul.addr %s794, 16
          %s796 = scalar_lea.hbm %s21, %s795
          %s797 = sshll.u32 %s790, 4
          %s798 = int_to_ptr.vmem [resolvable:$true] %s797
          %803 = dma.hbm_to_vmem [thread:$0]  %s796, 32, %s798, %s787, 16, 16, 1
        $region104: #{bert_multitask_forward_mrpc.2} parent=23 // pred_fallthru
          _
      $region24: #{bert_multitask_forward_mrpc.2} parent=5 // pred_fallthru
        _
      %p804 = scmp.le.s32.totalorder 1, %s31
      %p805 = scmp.lt.s32.totalorder %s31, 3
      %p806 = pnand %p804, %p805
      %p807 = pneg %p806
      // Predicated region
      $region105: #{bert_multitask_forward_mrpc.2} parent=5 // pred_check
        _
      $region106: #{bert_multitask_forward_mrpc.2} parent=5 // pred_check_branch
        %809 = sbr.rel (%p806) target = $region108
      $region107: #{bert_multitask_forward_mrpc.2} parent=5 // pred_region
        %s810 = ssub.s32 %s31, 1
        %s811 = sand.u32 %s580, 1
        %s812 = scalar_lea.sflag [#allocation3], %s811
        %s813 = sand.u32 %s580, 1
        %s814 = smul.addr %s813, 2
        %s815 = scalar_lea.vmem [#allocation2], %s814
        // Predicated region
        $region109: #{bert_multitask_forward_mrpc.2} parent=107 // pred_check
          %p816 = pneg %p593
        $region110: #{bert_multitask_forward_mrpc.2} parent=107 // pred_check_branch
          %818 = sbr.rel (%p816) target = $region112
        $region111: #{bert_multitask_forward_mrpc.2} parent=107 // pred_region
          %819 = dma.done %s812, 32
        $region112: #{bert_multitask_forward_mrpc.2} parent=107 // pred_fallthru
          _
        %p820 = pneg %p52
        %p821 = pneg %p49
        %p822 = pneg %p73
        %p823 = pneg %p70
        %p824 = scmp.lt.s32.totalorder %s36, 1
        %s825 = scalar_select %p824, %s36, 1
        %s826 = smul.addr %s825, 2
        %s827 = smul.addr %s826, 8
        %s828 = scalar_lea.vmem %s2, %s827
        %p829 = pneg %p99
        %p830 = pneg %p96
        %p831 = scmp.lt.s32.totalorder %s36, 1
        %s832 = scalar_select %p831, %s36, 1
        %s833 = smul.addr %s832, 7
        %s834 = smul.addr %s833, 4
        %s835 = scalar_lea.vmem %s3, %s834
        %p836 = pneg %p125
        %p837 = pneg %p122
        %p838 = scmp.lt.s32.totalorder %s36, 1
        %s839 = scalar_select %p838, %s36, 1
        %s840 = scalar_lea.vmem %s4, %s839
        %p841 = pneg %p151
        %p842 = pneg %p148
        %p843 = scmp.lt.s32.totalorder %s36, 1
        %s844 = scalar_select %p843, %s36, 1
        %s845 = scalar_lea.vmem %s5, %s844
        %p846 = pneg %p177
        %p847 = pneg %p174
        %p848 = scmp.lt.s32.totalorder %s36, 1
        %s849 = scalar_select %p848, %s36, 1
        %s850 = smul.addr %s849, 8
        %s851 = smul.addr %s850, 4
        %s852 = scalar_lea.vmem %s6, %s851
        %p853 = pneg %p203
        %p854 = pneg %p200
        %p855 = scmp.lt.s32.totalorder %s36, 1
        %s856 = scalar_select %p855, %s36, 1
        %s857 = smul.addr %s856, 2
        %s858 = scalar_lea.vmem %s7, %s857
        %p859 = pneg %p229
        %p860 = pneg %p226
        %p861 = scmp.lt.s32.totalorder %s36, 1
        %s862 = scalar_select %p861, %s36, 1
        %s863 = smul.addr %s862, 8
        %s864 = smul.addr %s863, 4
        %s865 = scalar_lea.vmem %s8, %s864
        %p866 = pneg %p255
        %p867 = pneg %p252
        %p868 = scmp.lt.s32.totalorder %s36, 1
        %s869 = scalar_select %p868, %s36, 1
        %s870 = smul.addr %s869, 2
        %s871 = scalar_lea.vmem %s9, %s870
        %p872 = pneg %p281
        %p873 = pneg %p278
        %p874 = scmp.lt.s32.totalorder %s36, 1
        %s875 = scalar_select %p874, %s36, 1
        %s876 = smul.addr %s875, 8
        %s877 = smul.addr %s876, 4
        %s878 = scalar_lea.vmem %s10, %s877
        %p879 = pneg %p307
        %p880 = pneg %p304
        %p881 = scmp.lt.s32.totalorder %s36, 1
        %s882 = scalar_select %p881, %s36, 1
        %s883 = smul.addr %s882, 2
        %s884 = scalar_lea.vmem %s11, %s883
        %p885 = pneg %p333
        %p886 = pneg %p330
        %p887 = scmp.lt.s32.totalorder %s36, 1
        %s888 = scalar_select %p887, %s36, 1
        %s889 = smul.addr %s888, 8
        %s890 = smul.addr %s889, 4
        %s891 = scalar_lea.vmem %s12, %s890
        %p892 = pneg %p359
        %p893 = pneg %p356
        %p894 = scmp.lt.s32.totalorder %s36, 1
        %s895 = scalar_select %p894, %s36, 1
        %s896 = smul.addr %s895, 2
        %s897 = scalar_lea.vmem %s13, %s896
        %p898 = pneg %p385
        %p899 = pneg %p382
        %p900 = scmp.lt.s32.totalorder %s36, 1
        %s901 = scalar_select %p900, %s36, 1
        %s902 = smul.addr %s901, 2
        %s903 = scalar_lea.vmem %s14, %s902
        %p904 = pneg %p411
        %p905 = pneg %p408
        %p906 = scmp.lt.s32.totalorder %s36, 1
        %s907 = scalar_select %p906, %s36, 1
        %s908 = smul.addr %s907, 2
        %s909 = scalar_lea.vmem %s15, %s908
        %p910 = pneg %p437
        %p911 = pneg %p434
        %p912 = scmp.lt.s32.totalorder %s36, 1
        %s913 = scalar_select %p912, %s36, 1
        %s914 = smul.addr %s913, 8
        %s915 = smul.addr %s914, 4
        %s916 = scalar_lea.vmem %s16, %s915
        %p917 = pneg %p463
        %p918 = pneg %p460
        %p919 = scmp.lt.s32.totalorder %s36, 1
        %s920 = scalar_select %p919, %s36, 1
        %s921 = smul.addr %s920, 2
        %s922 = scalar_lea.vmem %s17, %s921
        %p923 = pneg %p489
        %p924 = pneg %p486
        %p925 = scmp.lt.s32.totalorder %s36, 1
        %s926 = scalar_select %p925, %s36, 1
        %s927 = smul.addr %s926, 16
        %s928 = smul.addr %s927, 4
        %s929 = scalar_lea.vmem %s18, %s928
        %p930 = pneg %p515
        %p931 = pneg %p512
        %p932 = scmp.lt.s32.totalorder %s36, 1
        %s933 = scalar_select %p932, %s36, 1
        %s934 = smul.addr %s933, 2
        %s935 = scalar_lea.vmem %s19, %s934
        %p936 = pneg %p541
        %p937 = pneg %p538
        %p938 = scmp.lt.s32.totalorder %s36, 1
        %s939 = scalar_select %p938, %s36, 1
        %s940 = smul.addr %s939, 2
        %s941 = scalar_lea.vmem %s20, %s940
        %p942 = pneg %p567
        %p943 = pneg %p564
        %s944 = sand.u32 %s580, 1
        %s945 = scalar_lea.sflag [#allocation3], %s944
        %s946 = sand.u32 %s580, 1
        %s947 = smul.addr %s946, 2
        %s948 = scalar_lea.vmem [#allocation2], %s947
        %p949 = pneg %p593
        %p950 = pneg %p590
        %p951 = pneg %p619
        %p952 = pneg %p616
        %p953 = scmp.lt.s32.totalorder %s36, 1
        %s954 = scalar_select %p953, %s36, 1
        %s955 = smul.addr %s954, 2
        %s956 = scalar_lea.vmem %s22, %s955
        %p957 = scmp.lt.s32.totalorder %s36, 1
        %s958 = scalar_select %p957, %s36, 1
        %s959 = smul.addr %s958, 2
        %s960 = smul.addr %s959, 8
        %s961 = scalar_lea.vmem %s2, %s960
        %p962 = scmp.lt.s32.totalorder %s36, 1
        %s963 = scalar_select %p962, %s36, 1
        %s964 = smul.addr %s963, 7
        %s965 = smul.addr %s964, 4
        %s966 = scalar_lea.vmem %s3, %s965
        %p967 = scmp.lt.s32.totalorder %s36, 1
        %s968 = scalar_select %p967, %s36, 1
        %s969 = scalar_lea.vmem %s4, %s968
        %p970 = scmp.lt.s32.totalorder %s36, 1
        %s971 = scalar_select %p970, %s36, 1
        %s972 = scalar_lea.vmem %s5, %s971
        %p973 = scmp.lt.s32.totalorder %s36, 1
        %s974 = scalar_select %p973, %s36, 1
        %s975 = smul.addr %s974, 8
        %s976 = smul.addr %s975, 4
        %s977 = scalar_lea.vmem %s6, %s976
        %p978 = scmp.lt.s32.totalorder %s36, 1
        %s979 = scalar_select %p978, %s36, 1
        %s980 = smul.addr %s979, 2
        %s981 = scalar_lea.vmem %s7, %s980
        %p982 = scmp.lt.s32.totalorder %s36, 1
        %s983 = scalar_select %p982, %s36, 1
        %s984 = smul.addr %s983, 8
        %s985 = smul.addr %s984, 4
        %s986 = scalar_lea.vmem %s8, %s985
        %p987 = scmp.lt.s32.totalorder %s36, 1
        %s988 = scalar_select %p987, %s36, 1
        %s989 = smul.addr %s988, 2
        %s990 = scalar_lea.vmem %s9, %s989
        %p991 = scmp.lt.s32.totalorder %s36, 1
        %s992 = scalar_select %p991, %s36, 1
        %s993 = smul.addr %s992, 8
        %s994 = smul.addr %s993, 4
        %s995 = scalar_lea.vmem %s10, %s994
        %p996 = scmp.lt.s32.totalorder %s36, 1
        %s997 = scalar_select %p996, %s36, 1
        %s998 = smul.addr %s997, 2
        %s999 = scalar_lea.vmem %s11, %s998
        %p1000 = scmp.lt.s32.totalorder %s36, 1
        %s1001 = scalar_select %p1000, %s36, 1
        %s1002 = smul.addr %s1001, 8
        %s1003 = smul.addr %s1002, 4
        %s1004 = scalar_lea.vmem %s12, %s1003
        %p1005 = scmp.lt.s32.totalorder %s36, 1
        %s1006 = scalar_select %p1005, %s36, 1
        %s1007 = smul.addr %s1006, 2
        %s1008 = scalar_lea.vmem %s13, %s1007
        %p1009 = scmp.lt.s32.totalorder %s36, 1
        %s1010 = scalar_select %p1009, %s36, 1
        %s1011 = smul.addr %s1010, 2
        %s1012 = scalar_lea.vmem %s14, %s1011
        %p1013 = scmp.lt.s32.totalorder %s36, 1
        %s1014 = scalar_select %p1013, %s36, 1
        %s1015 = smul.addr %s1014, 2
        %s1016 = scalar_lea.vmem %s15, %s1015
        %p1017 = scmp.lt.s32.totalorder %s36, 1
        %s1018 = scalar_select %p1017, %s36, 1
        %s1019 = smul.addr %s1018, 8
        %s1020 = smul.addr %s1019, 4
        %s1021 = scalar_lea.vmem %s16, %s1020
        %p1022 = scmp.lt.s32.totalorder %s36, 1
        %s1023 = scalar_select %p1022, %s36, 1
        %s1024 = smul.addr %s1023, 2
        %s1025 = scalar_lea.vmem %s17, %s1024
        %p1026 = scmp.lt.s32.totalorder %s36, 1
        %s1027 = scalar_select %p1026, %s36, 1
        %s1028 = smul.addr %s1027, 16
        %s1029 = smul.addr %s1028, 4
        %s1030 = scalar_lea.vmem %s18, %s1029
        %p1031 = scmp.lt.s32.totalorder %s36, 1
        %s1032 = scalar_select %p1031, %s36, 1
        %s1033 = smul.addr %s1032, 2
        %s1034 = scalar_lea.vmem %s19, %s1033
        %p1035 = scmp.lt.s32.totalorder %s36, 1
        %s1036 = scalar_select %p1035, %s36, 1
        %s1037 = smul.addr %s1036, 2
        %s1038 = scalar_lea.vmem %s20, %s1037
        %p1039 = scmp.lt.s32.totalorder %s36, 1
        %s1040 = scalar_select %p1039, %s36, 1
        %s1041 = smul.addr %s1040, 2
        %s1042 = scalar_lea.vmem %s22, %s1041
        %v1044 = vld [vmem:[%s1] sm:$0xff]
        %v1045 = vld [vmem:[%s1 + $0x8] sm:$0xff]
        %v1046 = vld [vmem:[%s0] sm:$0xf]
        %v1047 = vld [vmem:[%s0 + $0x4] sm:$0xf]
        %v1048 = vld [vmem:[%s966] sm:$0xf]
        %v1049 = vld [vmem:[%s966 + $0x4] sm:$0xf]
        %v1050 = vld [vmem:[%s966 + $0x8] sm:$0xf]
        %v1051 = vld [vmem:[%s966 + $0xc] sm:$0xf]
        %v1052 = vld [vmem:[%s966 + $0x10] sm:$0xf]
        %v1053 = vld [vmem:[%s966 + $0x14] sm:$0xf]
        %v1054 = vld [vmem:[%s966 + $0x18] sm:$0x1]
        %v1055 = vld [vmem:[%s961] sm:$0xff]
        %v1056 = vld [vmem:[%s961 + $0x8] sm:$0xff]
        %v1059 = vunpack.c.l.b16 %v1046
        %v1060 = vunpack.c.l.b16 %v1047
        %v1061 = vpack.c.b16 %v1060, %v1059
        %v1069 = vunpack.c.l.b16 %v1048
        %v1070 = vunpack.c.l.b16 %v1049
        %v1071 = vunpack.c.l.b16 %v1050
        %v1072 = vunpack.c.l.b16 %v1051
        %v1073 = vunpack.c.l.b16 %v1052
        %v1074 = vunpack.c.l.b16 %v1053
        %v1075 = vunpack.c.l.b16 %v1054
        %v1076 = vpack.c.b16 %v1070, %v1069
        %v1077 = vpack.c.b16 %v1072, %v1071
        %v1078 = vpack.c.b16 %v1074, %v1073
        %v1079 = vpack.c.b16 %v1075, %v1075
        %vm1083 = vcmask 408576
        %v1085 = vsel %vm1083, %v1061, 0
        %vm1087 = vcmask 1040384
        %v1089 = vsel %vm1087, %v1079, 0
        %1091 = vmatprep.subr.bf16.mxu0 0
        %1092 = vmatpush1.bf16.msra.mxu0 0
        %1093 = vmatprep.subr.bf16.mxu0 0
        %1094 = vmatpush1.bf16.msra.mxu0 0
        %1095 = vmatprep.subr.bf16.mxu0 0
        %1096 = vmatpush1.bf16.msra.mxu0 0
        %1097 = vmatprep.subr.bf16.mxu0 0
        %1098 = vmatpush1.bf16.msra.mxu0 0
        %1099 = vmatprep.subr.bf16.mxu0 0
        %1100 = vmatpush1.bf16.msra.mxu0 %v1089
        %1101 = vmatprep.subr.bf16.mxu0 0
        %1102 = vmatpush1.bf16.msra.mxu0 %v1078
        %1103 = vmatprep.subr.bf16.mxu0 0
        %1104 = vmatpush1.bf16.msra.mxu0 %v1077
        %1105 = vmatprep.subr.bf16.mxu0 0
        %1106 = vmatpush1.bf16.msra.mxu0 %v1076
        %1107 = vmatprep.subr.bf16.mxu0 0
        %1108 = vmatpush2.bf16.msra.mxu0 0
        %1109 = vmatprep.subr.bf16.mxu0 0
        %1110 = vmatpush2.bf16.msra.mxu0 0
        %1111 = vmatprep.subr.bf16.mxu0 0
        %1112 = vmatpush2.bf16.msra.mxu0 0
        %1113 = vmatprep.subr.bf16.mxu0 0
        %1114 = vmatpush2.bf16.msra.mxu0 0
        %1115 = vmatprep.subr.bf16.mxu0 0
        %1116 = vmatpush2.bf16.msra.mxu0 0
        %1117 = vmatprep.subr.bf16.mxu0 0
        %1118 = vmatpush2.bf16.msra.mxu0 0
        %1119 = vmatprep.subr.bf16.mxu0 0
        %1120 = vmatpush2.bf16.msra.mxu0 0
        %1121 = vmatprep.subr.bf16.mxu0 0
        %1122 = vmatpush2.bf16.msra.mxu0 0
        %1123 = vmatprep.mubr.bf16.mxu0 0
        %1124 = vmatmul.mubr.bf16.gmra.mxu0 %v1085
        %v1125 = vpop.f32.mrf.mxu0
        %v1126 = vadd.f32 %v1055, %v1125
        %v1127 = vpop.f32.mrf.mxu0
        %v1128 = vpop.f32.mrf.mxu0
        %v1129 = vadd.f32 %v1056, %v1128
        %v1130 = vpop.f32.mrf.mxu0
        %1131 = vdwg.mxu0
        %v1132 = vld [vmem:[%s969] sm:$0x1]
        %v1133 = vld [vmem:[%s972] sm:$0x1]
        %vm1134 = vcmask 261120
        %v1135 = vsel %vm1134, %v1126, 0.0
        %1136 = vadd.xlane.f32.xlu0 %v1135
        %v1137 = vpop.xlane.xlu0 %1136
        %v1138 = vsel %vm1134, %v1129, 0.0
        %1139 = vadd.xlane.f32.xlu0 %v1138
        %v1140 = vpop.xlane.xlu0 %1139
        %v1141 = vrcp.pop 32.0
        %v1142 = vmul.f32 %v1137, %v1141
        %v1143 = vmul.f32 %v1140, %v1141
        %v1144 = vsub.f32 %v1126, %v1142
        %v1145 = vsub.f32 %v1129, %v1143
        %v1146 = vmul.f32 %v1144, %v1144
        %v1147 = vmul.f32 %v1145, %v1145
        %v1148 = vsel %vm1134, %v1146, 0.0
        %1149 = vadd.xlane.f32.xlu0 %v1148
        %v1150 = vpop.xlane.xlu0 %1149
        %v1151 = vsel %vm1134, %v1147, 0.0
        %1152 = vadd.xlane.f32.xlu0 %v1151
        %v1153 = vpop.xlane.xlu0 %1152
        %v1154 = vmul.f32 %v1150, %v1141
        %v1155 = vmul.f32 %v1153, %v1141
        %v1156 = vadd.f32 %v1154, 1e-12
        %v1157 = vadd.f32 %v1155, 1e-12
        %v1158 = vrsqrt.pop %v1156
        %v1159 = vrsqrt.pop %v1157
        %v1160 = vmul.f32 %v1144, %v1158
        %v1161 = vmul.f32 %v1145, %v1159
        %v1163 = vlaneseq
        %v1164 = vshrl.u32 %v1163, 7
        %v1165 = vsub.s32 0, %v1164
        %v1166 = vrot.slane %v1132, %v1165
        %v1168 = vmul.f32 %v1160, %v1166
        %v1169 = vmul.f32 %v1161, %v1166
        %v1171 = vlaneseq
        %v1172 = vshrl.u32 %v1171, 7
        %v1173 = vsub.s32 0, %v1172
        %v1174 = vrot.slane %v1133, %v1173
        %v1176 = vadd.f32 %v1168, %v1174
        %v1177 = vadd.f32 %v1169, %v1174
        %v1178 = vpack.c.bf16 %v1177, %v1176
        %v1179 = vld [vmem:[%s977] sm:$0xf]
        %v1180 = vld [vmem:[%s977 + $0x4] sm:$0xf]
        %v1181 = vld [vmem:[%s977 + $0x8] sm:$0xf]
        %v1182 = vld [vmem:[%s977 + $0xc] sm:$0xf]
        %v1183 = vld [vmem:[%s981] sm:$0x1]
        %v1185 = vlaneseq
        %v1186 = vshrl.u32 %v1185, 7
        %v1187 = vsub.s32 0, %v1186
        %v1188 = vrot.slane %v1183, %v1187
        %v1194 = vunpack.c.l.b16 %v1179
        %v1195 = vunpack.c.l.b16 %v1180
        %v1196 = vunpack.c.l.b16 %v1181
        %v1197 = vunpack.c.l.b16 %v1182
        %v1198 = vpack.c.b16 %v1195, %v1194
        %v1199 = vpack.c.b16 %v1197, %v1196
        %v1203 = vsel %vm1134, %v1178, 0
        %1205 = vmatprep.subr.bf16.mxu0 0
        %1206 = vmatpush1.bf16.msra.mxu0 0
        %1207 = vmatprep.subr.bf16.mxu0 0
        %1208 = vmatpush1.bf16.msra.mxu0 0
        %1209 = vmatprep.subr.bf16.mxu0 0
        %1210 = vmatpush1.bf16.msra.mxu0 0
        %1211 = vmatprep.subr.bf16.mxu0 0
        %1212 = vmatpush1.bf16.msra.mxu0 0
        %1213 = vmatprep.subr.bf16.mxu0 0
        %1214 = vmatpush1.bf16.msra.mxu0 0
        %1215 = vmatprep.subr.bf16.mxu0 0
        %1216 = vmatpush1.bf16.msra.mxu0 0
        %1217 = vmatprep.subr.bf16.mxu0 0
        %1218 = vmatpush1.bf16.msra.mxu0 %v1199
        %1219 = vmatprep.subr.bf16.mxu0 0
        %1220 = vmatpush1.bf16.msra.mxu0 %v1198
        %1221 = vmatprep.subr.bf16.mxu0 0
        %1222 = vmatpush2.bf16.msra.mxu0 0
        %1223 = vmatprep.subr.bf16.mxu0 0
        %1224 = vmatpush2.bf16.msra.mxu0 0
        %1225 = vmatprep.subr.bf16.mxu0 0
        %1226 = vmatpush2.bf16.msra.mxu0 0
        %1227 = vmatprep.subr.bf16.mxu0 0
        %1228 = vmatpush2.bf16.msra.mxu0 0
        %1229 = vmatprep.subr.bf16.mxu0 0
        %1230 = vmatpush2.bf16.msra.mxu0 0
        %1231 = vmatprep.subr.bf16.mxu0 0
        %1232 = vmatpush2.bf16.msra.mxu0 0
        %1233 = vmatprep.subr.bf16.mxu0 0
        %1234 = vmatpush2.bf16.msra.mxu0 0
        %1235 = vmatprep.subr.bf16.mxu0 0
        %1236 = vmatpush2.bf16.msra.mxu0 0
        %1237 = vmatprep.mubr.bf16.mxu0 0
        %1238 = vmatmul.mubr.bf16.gmra.mxu0 %v1203
        %v1239 = vpop.f32.mrf.mxu0
        %v1240 = vadd.f32 %v1188, %v1239
        %v1241 = vpop.f32.mrf.mxu0
        %v1242 = vpop.f32.mrf.mxu0
        %v1243 = vadd.f32 %v1188, %v1242
        %v1244 = vpop.f32.mrf.mxu0
        %1245 = vdwg.mxu0
        %v1246 = vld [vmem:[%s986] sm:$0xf]
        %v1247 = vld [vmem:[%s986 + $0x4] sm:$0xf]
        %v1248 = vld [vmem:[%s986 + $0x8] sm:$0xf]
        %v1249 = vld [vmem:[%s986 + $0xc] sm:$0xf]
        %v1250 = vld [vmem:[%s990] sm:$0x1]
        %v1252 = vlaneseq
        %v1253 = vshrl.u32 %v1252, 7
        %v1254 = vsub.s32 0, %v1253
        %v1255 = vrot.slane %v1250, %v1254
        %v1261 = vunpack.c.l.b16 %v1246
        %v1262 = vunpack.c.l.b16 %v1247
        %v1263 = vunpack.c.l.b16 %v1248
        %v1264 = vunpack.c.l.b16 %v1249
        %v1265 = vpack.c.b16 %v1262, %v1261
        %v1266 = vpack.c.b16 %v1264, %v1263
        %1269 = vmatprep.subr.bf16.mxu0 0
        %1270 = vmatpush1.bf16.msra.mxu0 0
        %1271 = vmatprep.subr.bf16.mxu0 0
        %1272 = vmatpush1.bf16.msra.mxu0 0
        %1273 = vmatprep.subr.bf16.mxu0 0
        %1274 = vmatpush1.bf16.msra.mxu0 0
        %1275 = vmatprep.subr.bf16.mxu0 0
        %1276 = vmatpush1.bf16.msra.mxu0 0
        %1277 = vmatprep.subr.bf16.mxu0 0
        %1278 = vmatpush1.bf16.msra.mxu0 0
        %1279 = vmatprep.subr.bf16.mxu0 0
        %1280 = vmatpush1.bf16.msra.mxu0 0
        %1281 = vmatprep.subr.bf16.mxu0 0
        %1282 = vmatpush1.bf16.msra.mxu0 %v1266
        %1283 = vmatprep.subr.bf16.mxu0 0
        %1284 = vmatpush1.bf16.msra.mxu0 %v1265
        %1285 = vmatprep.subr.bf16.mxu0 0
        %1286 = vmatpush2.bf16.msra.mxu0 0
        %1287 = vmatprep.subr.bf16.mxu0 0
        %1288 = vmatpush2.bf16.msra.mxu0 0
        %1289 = vmatprep.subr.bf16.mxu0 0
        %1290 = vmatpush2.bf16.msra.mxu0 0
        %1291 = vmatprep.subr.bf16.mxu0 0
        %1292 = vmatpush2.bf16.msra.mxu0 0
        %1293 = vmatprep.subr.bf16.mxu0 0
        %1294 = vmatpush2.bf16.msra.mxu0 0
        %1295 = vmatprep.subr.bf16.mxu0 0
        %1296 = vmatpush2.bf16.msra.mxu0 0
        %1297 = vmatprep.subr.bf16.mxu0 0
        %1298 = vmatpush2.bf16.msra.mxu0 0
        %1299 = vmatprep.subr.bf16.mxu0 0
        %1300 = vmatpush2.bf16.msra.mxu0 0
        %1301 = vmatprep.mubr.bf16.mxu0 0
        %1302 = vmatmul.mubr.bf16.gmra.mxu0 %v1203
        %v1303 = vpop.f32.mrf.mxu0
        %v1304 = vadd.f32 %v1255, %v1303
        %v1305 = vpop.f32.mrf.mxu0
        %v1306 = vpop.f32.mrf.mxu0
        %v1307 = vadd.f32 %v1255, %v1306
        %v1308 = vpop.f32.mrf.mxu0
        %1309 = vdwg.mxu0
        %v1310 = vld [vmem:[%s995] sm:$0xf]
        %v1311 = vld [vmem:[%s995 + $0x4] sm:$0xf]
        %v1312 = vld [vmem:[%s995 + $0x8] sm:$0xf]
        %v1313 = vld [vmem:[%s995 + $0xc] sm:$0xf]
        %v1314 = vld [vmem:[%s999] sm:$0x1]
        %v1316 = vlaneseq
        %v1317 = vshrl.u32 %v1316, 7
        %v1318 = vsub.s32 0, %v1317
        %v1319 = vrot.slane %v1314, %v1318
        %v1325 = vunpack.c.l.b16 %v1310
        %v1326 = vunpack.c.l.b16 %v1311
        %v1327 = vunpack.c.l.b16 %v1312
        %v1328 = vunpack.c.l.b16 %v1313
        %v1329 = vpack.c.b16 %v1326, %v1325
        %v1330 = vpack.c.b16 %v1328, %v1327
        %1333 = vmatprep.subr.bf16.mxu0 0
        %1334 = vmatpush1.bf16.msra.mxu0 0
        %1335 = vmatprep.subr.bf16.mxu0 0
        %1336 = vmatpush1.bf16.msra.mxu0 0
        %1337 = vmatprep.subr.bf16.mxu0 0
        %1338 = vmatpush1.bf16.msra.mxu0 0
        %1339 = vmatprep.subr.bf16.mxu0 0
        %1340 = vmatpush1.bf16.msra.mxu0 0
        %1341 = vmatprep.subr.bf16.mxu0 0
        %1342 = vmatpush1.bf16.msra.mxu0 0
        %1343 = vmatprep.subr.bf16.mxu0 0
        %1344 = vmatpush1.bf16.msra.mxu0 0
        %1345 = vmatprep.subr.bf16.mxu0 0
        %1346 = vmatpush1.bf16.msra.mxu0 %v1330
        %1347 = vmatprep.subr.bf16.mxu0 0
        %1348 = vmatpush1.bf16.msra.mxu0 %v1329
        %1349 = vmatprep.subr.bf16.mxu0 0
        %1350 = vmatpush2.bf16.msra.mxu0 0
        %1351 = vmatprep.subr.bf16.mxu0 0
        %1352 = vmatpush2.bf16.msra.mxu0 0
        %1353 = vmatprep.subr.bf16.mxu0 0
        %1354 = vmatpush2.bf16.msra.mxu0 0
        %1355 = vmatprep.subr.bf16.mxu0 0
        %1356 = vmatpush2.bf16.msra.mxu0 0
        %1357 = vmatprep.subr.bf16.mxu0 0
        %1358 = vmatpush2.bf16.msra.mxu0 0
        %1359 = vmatprep.subr.bf16.mxu0 0
        %1360 = vmatpush2.bf16.msra.mxu0 0
        %1361 = vmatprep.subr.bf16.mxu0 0
        %1362 = vmatpush2.bf16.msra.mxu0 0
        %1363 = vmatprep.subr.bf16.mxu0 0
        %1364 = vmatpush2.bf16.msra.mxu0 0
        %1365 = vmatprep.mubr.bf16.mxu0 0
        %1366 = vmatmul.mubr.bf16.gmra.mxu0 %v1203
        %v1367 = vpop.f32.mrf.mxu0
        %v1368 = vadd.f32 %v1319, %v1367
        %v1369 = vpop.f32.mrf.mxu0
        %v1370 = vpop.f32.mrf.mxu0
        %v1371 = vadd.f32 %v1319, %v1370
        %v1372 = vpop.f32.mrf.mxu0
        %1373 = vdwg.mxu0
        %v1374 = vpack.c.bf16 %v1243, %v1240
        %v1375 = vpack.c.bf16 %v1307, %v1304
        %v1376 = vpack.c.bf16 %v1371, %v1368
        %vm1377 = vcmask 64512
        %v1379 = vsel %vm1377, %v1374, 0
        %v1382 = vsel %vm1377, %v1375, 0
        %1384 = vmatprep.subr.bf16.mxu0 0
        %1385 = vmatpush1.bf16.xpose.msra.mxu0 0
        %1386 = vmatprep.subr.bf16.mxu0 0
        %1387 = vmatpush1.bf16.xpose.msra.mxu0 0
        %1388 = vmatprep.subr.bf16.mxu0 0
        %1389 = vmatpush1.bf16.xpose.msra.mxu0 0
        %1390 = vmatprep.subr.bf16.mxu0 0
        %1391 = vmatpush1.bf16.xpose.msra.mxu0 0
        %1392 = vmatprep.subr.bf16.mxu0 0
        %1393 = vmatpush1.bf16.xpose.msra.mxu0 0
        %1394 = vmatprep.subr.bf16.mxu0 0
        %1395 = vmatpush1.bf16.xpose.msra.mxu0 0
        %1396 = vmatprep.subr.bf16.mxu0 0
        %1397 = vmatpush1.bf16.xpose.msra.mxu0 0
        %1398 = vmatprep.subr.bf16.mxu0 0
        %1399 = vmatpush1.bf16.xpose.msra.mxu0 %v1382
        %1400 = vmatprep.subr.bf16.mxu0 0
        %1401 = vmatpush2.bf16.xpose.msra.mxu0 0
        %1402 = vmatprep.subr.bf16.mxu0 0
        %1403 = vmatpush2.bf16.xpose.msra.mxu0 0
        %1404 = vmatprep.subr.bf16.mxu0 0
        %1405 = vmatpush2.bf16.xpose.msra.mxu0 0
        %1406 = vmatprep.subr.bf16.mxu0 0
        %1407 = vmatpush2.bf16.xpose.msra.mxu0 0
        %1408 = vmatprep.subr.bf16.mxu0 0
        %1409 = vmatpush2.bf16.xpose.msra.mxu0 0
        %1410 = vmatprep.subr.bf16.mxu0 0
        %1411 = vmatpush2.bf16.xpose.msra.mxu0 0
        %1412 = vmatprep.subr.bf16.mxu0 0
        %1413 = vmatpush2.bf16.xpose.msra.mxu0 0
        %1414 = vmatprep.subr.bf16.mxu0 0
        %1415 = vmatpush2.bf16.xpose.msra.mxu0 0
        %1416 = vmatprep.mubr.bf16.mxu0 0
        %1417 = vmatmul.mubr.bf16.gmra.mxu0 %v1379
        %v1418 = vpop.f32.mrf.mxu0
        %v1419 = vadd.f32 0.0, %v1418
        %v1420 = vpop.f32.mrf.mxu0
        %v1421 = vpop.f32.mrf.mxu0
        %v1422 = vadd.f32 0.0, %v1421
        %v1423 = vpop.f32.mrf.mxu0
        %1424 = vdwg.mxu0
        %v1425 = vmul.f32 %v1419, 0.35355338
        %v1426 = vmul.f32 %v1422, 0.35355338
        %v1427 = vadd.f32 %v1425, %v1044
        %v1428 = vadd.f32 %v1426, %v1045
        %vm1429 = vcmask 130048
        %v1430 = vsel %vm1429, %v1427, -inf
        %1431 = vmax.xlane.f32.xlu0 %v1430
        %v1432 = vpop.xlane.xlu0 %1431
        %v1433 = vsel %vm1429, %v1428, -inf
        %1434 = vmax.xlane.f32.xlu0 %v1433
        %v1435 = vpop.xlane.xlu0 %1434
        %v1436 = vsub.f32 %v1427, %v1432
        %v1437 = vsub.f32 %v1428, %v1435
        %v1438 = vmul.f32 %v1436, 1.442695
        %v1439 = vpow.pop %v1438
        %v1440 = vmul.f32 %v1437, 1.442695
        %v1441 = vpow.pop %v1440
        %v1442 = vsel %vm1429, %v1439, 0.0
        %1443 = vadd.xlane.f32.xlu0 %v1442
        %v1444 = vpop.xlane.xlu0 %1443
        %v1445 = vsel %vm1429, %v1441, 0.0
        %1446 = vadd.xlane.f32.xlu0 %v1445
        %v1447 = vpop.xlane.xlu0 %1446
        %v1448 = vrcp.pop %v1444
        %v1449 = vrcp.pop %v1447
        %v1450 = vmul.f32 %v1439, %v1448
        %v1451 = vmul.f32 %v1441, %v1449
        %v1452 = vpack.c.bf16 %v1451, %v1450
        %v1454 = vsel %vm1429, %v1452, 0
        %1456 = vmatprep.subr.bf16.mxu0 0
        %1457 = vmatpush1.bf16.msra.mxu0 0
        %1458 = vmatprep.subr.bf16.mxu0 0
        %1459 = vmatpush1.bf16.msra.mxu0 0
        %1460 = vmatprep.subr.bf16.mxu0 0
        %1461 = vmatpush1.bf16.msra.mxu0 0
        %1462 = vmatprep.subr.bf16.mxu0 0
        %1463 = vmatpush1.bf16.msra.mxu0 0
        %1464 = vmatprep.subr.bf16.mxu0 0
        %1465 = vmatpush1.bf16.msra.mxu0 0
        %1466 = vmatprep.subr.bf16.mxu0 0
        %1467 = vmatpush1.bf16.msra.mxu0 0
        %1468 = vmatprep.subr.bf16.mxu0 0
        %1469 = vmatpush1.bf16.msra.mxu0 0
        %1470 = vmatprep.subr.bf16.mxu0 0
        %1471 = vmatpush1.bf16.msra.mxu0 %v1376
        %1472 = vmatprep.subr.bf16.mxu0 0
        %1473 = vmatpush2.bf16.msra.mxu0 0
        %1474 = vmatprep.subr.bf16.mxu0 0
        %1475 = vmatpush2.bf16.msra.mxu0 0
        %1476 = vmatprep.subr.bf16.mxu0 0
        %1477 = vmatpush2.bf16.msra.mxu0 0
        %1478 = vmatprep.subr.bf16.mxu0 0
        %1479 = vmatpush2.bf16.msra.mxu0 0
        %1480 = vmatprep.subr.bf16.mxu0 0
        %1481 = vmatpush2.bf16.msra.mxu0 0
        %1482 = vmatprep.subr.bf16.mxu0 0
        %1483 = vmatpush2.bf16.msra.mxu0 0
        %1484 = vmatprep.subr.bf16.mxu0 0
        %1485 = vmatpush2.bf16.msra.mxu0 0
        %1486 = vmatprep.subr.bf16.mxu0 0
        %1487 = vmatpush2.bf16.msra.mxu0 0
        %1488 = vmatprep.mubr.bf16.mxu0 0
        %1489 = vmatmul.mubr.bf16.gmra.mxu0 %v1454
        %v1490 = vpop.f32.mrf.mxu0
        %v1491 = vadd.f32 0.0, %v1490
        %v1492 = vpop.f32.mrf.mxu0
        %v1493 = vpop.f32.mrf.mxu0
        %v1494 = vadd.f32 0.0, %v1493
        %v1495 = vpop.f32.mrf.mxu0
        %1496 = vdwg.mxu0
        %v1497 = vpack.c.bf16 %v1494, %v1491
        %v1498 = vld [vmem:[%s1004] sm:$0xf]
        %1500 = vrot.lane.b32.xlu0 %v1374, 120
        %v1501 = vpop.permute.xlu0 %1500
        %1503 = vrot.lane.b32.xlu0 %v1375, 120
        %v1504 = vpop.permute.xlu0 %1503
        %v1506 = vsel %vm1377, %v1501, 0
        %v1509 = vsel %vm1377, %v1504, 0
        %1511 = vmatprep.subr.bf16.mxu0 0
        %1512 = vmatpush1.bf16.xpose.msra.mxu0 0
        %1513 = vmatprep.subr.bf16.mxu0 0
        %1514 = vmatpush1.bf16.xpose.msra.mxu0 0
        %1515 = vmatprep.subr.bf16.mxu0 0
        %1516 = vmatpush1.bf16.xpose.msra.mxu0 0
        %1517 = vmatprep.subr.bf16.mxu0 0
        %1518 = vmatpush1.bf16.xpose.msra.mxu0 0
        %1519 = vmatprep.subr.bf16.mxu0 0
        %1520 = vmatpush1.bf16.xpose.msra.mxu0 0
        %1521 = vmatprep.subr.bf16.mxu0 0
        %1522 = vmatpush1.bf16.xpose.msra.mxu0 0
        %1523 = vmatprep.subr.bf16.mxu0 0
        %1524 = vmatpush1.bf16.xpose.msra.mxu0 0
        %1525 = vmatprep.subr.bf16.mxu0 0
        %1526 = vmatpush1.bf16.xpose.msra.mxu0 %v1509
        %1527 = vmatprep.subr.bf16.mxu0 0
        %1528 = vmatpush2.bf16.xpose.msra.mxu0 0
        %1529 = vmatprep.subr.bf16.mxu0 0
        %1530 = vmatpush2.bf16.xpose.msra.mxu0 0
        %1531 = vmatprep.subr.bf16.mxu0 0
        %1532 = vmatpush2.bf16.xpose.msra.mxu0 0
        %1533 = vmatprep.subr.bf16.mxu0 0
        %1534 = vmatpush2.bf16.xpose.msra.mxu0 0
        %1535 = vmatprep.subr.bf16.mxu0 0
        %1536 = vmatpush2.bf16.xpose.msra.mxu0 0
        %1537 = vmatprep.subr.bf16.mxu0 0
        %1538 = vmatpush2.bf16.xpose.msra.mxu0 0
        %1539 = vmatprep.subr.bf16.mxu0 0
        %1540 = vmatpush2.bf16.xpose.msra.mxu0 0
        %1541 = vmatprep.subr.bf16.mxu0 0
        %1542 = vmatpush2.bf16.xpose.msra.mxu0 0
        %1543 = vmatprep.mubr.bf16.mxu0 0
        %1544 = vmatmul.mubr.bf16.gmra.mxu0 %v1506
        %v1545 = vpop.f32.mrf.mxu0
        %v1546 = vadd.f32 0.0, %v1545
        %v1547 = vpop.f32.mrf.mxu0
        %v1548 = vpop.f32.mrf.mxu0
        %v1549 = vadd.f32 0.0, %v1548
        %v1550 = vpop.f32.mrf.mxu0
        %1551 = vdwg.mxu0
        %v1552 = vmul.f32 %v1546, 0.35355338
        %v1553 = vmul.f32 %v1549, 0.35355338
        %v1554 = vadd.f32 %v1552, %v1044
        %v1555 = vadd.f32 %v1553, %v1045
        %v1556 = vsel %vm1429, %v1554, -inf
        %1557 = vmax.xlane.f32.xlu0 %v1556
        %v1558 = vpop.xlane.xlu0 %1557
        %v1559 = vsel %vm1429, %v1555, -inf
        %1560 = vmax.xlane.f32.xlu0 %v1559
        %v1561 = vpop.xlane.xlu0 %1560
        %v1562 = vsub.f32 %v1554, %v1558
        %v1563 = vsub.f32 %v1555, %v1561
        %v1564 = vmul.f32 %v1562, 1.442695
        %v1565 = vpow.pop %v1564
        %v1566 = vmul.f32 %v1563, 1.442695
        %v1567 = vpow.pop %v1566
        %v1568 = vsel %vm1429, %v1565, 0.0
        %1569 = vadd.xlane.f32.xlu0 %v1568
        %v1570 = vpop.xlane.xlu0 %1569
        %v1571 = vsel %vm1429, %v1567, 0.0
        %1572 = vadd.xlane.f32.xlu0 %v1571
        %v1573 = vpop.xlane.xlu0 %1572
        %v1574 = vrcp.pop %v1570
        %v1575 = vrcp.pop %v1573
        %v1576 = vmul.f32 %v1565, %v1574
        %v1577 = vmul.f32 %v1567, %v1575
        %v1578 = vpack.c.bf16 %v1577, %v1576
        %1580 = vrot.lane.b32.xlu0 %v1376, 120
        %v1581 = vpop.permute.xlu0 %1580
        %v1584 = vsel %vm1429, %v1578, 0
        %1586 = vmatprep.subr.bf16.mxu0 0
        %1587 = vmatpush1.bf16.msra.mxu0 0
        %1588 = vmatprep.subr.bf16.mxu0 0
        %1589 = vmatpush1.bf16.msra.mxu0 0
        %1590 = vmatprep.subr.bf16.mxu0 0
        %1591 = vmatpush1.bf16.msra.mxu0 0
        %1592 = vmatprep.subr.bf16.mxu0 0
        %1593 = vmatpush1.bf16.msra.mxu0 0
        %1594 = vmatprep.subr.bf16.mxu0 0
        %1595 = vmatpush1.bf16.msra.mxu0 0
        %1596 = vmatprep.subr.bf16.mxu0 0
        %1597 = vmatpush1.bf16.msra.mxu0 0
        %1598 = vmatprep.subr.bf16.mxu0 0
        %1599 = vmatpush1.bf16.msra.mxu0 0
        %1600 = vmatprep.subr.bf16.mxu0 0
        %1601 = vmatpush1.bf16.msra.mxu0 %v1581
        %1602 = vmatprep.subr.bf16.mxu0 0
        %1603 = vmatpush2.bf16.msra.mxu0 0
        %1604 = vmatprep.subr.bf16.mxu0 0
        %1605 = vmatpush2.bf16.msra.mxu0 0
        %1606 = vmatprep.subr.bf16.mxu0 0
        %1607 = vmatpush2.bf16.msra.mxu0 0
        %1608 = vmatprep.subr.bf16.mxu0 0
        %1609 = vmatpush2.bf16.msra.mxu0 0
        %1610 = vmatprep.subr.bf16.mxu0 0
        %1611 = vmatpush2.bf16.msra.mxu0 0
        %1612 = vmatprep.subr.bf16.mxu0 0
        %1613 = vmatpush2.bf16.msra.mxu0 0
        %1614 = vmatprep.subr.bf16.mxu0 0
        %1615 = vmatpush2.bf16.msra.mxu0 0
        %1616 = vmatprep.subr.bf16.mxu0 0
        %1617 = vmatpush2.bf16.msra.mxu0 0
        %1618 = vmatprep.mubr.bf16.mxu0 0
        %1619 = vmatmul.mubr.bf16.gmra.mxu0 %v1584
        %v1620 = vpop.f32.mrf.mxu0
        %v1621 = vadd.f32 0.0, %v1620
        %v1622 = vpop.f32.mrf.mxu0
        %v1623 = vpop.f32.mrf.mxu0
        %v1624 = vadd.f32 0.0, %v1623
        %v1625 = vpop.f32.mrf.mxu0
        %1626 = vdwg.mxu0
        %v1627 = vpack.c.bf16 %v1624, %v1621
        %v1628 = vld [vmem:[%s1004 + $0x4] sm:$0xf]
        %v1630 = vsel %vm1377, %v1627, 0
        %vm1632 = vcmask 1043456
        %v1634 = vsel %vm1632, %v1628, 0
        %1636 = vmatprep.subr.bf16.mxu0 0
        %1637 = vmatpush1.bf16.msra.mxu0 0
        %1638 = vmatprep.subr.bf16.mxu0 0
        %1639 = vmatpush1.bf16.msra.mxu0 0
        %1640 = vmatprep.subr.bf16.mxu0 0
        %1641 = vmatpush1.bf16.msra.mxu0 0
        %1642 = vmatprep.subr.bf16.mxu0 0
        %1643 = vmatpush1.bf16.msra.mxu0 0
        %1644 = vmatprep.subr.bf16.mxu0 0
        %1645 = vmatpush1.bf16.msra.mxu0 0
        %1646 = vmatprep.subr.bf16.mxu0 0
        %1647 = vmatpush1.bf16.msra.mxu0 0
        %1648 = vmatprep.subr.bf16.mxu0 0
        %1649 = vmatpush1.bf16.msra.mxu0 0
        %1650 = vmatprep.subr.bf16.mxu0 0
        %1651 = vmatpush1.bf16.msra.mxu0 %v1634
        %1652 = vmatprep.subr.bf16.mxu0 0
        %1653 = vmatpush2.bf16.msra.mxu0 0
        %1654 = vmatprep.subr.bf16.mxu0 0
        %1655 = vmatpush2.bf16.msra.mxu0 0
        %1656 = vmatprep.subr.bf16.mxu0 0
        %1657 = vmatpush2.bf16.msra.mxu0 0
        %1658 = vmatprep.subr.bf16.mxu0 0
        %1659 = vmatpush2.bf16.msra.mxu0 0
        %1660 = vmatprep.subr.bf16.mxu0 0
        %1661 = vmatpush2.bf16.msra.mxu0 0
        %1662 = vmatprep.subr.bf16.mxu0 0
        %1663 = vmatpush2.bf16.msra.mxu0 0
        %1664 = vmatprep.subr.bf16.mxu0 0
        %1665 = vmatpush2.bf16.msra.mxu0 0
        %1666 = vmatprep.subr.bf16.mxu0 0
        %1667 = vmatpush2.bf16.msra.mxu0 0
        %1668 = vmatprep.mubr.bf16.mxu0 0
        %1669 = vmatmul.mubr.bf16.gmra.mxu0 %v1630
        %v1670 = vpop.f32.mrf.mxu0
        %v1671 = vadd.f32 0.0, %v1670
        %v1672 = vpop.f32.mrf.mxu0
        %v1673 = vpop.f32.mrf.mxu0
        %v1674 = vadd.f32 0.0, %v1673
        %v1675 = vpop.f32.mrf.mxu0
        %1676 = vdwg.mxu0
        %v1678 = vsel %vm1377, %v1497, 0
        %v1681 = vsel %vm1632, %v1498, 0
        %1683 = vmatprep.subr.bf16.mxu0 0
        %1684 = vmatpush1.bf16.msra.mxu0 0
        %1685 = vmatprep.subr.bf16.mxu0 0
        %1686 = vmatpush1.bf16.msra.mxu0 0
        %1687 = vmatprep.subr.bf16.mxu0 0
        %1688 = vmatpush1.bf16.msra.mxu0 0
        %1689 = vmatprep.subr.bf16.mxu0 0
        %1690 = vmatpush1.bf16.msra.mxu0 0
        %1691 = vmatprep.subr.bf16.mxu0 0
        %1692 = vmatpush1.bf16.msra.mxu0 0
        %1693 = vmatprep.subr.bf16.mxu0 0
        %1694 = vmatpush1.bf16.msra.mxu0 0
        %1695 = vmatprep.subr.bf16.mxu0 0
        %1696 = vmatpush1.bf16.msra.mxu0 0
        %1697 = vmatprep.subr.bf16.mxu0 0
        %1698 = vmatpush1.bf16.msra.mxu0 %v1681
        %1699 = vmatprep.subr.bf16.mxu0 0
        %1700 = vmatpush2.bf16.msra.mxu0 0
        %1701 = vmatprep.subr.bf16.mxu0 0
        %1702 = vmatpush2.bf16.msra.mxu0 0
        %1703 = vmatprep.subr.bf16.mxu0 0
        %1704 = vmatpush2.bf16.msra.mxu0 0
        %1705 = vmatprep.subr.bf16.mxu0 0
        %1706 = vmatpush2.bf16.msra.mxu0 0
        %1707 = vmatprep.subr.bf16.mxu0 0
        %1708 = vmatpush2.bf16.msra.mxu0 0
        %1709 = vmatprep.subr.bf16.mxu0 0
        %1710 = vmatpush2.bf16.msra.mxu0 0
        %1711 = vmatprep.subr.bf16.mxu0 0
        %1712 = vmatpush2.bf16.msra.mxu0 0
        %1713 = vmatprep.subr.bf16.mxu0 0
        %1714 = vmatpush2.bf16.msra.mxu0 0
        %1715 = vmatprep.mubr.bf16.mxu0 0
        %1716 = vmatmul.mubr.bf16.gmra.mxu0 %v1678
        %v1717 = vpop.f32.mrf.mxu0
        %v1718 = vadd.f32 %v1671, %v1717
        %v1719 = vpop.f32.mrf.mxu0
        %v1720 = vpop.f32.mrf.mxu0
        %v1721 = vadd.f32 %v1674, %v1720
        %v1722 = vpop.f32.mrf.mxu0
        %1723 = vdwg.mxu0
        %1724 = vrot.lane.b32.xlu0 %v1374, 112
        %v1725 = vpop.permute.xlu0 %1724
        %1726 = vrot.lane.b32.xlu0 %v1375, 112
        %v1727 = vpop.permute.xlu0 %1726
        %v1729 = vsel %vm1377, %v1725, 0
        %v1732 = vsel %vm1377, %v1727, 0
        %1734 = vmatprep.subr.bf16.mxu0 0
        %1735 = vmatpush1.bf16.xpose.msra.mxu0 0
        %1736 = vmatprep.subr.bf16.mxu0 0
        %1737 = vmatpush1.bf16.xpose.msra.mxu0 0
        %1738 = vmatprep.subr.bf16.mxu0 0
        %1739 = vmatpush1.bf16.xpose.msra.mxu0 0
        %1740 = vmatprep.subr.bf16.mxu0 0
        %1741 = vmatpush1.bf16.xpose.msra.mxu0 0
        %1742 = vmatprep.subr.bf16.mxu0 0
        %1743 = vmatpush1.bf16.xpose.msra.mxu0 0
        %1744 = vmatprep.subr.bf16.mxu0 0
        %1745 = vmatpush1.bf16.xpose.msra.mxu0 0
        %1746 = vmatprep.subr.bf16.mxu0 0
        %1747 = vmatpush1.bf16.xpose.msra.mxu0 0
        %1748 = vmatprep.subr.bf16.mxu0 0
        %1749 = vmatpush1.bf16.xpose.msra.mxu0 %v1732
        %1750 = vmatprep.subr.bf16.mxu0 0
        %1751 = vmatpush2.bf16.xpose.msra.mxu0 0
        %1752 = vmatprep.subr.bf16.mxu0 0
        %1753 = vmatpush2.bf16.xpose.msra.mxu0 0
        %1754 = vmatprep.subr.bf16.mxu0 0
        %1755 = vmatpush2.bf16.xpose.msra.mxu0 0
        %1756 = vmatprep.subr.bf16.mxu0 0
        %1757 = vmatpush2.bf16.xpose.msra.mxu0 0
        %1758 = vmatprep.subr.bf16.mxu0 0
        %1759 = vmatpush2.bf16.xpose.msra.mxu0 0
        %1760 = vmatprep.subr.bf16.mxu0 0
        %1761 = vmatpush2.bf16.xpose.msra.mxu0 0
        %1762 = vmatprep.subr.bf16.mxu0 0
        %1763 = vmatpush2.bf16.xpose.msra.mxu0 0
        %1764 = vmatprep.subr.bf16.mxu0 0
        %1765 = vmatpush2.bf16.xpose.msra.mxu0 0
        %1766 = vmatprep.mubr.bf16.mxu0 0
        %1767 = vmatmul.mubr.bf16.gmra.mxu0 %v1729
        %v1768 = vpop.f32.mrf.mxu0
        %v1769 = vadd.f32 0.0, %v1768
        %v1770 = vpop.f32.mrf.mxu0
        %v1771 = vpop.f32.mrf.mxu0
        %v1772 = vadd.f32 0.0, %v1771
        %v1773 = vpop.f32.mrf.mxu0
        %1774 = vdwg.mxu0
        %v1775 = vmul.f32 %v1769, 0.35355338
        %v1776 = vmul.f32 %v1772, 0.35355338
        %v1777 = vadd.f32 %v1775, %v1044
        %v1778 = vadd.f32 %v1776, %v1045
        %v1779 = vsel %vm1429, %v1777, -inf
        %1780 = vmax.xlane.f32.xlu0 %v1779
        %v1781 = vpop.xlane.xlu0 %1780
        %v1782 = vsel %vm1429, %v1778, -inf
        %1783 = vmax.xlane.f32.xlu0 %v1782
        %v1784 = vpop.xlane.xlu0 %1783
        %v1785 = vsub.f32 %v1777, %v1781
        %v1786 = vsub.f32 %v1778, %v1784
        %v1787 = vmul.f32 %v1785, 1.442695
        %v1788 = vpow.pop %v1787
        %v1789 = vmul.f32 %v1786, 1.442695
        %v1790 = vpow.pop %v1789
        %v1791 = vsel %vm1429, %v1788, 0.0
        %1792 = vadd.xlane.f32.xlu0 %v1791
        %v1793 = vpop.xlane.xlu0 %1792
        %v1794 = vsel %vm1429, %v1790, 0.0
        %1795 = vadd.xlane.f32.xlu0 %v1794
        %v1796 = vpop.xlane.xlu0 %1795
        %v1797 = vrcp.pop %v1793
        %v1798 = vrcp.pop %v1796
        %v1799 = vmul.f32 %v1788, %v1797
        %v1800 = vmul.f32 %v1790, %v1798
        %v1801 = vpack.c.bf16 %v1800, %v1799
        %1802 = vrot.lane.b32.xlu0 %v1376, 112
        %v1803 = vpop.permute.xlu0 %1802
        %v1806 = vsel %vm1429, %v1801, 0
        %1808 = vmatprep.subr.bf16.mxu0 0
        %1809 = vmatpush1.bf16.msra.mxu0 0
        %1810 = vmatprep.subr.bf16.mxu0 0
        %1811 = vmatpush1.bf16.msra.mxu0 0
        %1812 = vmatprep.subr.bf16.mxu0 0
        %1813 = vmatpush1.bf16.msra.mxu0 0
        %1814 = vmatprep.subr.bf16.mxu0 0
        %1815 = vmatpush1.bf16.msra.mxu0 0
        %1816 = vmatprep.subr.bf16.mxu0 0
        %1817 = vmatpush1.bf16.msra.mxu0 0
        %1818 = vmatprep.subr.bf16.mxu0 0
        %1819 = vmatpush1.bf16.msra.mxu0 0
        %1820 = vmatprep.subr.bf16.mxu0 0
        %1821 = vmatpush1.bf16.msra.mxu0 0
        %1822 = vmatprep.subr.bf16.mxu0 0
        %1823 = vmatpush1.bf16.msra.mxu0 %v1803
        %1824 = vmatprep.subr.bf16.mxu0 0
        %1825 = vmatpush2.bf16.msra.mxu0 0
        %1826 = vmatprep.subr.bf16.mxu0 0
        %1827 = vmatpush2.bf16.msra.mxu0 0
        %1828 = vmatprep.subr.bf16.mxu0 0
        %1829 = vmatpush2.bf16.msra.mxu0 0
        %1830 = vmatprep.subr.bf16.mxu0 0
        %1831 = vmatpush2.bf16.msra.mxu0 0
        %1832 = vmatprep.subr.bf16.mxu0 0
        %1833 = vmatpush2.bf16.msra.mxu0 0
        %1834 = vmatprep.subr.bf16.mxu0 0
        %1835 = vmatpush2.bf16.msra.mxu0 0
        %1836 = vmatprep.subr.bf16.mxu0 0
        %1837 = vmatpush2.bf16.msra.mxu0 0
        %1838 = vmatprep.subr.bf16.mxu0 0
        %1839 = vmatpush2.bf16.msra.mxu0 0
        %1840 = vmatprep.mubr.bf16.mxu0 0
        %1841 = vmatmul.mubr.bf16.gmra.mxu0 %v1806
        %v1842 = vpop.f32.mrf.mxu0
        %v1843 = vadd.f32 0.0, %v1842
        %v1844 = vpop.f32.mrf.mxu0
        %v1845 = vpop.f32.mrf.mxu0
        %v1846 = vadd.f32 0.0, %v1845
        %v1847 = vpop.f32.mrf.mxu0
        %1848 = vdwg.mxu0
        %v1849 = vpack.c.bf16 %v1846, %v1843
        %v1850 = vld [vmem:[%s1004 + $0x8] sm:$0xf]
        %v1852 = vsel %vm1377, %v1849, 0
        %v1855 = vsel %vm1632, %v1850, 0
        %1857 = vmatprep.subr.bf16.mxu0 0
        %1858 = vmatpush1.bf16.msra.mxu0 0
        %1859 = vmatprep.subr.bf16.mxu0 0
        %1860 = vmatpush1.bf16.msra.mxu0 0
        %1861 = vmatprep.subr.bf16.mxu0 0
        %1862 = vmatpush1.bf16.msra.mxu0 0
        %1863 = vmatprep.subr.bf16.mxu0 0
        %1864 = vmatpush1.bf16.msra.mxu0 0
        %1865 = vmatprep.subr.bf16.mxu0 0
        %1866 = vmatpush1.bf16.msra.mxu0 0
        %1867 = vmatprep.subr.bf16.mxu0 0
        %1868 = vmatpush1.bf16.msra.mxu0 0
        %1869 = vmatprep.subr.bf16.mxu0 0
        %1870 = vmatpush1.bf16.msra.mxu0 0
        %1871 = vmatprep.subr.bf16.mxu0 0
        %1872 = vmatpush1.bf16.msra.mxu0 %v1855
        %1873 = vmatprep.subr.bf16.mxu0 0
        %1874 = vmatpush2.bf16.msra.mxu0 0
        %1875 = vmatprep.subr.bf16.mxu0 0
        %1876 = vmatpush2.bf16.msra.mxu0 0
        %1877 = vmatprep.subr.bf16.mxu0 0
        %1878 = vmatpush2.bf16.msra.mxu0 0
        %1879 = vmatprep.subr.bf16.mxu0 0
        %1880 = vmatpush2.bf16.msra.mxu0 0
        %1881 = vmatprep.subr.bf16.mxu0 0
        %1882 = vmatpush2.bf16.msra.mxu0 0
        %1883 = vmatprep.subr.bf16.mxu0 0
        %1884 = vmatpush2.bf16.msra.mxu0 0
        %1885 = vmatprep.subr.bf16.mxu0 0
        %1886 = vmatpush2.bf16.msra.mxu0 0
        %1887 = vmatprep.subr.bf16.mxu0 0
        %1888 = vmatpush2.bf16.msra.mxu0 0
        %1889 = vmatprep.mubr.bf16.mxu0 0
        %1890 = vmatmul.mubr.bf16.gmra.mxu0 %v1852
        %v1891 = vpop.f32.mrf.mxu0
        %v1892 = vadd.f32 0.0, %v1891
        %v1893 = vpop.f32.mrf.mxu0
        %v1894 = vpop.f32.mrf.mxu0
        %v1895 = vadd.f32 0.0, %v1894
        %v1896 = vpop.f32.mrf.mxu0
        %1897 = vdwg.mxu0
        %v1898 = vadd.f32 %v1718, %v1892
        %v1899 = vadd.f32 %v1721, %v1895
        %1900 = vrot.lane.b32.xlu0 %v1374, 104
        %v1901 = vpop.permute.xlu0 %1900
        %1902 = vrot.lane.b32.xlu0 %v1375, 104
        %v1903 = vpop.permute.xlu0 %1902
        %v1905 = vsel %vm1377, %v1901, 0
        %v1908 = vsel %vm1377, %v1903, 0
        %1910 = vmatprep.subr.bf16.mxu0 0
        %1911 = vmatpush1.bf16.xpose.msra.mxu0 0
        %1912 = vmatprep.subr.bf16.mxu0 0
        %1913 = vmatpush1.bf16.xpose.msra.mxu0 0
        %1914 = vmatprep.subr.bf16.mxu0 0
        %1915 = vmatpush1.bf16.xpose.msra.mxu0 0
        %1916 = vmatprep.subr.bf16.mxu0 0
        %1917 = vmatpush1.bf16.xpose.msra.mxu0 0
        %1918 = vmatprep.subr.bf16.mxu0 0
        %1919 = vmatpush1.bf16.xpose.msra.mxu0 0
        %1920 = vmatprep.subr.bf16.mxu0 0
        %1921 = vmatpush1.bf16.xpose.msra.mxu0 0
        %1922 = vmatprep.subr.bf16.mxu0 0
        %1923 = vmatpush1.bf16.xpose.msra.mxu0 0
        %1924 = vmatprep.subr.bf16.mxu0 0
        %1925 = vmatpush1.bf16.xpose.msra.mxu0 %v1908
        %1926 = vmatprep.subr.bf16.mxu0 0
        %1927 = vmatpush2.bf16.xpose.msra.mxu0 0
        %1928 = vmatprep.subr.bf16.mxu0 0
        %1929 = vmatpush2.bf16.xpose.msra.mxu0 0
        %1930 = vmatprep.subr.bf16.mxu0 0
        %1931 = vmatpush2.bf16.xpose.msra.mxu0 0
        %1932 = vmatprep.subr.bf16.mxu0 0
        %1933 = vmatpush2.bf16.xpose.msra.mxu0 0
        %1934 = vmatprep.subr.bf16.mxu0 0
        %1935 = vmatpush2.bf16.xpose.msra.mxu0 0
        %1936 = vmatprep.subr.bf16.mxu0 0
        %1937 = vmatpush2.bf16.xpose.msra.mxu0 0
        %1938 = vmatprep.subr.bf16.mxu0 0
        %1939 = vmatpush2.bf16.xpose.msra.mxu0 0
        %1940 = vmatprep.subr.bf16.mxu0 0
        %1941 = vmatpush2.bf16.xpose.msra.mxu0 0
        %1942 = vmatprep.mubr.bf16.mxu0 0
        %1943 = vmatmul.mubr.bf16.gmra.mxu0 %v1905
        %v1944 = vpop.f32.mrf.mxu0
        %v1945 = vadd.f32 0.0, %v1944
        %v1946 = vpop.f32.mrf.mxu0
        %v1947 = vpop.f32.mrf.mxu0
        %v1948 = vadd.f32 0.0, %v1947
        %v1949 = vpop.f32.mrf.mxu0
        %1950 = vdwg.mxu0
        %v1951 = vmul.f32 %v1945, 0.35355338
        %v1952 = vmul.f32 %v1948, 0.35355338
        %v1953 = vadd.f32 %v1951, %v1044
        %v1954 = vadd.f32 %v1952, %v1045
        %v1955 = vsel %vm1429, %v1953, -inf
        %1956 = vmax.xlane.f32.xlu0 %v1955
        %v1957 = vpop.xlane.xlu0 %1956
        %v1958 = vsel %vm1429, %v1954, -inf
        %1959 = vmax.xlane.f32.xlu0 %v1958
        %v1960 = vpop.xlane.xlu0 %1959
        %v1961 = vsub.f32 %v1953, %v1957
        %v1962 = vsub.f32 %v1954, %v1960
        %v1963 = vmul.f32 %v1961, 1.442695
        %v1964 = vpow.pop %v1963
        %v1965 = vmul.f32 %v1962, 1.442695
        %v1966 = vpow.pop %v1965
        %v1967 = vsel %vm1429, %v1964, 0.0
        %1968 = vadd.xlane.f32.xlu0 %v1967
        %v1969 = vpop.xlane.xlu0 %1968
        %v1970 = vsel %vm1429, %v1966, 0.0
        %1971 = vadd.xlane.f32.xlu0 %v1970
        %v1972 = vpop.xlane.xlu0 %1971
        %v1973 = vrcp.pop %v1969
        %v1974 = vrcp.pop %v1972
        %v1975 = vmul.f32 %v1964, %v1973
        %v1976 = vmul.f32 %v1966, %v1974
        %v1977 = vpack.c.bf16 %v1976, %v1975
        %1978 = vrot.lane.b32.xlu0 %v1376, 104
        %v1979 = vpop.permute.xlu0 %1978
        %v1982 = vsel %vm1429, %v1977, 0
        %1984 = vmatprep.subr.bf16.mxu0 0
        %1985 = vmatpush1.bf16.msra.mxu0 0
        %1986 = vmatprep.subr.bf16.mxu0 0
        %1987 = vmatpush1.bf16.msra.mxu0 0
        %1988 = vmatprep.subr.bf16.mxu0 0
        %1989 = vmatpush1.bf16.msra.mxu0 0
        %1990 = vmatprep.subr.bf16.mxu0 0
        %1991 = vmatpush1.bf16.msra.mxu0 0
        %1992 = vmatprep.subr.bf16.mxu0 0
        %1993 = vmatpush1.bf16.msra.mxu0 0
        %1994 = vmatprep.subr.bf16.mxu0 0
        %1995 = vmatpush1.bf16.msra.mxu0 0
        %1996 = vmatprep.subr.bf16.mxu0 0
        %1997 = vmatpush1.bf16.msra.mxu0 0
        %1998 = vmatprep.subr.bf16.mxu0 0
        %1999 = vmatpush1.bf16.msra.mxu0 %v1979
        %2000 = vmatprep.subr.bf16.mxu0 0
        %2001 = vmatpush2.bf16.msra.mxu0 0
        %2002 = vmatprep.subr.bf16.mxu0 0
        %2003 = vmatpush2.bf16.msra.mxu0 0
        %2004 = vmatprep.subr.bf16.mxu0 0
        %2005 = vmatpush2.bf16.msra.mxu0 0
        %2006 = vmatprep.subr.bf16.mxu0 0
        %2007 = vmatpush2.bf16.msra.mxu0 0
        %2008 = vmatprep.subr.bf16.mxu0 0
        %2009 = vmatpush2.bf16.msra.mxu0 0
        %2010 = vmatprep.subr.bf16.mxu0 0
        %2011 = vmatpush2.bf16.msra.mxu0 0
        %2012 = vmatprep.subr.bf16.mxu0 0
        %2013 = vmatpush2.bf16.msra.mxu0 0
        %2014 = vmatprep.subr.bf16.mxu0 0
        %2015 = vmatpush2.bf16.msra.mxu0 0
        %2016 = vmatprep.mubr.bf16.mxu0 0
        %2017 = vmatmul.mubr.bf16.gmra.mxu0 %v1982
        %v2018 = vpop.f32.mrf.mxu0
        %v2019 = vadd.f32 0.0, %v2018
        %v2020 = vpop.f32.mrf.mxu0
        %v2021 = vpop.f32.mrf.mxu0
        %v2022 = vadd.f32 0.0, %v2021
        %v2023 = vpop.f32.mrf.mxu0
        %2024 = vdwg.mxu0
        %v2025 = vpack.c.bf16 %v2022, %v2019
        %v2026 = vld [vmem:[%s1004 + $0xc] sm:$0xf]
        %v2028 = vsel %vm1377, %v2025, 0
        %v2031 = vsel %vm1632, %v2026, 0
        %2033 = vmatprep.subr.bf16.mxu0 0
        %2034 = vmatpush1.bf16.msra.mxu0 0
        %2035 = vmatprep.subr.bf16.mxu0 0
        %2036 = vmatpush1.bf16.msra.mxu0 0
        %2037 = vmatprep.subr.bf16.mxu0 0
        %2038 = vmatpush1.bf16.msra.mxu0 0
        %2039 = vmatprep.subr.bf16.mxu0 0
        %2040 = vmatpush1.bf16.msra.mxu0 0
        %2041 = vmatprep.subr.bf16.mxu0 0
        %2042 = vmatpush1.bf16.msra.mxu0 0
        %2043 = vmatprep.subr.bf16.mxu0 0
        %2044 = vmatpush1.bf16.msra.mxu0 0
        %2045 = vmatprep.subr.bf16.mxu0 0
        %2046 = vmatpush1.bf16.msra.mxu0 0
        %2047 = vmatprep.subr.bf16.mxu0 0
        %2048 = vmatpush1.bf16.msra.mxu0 %v2031
        %2049 = vmatprep.subr.bf16.mxu0 0
        %2050 = vmatpush2.bf16.msra.mxu0 0
        %2051 = vmatprep.subr.bf16.mxu0 0
        %2052 = vmatpush2.bf16.msra.mxu0 0
        %2053 = vmatprep.subr.bf16.mxu0 0
        %2054 = vmatpush2.bf16.msra.mxu0 0
        %2055 = vmatprep.subr.bf16.mxu0 0
        %2056 = vmatpush2.bf16.msra.mxu0 0
        %2057 = vmatprep.subr.bf16.mxu0 0
        %2058 = vmatpush2.bf16.msra.mxu0 0
        %2059 = vmatprep.subr.bf16.mxu0 0
        %2060 = vmatpush2.bf16.msra.mxu0 0
        %2061 = vmatprep.subr.bf16.mxu0 0
        %2062 = vmatpush2.bf16.msra.mxu0 0
        %2063 = vmatprep.subr.bf16.mxu0 0
        %2064 = vmatpush2.bf16.msra.mxu0 0
        %2065 = vmatprep.mubr.bf16.mxu0 0
        %2066 = vmatmul.mubr.bf16.gmra.mxu0 %v2028
        %v2067 = vpop.f32.mrf.mxu0
        %v2068 = vadd.f32 0.0, %v2067
        %v2069 = vpop.f32.mrf.mxu0
        %v2070 = vpop.f32.mrf.mxu0
        %v2071 = vadd.f32 0.0, %v2070
        %v2072 = vpop.f32.mrf.mxu0
        %2073 = vdwg.mxu0
        %v2074 = vadd.f32 %v1898, %v2068
        %v2075 = vadd.f32 %v1899, %v2071
        %v2076 = vld [vmem:[%s1008] sm:$0x1]
        %v2078 = vlaneseq
        %v2079 = vshrl.u32 %v2078, 7
        %v2080 = vsub.s32 0, %v2079
        %v2081 = vrot.slane %v2076, %v2080
        %v2083 = vadd.f32 %v2074, %v2081
        %v2084 = vadd.f32 %v2075, %v2081
        %v2085 = vadd.f32 %v1176, %v2083
        %v2086 = vadd.f32 %v1177, %v2084
        %v2087 = vld [vmem:[%s1012] sm:$0x1]
        %v2088 = vld [vmem:[%s1016] sm:$0x1]
        %v2089 = vsel %vm1134, %v2085, 0.0
        %2090 = vadd.xlane.f32.xlu0 %v2089
        %v2091 = vpop.xlane.xlu0 %2090
        %v2092 = vsel %vm1134, %v2086, 0.0
        %2093 = vadd.xlane.f32.xlu0 %v2092
        %v2094 = vpop.xlane.xlu0 %2093
        %v2095 = vmul.f32 %v2091, %v1141
        %v2096 = vmul.f32 %v2094, %v1141
        %v2097 = vsub.f32 %v2085, %v2095
        %v2098 = vsub.f32 %v2086, %v2096
        %v2099 = vmul.f32 %v2097, %v2097
        %v2100 = vmul.f32 %v2098, %v2098
        %v2101 = vsel %vm1134, %v2099, 0.0
        %2102 = vadd.xlane.f32.xlu0 %v2101
        %v2103 = vpop.xlane.xlu0 %2102
        %v2104 = vsel %vm1134, %v2100, 0.0
        %2105 = vadd.xlane.f32.xlu0 %v2104
        %v2106 = vpop.xlane.xlu0 %2105
        %v2107 = vmul.f32 %v2103, %v1141
        %v2108 = vmul.f32 %v2106, %v1141
        %v2109 = vadd.f32 %v2107, 1e-12
        %v2110 = vadd.f32 %v2108, 1e-12
        %v2111 = vrsqrt.pop %v2109
        %v2112 = vrsqrt.pop %v2110
        %v2113 = vmul.f32 %v2097, %v2111
        %v2114 = vmul.f32 %v2098, %v2112
        %v2116 = vlaneseq
        %v2117 = vshrl.u32 %v2116, 7
        %v2118 = vsub.s32 0, %v2117
        %v2119 = vrot.slane %v2087, %v2118
        %v2121 = vmul.f32 %v2113, %v2119
        %v2122 = vmul.f32 %v2114, %v2119
        %v2124 = vlaneseq
        %v2125 = vshrl.u32 %v2124, 7
        %v2126 = vsub.s32 0, %v2125
        %v2127 = vrot.slane %v2088, %v2126
        %v2129 = vadd.f32 %v2121, %v2127
        %v2130 = vadd.f32 %v2122, %v2127
        %v2131 = vpack.c.bf16 %v2130, %v2129
        %v2132 = vld [vmem:[%s1021] sm:$0xf]
        %v2133 = vld [vmem:[%s1021 + $0x4] sm:$0xf]
        %v2134 = vld [vmem:[%s1021 + $0x8] sm:$0xf]
        %v2135 = vld [vmem:[%s1021 + $0xc] sm:$0xf]
        %v2136 = vld [vmem:[%s1025] sm:$0x1]
        %v2138 = vlaneseq
        %v2139 = vshrl.u32 %v2138, 7
        %v2140 = vsub.s32 0, %v2139
        %v2141 = vrot.slane %v2136, %v2140
        %v2147 = vunpack.c.l.b16 %v2132
        %v2148 = vunpack.c.l.b16 %v2133
        %v2149 = vunpack.c.l.b16 %v2134
        %v2150 = vunpack.c.l.b16 %v2135
        %v2151 = vpack.c.b16 %v2148, %v2147
        %v2152 = vpack.c.b16 %v2150, %v2149
        %v2156 = vsel %vm1134, %v2131, 0
        %2158 = vmatprep.subr.bf16.mxu0 0
        %2159 = vmatpush1.bf16.msra.mxu0 0
        %2160 = vmatprep.subr.bf16.mxu0 0
        %2161 = vmatpush1.bf16.msra.mxu0 0
        %2162 = vmatprep.subr.bf16.mxu0 0
        %2163 = vmatpush1.bf16.msra.mxu0 0
        %2164 = vmatprep.subr.bf16.mxu0 0
        %2165 = vmatpush1.bf16.msra.mxu0 0
        %2166 = vmatprep.subr.bf16.mxu0 0
        %2167 = vmatpush1.bf16.msra.mxu0 0
        %2168 = vmatprep.subr.bf16.mxu0 0
        %2169 = vmatpush1.bf16.msra.mxu0 0
        %2170 = vmatprep.subr.bf16.mxu0 0
        %2171 = vmatpush1.bf16.msra.mxu0 %v2152
        %2172 = vmatprep.subr.bf16.mxu0 0
        %2173 = vmatpush1.bf16.msra.mxu0 %v2151
        %2174 = vmatprep.subr.bf16.mxu0 0
        %2175 = vmatpush2.bf16.msra.mxu0 0
        %2176 = vmatprep.subr.bf16.mxu0 0
        %2177 = vmatpush2.bf16.msra.mxu0 0
        %2178 = vmatprep.subr.bf16.mxu0 0
        %2179 = vmatpush2.bf16.msra.mxu0 0
        %2180 = vmatprep.subr.bf16.mxu0 0
        %2181 = vmatpush2.bf16.msra.mxu0 0
        %2182 = vmatprep.subr.bf16.mxu0 0
        %2183 = vmatpush2.bf16.msra.mxu0 0
        %2184 = vmatprep.subr.bf16.mxu0 0
        %2185 = vmatpush2.bf16.msra.mxu0 0
        %2186 = vmatprep.subr.bf16.mxu0 0
        %2187 = vmatpush2.bf16.msra.mxu0 0
        %2188 = vmatprep.subr.bf16.mxu0 0
        %2189 = vmatpush2.bf16.msra.mxu0 0
        %2190 = vmatprep.mubr.bf16.mxu0 0
        %2191 = vmatmul.mubr.bf16.gmra.mxu0 %v2156
        %v2192 = vpop.f32.mrf.mxu0
        %v2193 = vadd.f32 %v2141, %v2192
        %v2194 = vpop.f32.mrf.mxu0
        %v2195 = vpop.f32.mrf.mxu0
        %v2196 = vadd.f32 %v2141, %v2195
        %v2197 = vpop.f32.mrf.mxu0
        %2198 = vdwg.mxu0
        %v2199 = vmul.f32 %v2193, 0.5
        %v2200 = vmul.f32 %v2196, 0.5
        %v2201 = vmul.f32 %v2193, 0.044715
        %v2202 = vmul.f32 %v2196, 0.044715
        %v2203 = vmul.f32 %v2201, %v2193
        %v2204 = vmul.f32 %v2202, %v2196
        %v2205 = vmul.f32 %v2203, %v2193
        %v2206 = vmul.f32 %v2204, %v2196
        %v2207 = vadd.f32 %v2193, %v2205
        %v2208 = vadd.f32 %v2196, %v2206
        %v2209 = vmul.f32 %v2207, 0.7978846
        %v2210 = vmul.f32 %v2208, 0.7978846
        %v2211 = vtanh.pop %v2209
        %v2212 = vtanh.pop %v2210
        %v2213 = vadd.f32 %v2211, 1.0
        %v2214 = vadd.f32 %v2212, 1.0
        %v2215 = vmul.f32 %v2199, %v2213
        %v2216 = vmul.f32 %v2200, %v2214
        %v2217 = vpack.c.bf16 %v2216, %v2215
        %v2218 = vld [vmem:[%s1030] sm:$0xf]
        %v2219 = vld [vmem:[%s1030 + $0x4] sm:$0xf]
        %v2220 = vld [vmem:[%s1030 + $0x8] sm:$0xf]
        %v2221 = vld [vmem:[%s1030 + $0xc] sm:$0xf]
        %v2222 = vld [vmem:[%s1030 + $0x10] sm:$0xf]
        %v2223 = vld [vmem:[%s1030 + $0x14] sm:$0xf]
        %v2224 = vld [vmem:[%s1030 + $0x18] sm:$0xf]
        %v2225 = vld [vmem:[%s1030 + $0x1c] sm:$0xf]
        %v2226 = vld [vmem:[%s1034] sm:$0x1]
        %v2228 = vlaneseq
        %v2229 = vshrl.u32 %v2228, 7
        %v2230 = vsub.s32 0, %v2229
        %v2231 = vrot.slane %v2226, %v2230
        %v2241 = vunpack.c.l.b16 %v2218
        %v2242 = vunpack.c.l.b16 %v2219
        %v2243 = vunpack.c.l.b16 %v2220
        %v2244 = vunpack.c.l.b16 %v2221
        %v2245 = vunpack.c.l.b16 %v2222
        %v2246 = vunpack.c.l.b16 %v2223
        %v2247 = vunpack.c.l.b16 %v2224
        %v2248 = vunpack.c.l.b16 %v2225
        %v2249 = vpack.c.b16 %v2242, %v2241
        %v2250 = vpack.c.b16 %v2244, %v2243
        %v2251 = vpack.c.b16 %v2246, %v2245
        %v2252 = vpack.c.b16 %v2248, %v2247
        %vm2257 = vcmask 523264
        %v2259 = vsel %vm2257, %v2217, 0
        %2261 = vmatprep.subr.bf16.mxu0 0
        %2262 = vmatpush1.bf16.msra.mxu0 0
        %2263 = vmatprep.subr.bf16.mxu0 0
        %2264 = vmatpush1.bf16.msra.mxu0 0
        %2265 = vmatprep.subr.bf16.mxu0 0
        %2266 = vmatpush1.bf16.msra.mxu0 0
        %2267 = vmatprep.subr.bf16.mxu0 0
        %2268 = vmatpush1.bf16.msra.mxu0 0
        %2269 = vmatprep.subr.bf16.mxu0 0
        %2270 = vmatpush1.bf16.msra.mxu0 %v2252
        %2271 = vmatprep.subr.bf16.mxu0 0
        %2272 = vmatpush1.bf16.msra.mxu0 %v2251
        %2273 = vmatprep.subr.bf16.mxu0 0
        %2274 = vmatpush1.bf16.msra.mxu0 %v2250
        %2275 = vmatprep.subr.bf16.mxu0 0
        %2276 = vmatpush1.bf16.msra.mxu0 %v2249
        %2277 = vmatprep.subr.bf16.mxu0 0
        %2278 = vmatpush2.bf16.msra.mxu0 0
        %2279 = vmatprep.subr.bf16.mxu0 0
        %2280 = vmatpush2.bf16.msra.mxu0 0
        %2281 = vmatprep.subr.bf16.mxu0 0
        %2282 = vmatpush2.bf16.msra.mxu0 0
        %2283 = vmatprep.subr.bf16.mxu0 0
        %2284 = vmatpush2.bf16.msra.mxu0 0
        %2285 = vmatprep.subr.bf16.mxu0 0
        %2286 = vmatpush2.bf16.msra.mxu0 0
        %2287 = vmatprep.subr.bf16.mxu0 0
        %2288 = vmatpush2.bf16.msra.mxu0 0
        %2289 = vmatprep.subr.bf16.mxu0 0
        %2290 = vmatpush2.bf16.msra.mxu0 0
        %2291 = vmatprep.subr.bf16.mxu0 0
        %2292 = vmatpush2.bf16.msra.mxu0 0
        %2293 = vmatprep.mubr.bf16.mxu0 0
        %2294 = vmatmul.mubr.bf16.gmra.mxu0 %v2259
        %v2295 = vpop.f32.mrf.mxu0
        %v2296 = vadd.f32 %v2231, %v2295
        %v2297 = vpop.f32.mrf.mxu0
        %v2298 = vpop.f32.mrf.mxu0
        %v2299 = vadd.f32 %v2231, %v2298
        %v2300 = vpop.f32.mrf.mxu0
        %2301 = vdwg.mxu0
        %v2302 = vadd.f32 %v2129, %v2296
        %v2303 = vadd.f32 %v2130, %v2299
        %v2304 = vld [vmem:[%s1038] sm:$0x1]
        %v2305 = vld [vmem:[%s815] sm:$0x1]
        %v2306 = vsel %vm1134, %v2302, 0.0
        %2307 = vadd.xlane.f32.xlu0 %v2306
        %v2308 = vpop.xlane.xlu0 %2307
        %v2309 = vsel %vm1134, %v2303, 0.0
        %2310 = vadd.xlane.f32.xlu0 %v2309
        %v2311 = vpop.xlane.xlu0 %2310
        %v2312 = vmul.f32 %v2308, %v1141
        %v2313 = vmul.f32 %v2311, %v1141
        %v2314 = vsub.f32 %v2302, %v2312
        %v2315 = vsub.f32 %v2303, %v2313
        %v2316 = vmul.f32 %v2314, %v2314
        %v2317 = vmul.f32 %v2315, %v2315
        %v2318 = vsel %vm1134, %v2316, 0.0
        %2319 = vadd.xlane.f32.xlu0 %v2318
        %v2320 = vpop.xlane.xlu0 %2319
        %v2321 = vsel %vm1134, %v2317, 0.0
        %2322 = vadd.xlane.f32.xlu0 %v2321
        %v2323 = vpop.xlane.xlu0 %2322
        %v2324 = vmul.f32 %v2320, %v1141
        %v2325 = vmul.f32 %v2323, %v1141
        %v2326 = vadd.f32 %v2324, 1e-12
        %v2327 = vadd.f32 %v2325, 1e-12
        %v2328 = vrsqrt.pop %v2326
        %v2329 = vrsqrt.pop %v2327
        %v2330 = vmul.f32 %v2314, %v2328
        %v2331 = vmul.f32 %v2315, %v2329
        %v2333 = vlaneseq
        %v2334 = vshrl.u32 %v2333, 7
        %v2335 = vsub.s32 0, %v2334
        %v2336 = vrot.slane %v2304, %v2335
        %v2338 = vmul.f32 %v2330, %v2336
        %v2339 = vmul.f32 %v2331, %v2336
        %v2341 = vlaneseq
        %v2342 = vshrl.u32 %v2341, 7
        %v2343 = vsub.s32 0, %v2342
        %v2344 = vrot.slane %v2305, %v2343
        %v2346 = vadd.f32 %v2338, %v2344
        %v2347 = vadd.f32 %v2339, %v2344
        %v2348 = vpack.c.bf16 %v2347, %v2346
        %s2349 = scalar_lea.vmem %s977, 16
        %v2350 = vld [vmem:[%s2349] sm:$0xf]
        %v2351 = vld [vmem:[%s2349 + $0x4] sm:$0xf]
        %v2352 = vld [vmem:[%s2349 + $0x8] sm:$0xf]
        %v2353 = vld [vmem:[%s2349 + $0xc] sm:$0xf]
        %s2354 = scalar_lea.vmem %s981, 1
        %v2355 = vld [vmem:[%s2354] sm:$0x1]
        %v2357 = vlaneseq
        %v2358 = vshrl.u32 %v2357, 7
        %v2359 = vsub.s32 0, %v2358
        %v2360 = vrot.slane %v2355, %v2359
        %v2366 = vunpack.c.l.b16 %v2350
        %v2367 = vunpack.c.l.b16 %v2351
        %v2368 = vunpack.c.l.b16 %v2352
        %v2369 = vunpack.c.l.b16 %v2353
        %v2370 = vpack.c.b16 %v2367, %v2366
        %v2371 = vpack.c.b16 %v2369, %v2368
        %v2375 = vsel %vm1134, %v2348, 0
        %2377 = vmatprep.subr.bf16.mxu0 0
        %2378 = vmatpush1.bf16.msra.mxu0 0
        %2379 = vmatprep.subr.bf16.mxu0 0
        %2380 = vmatpush1.bf16.msra.mxu0 0
        %2381 = vmatprep.subr.bf16.mxu0 0
        %2382 = vmatpush1.bf16.msra.mxu0 0
        %2383 = vmatprep.subr.bf16.mxu0 0
        %2384 = vmatpush1.bf16.msra.mxu0 0
        %2385 = vmatprep.subr.bf16.mxu0 0
        %2386 = vmatpush1.bf16.msra.mxu0 0
        %2387 = vmatprep.subr.bf16.mxu0 0
        %2388 = vmatpush1.bf16.msra.mxu0 0
        %2389 = vmatprep.subr.bf16.mxu0 0
        %2390 = vmatpush1.bf16.msra.mxu0 %v2371
        %2391 = vmatprep.subr.bf16.mxu0 0
        %2392 = vmatpush1.bf16.msra.mxu0 %v2370
        %2393 = vmatprep.subr.bf16.mxu0 0
        %2394 = vmatpush2.bf16.msra.mxu0 0
        %2395 = vmatprep.subr.bf16.mxu0 0
        %2396 = vmatpush2.bf16.msra.mxu0 0
        %2397 = vmatprep.subr.bf16.mxu0 0
        %2398 = vmatpush2.bf16.msra.mxu0 0
        %2399 = vmatprep.subr.bf16.mxu0 0
        %2400 = vmatpush2.bf16.msra.mxu0 0
        %2401 = vmatprep.subr.bf16.mxu0 0
        %2402 = vmatpush2.bf16.msra.mxu0 0
        %2403 = vmatprep.subr.bf16.mxu0 0
        %2404 = vmatpush2.bf16.msra.mxu0 0
        %2405 = vmatprep.subr.bf16.mxu0 0
        %2406 = vmatpush2.bf16.msra.mxu0 0
        %2407 = vmatprep.subr.bf16.mxu0 0
        %2408 = vmatpush2.bf16.msra.mxu0 0
        %2409 = vmatprep.mubr.bf16.mxu0 0
        %2410 = vmatmul.mubr.bf16.gmra.mxu0 %v2375
        %v2411 = vpop.f32.mrf.mxu0
        %v2412 = vadd.f32 %v2360, %v2411
        %v2413 = vpop.f32.mrf.mxu0
        %v2414 = vpop.f32.mrf.mxu0
        %v2415 = vadd.f32 %v2360, %v2414
        %v2416 = vpop.f32.mrf.mxu0
        %2417 = vdwg.mxu0
        %s2418 = scalar_lea.vmem %s986, 16
        %v2419 = vld [vmem:[%s2418] sm:$0xf]
        %v2420 = vld [vmem:[%s2418 + $0x4] sm:$0xf]
        %v2421 = vld [vmem:[%s2418 + $0x8] sm:$0xf]
        %v2422 = vld [vmem:[%s2418 + $0xc] sm:$0xf]
        %s2423 = scalar_lea.vmem %s990, 1
        %v2424 = vld [vmem:[%s2423] sm:$0x1]
        %v2426 = vlaneseq
        %v2427 = vshrl.u32 %v2426, 7
        %v2428 = vsub.s32 0, %v2427
        %v2429 = vrot.slane %v2424, %v2428
        %v2435 = vunpack.c.l.b16 %v2419
        %v2436 = vunpack.c.l.b16 %v2420
        %v2437 = vunpack.c.l.b16 %v2421
        %v2438 = vunpack.c.l.b16 %v2422
        %v2439 = vpack.c.b16 %v2436, %v2435
        %v2440 = vpack.c.b16 %v2438, %v2437
        %2443 = vmatprep.subr.bf16.mxu0 0
        %2444 = vmatpush1.bf16.msra.mxu0 0
        %2445 = vmatprep.subr.bf16.mxu0 0
        %2446 = vmatpush1.bf16.msra.mxu0 0
        %2447 = vmatprep.subr.bf16.mxu0 0
        %2448 = vmatpush1.bf16.msra.mxu0 0
        %2449 = vmatprep.subr.bf16.mxu0 0
        %2450 = vmatpush1.bf16.msra.mxu0 0
        %2451 = vmatprep.subr.bf16.mxu0 0
        %2452 = vmatpush1.bf16.msra.mxu0 0
        %2453 = vmatprep.subr.bf16.mxu0 0
        %2454 = vmatpush1.bf16.msra.mxu0 0
        %2455 = vmatprep.subr.bf16.mxu0 0
        %2456 = vmatpush1.bf16.msra.mxu0 %v2440
        %2457 = vmatprep.subr.bf16.mxu0 0
        %2458 = vmatpush1.bf16.msra.mxu0 %v2439
        %2459 = vmatprep.subr.bf16.mxu0 0
        %2460 = vmatpush2.bf16.msra.mxu0 0
        %2461 = vmatprep.subr.bf16.mxu0 0
        %2462 = vmatpush2.bf16.msra.mxu0 0
        %2463 = vmatprep.subr.bf16.mxu0 0
        %2464 = vmatpush2.bf16.msra.mxu0 0
        %2465 = vmatprep.subr.bf16.mxu0 0
        %2466 = vmatpush2.bf16.msra.mxu0 0
        %2467 = vmatprep.subr.bf16.mxu0 0
        %2468 = vmatpush2.bf16.msra.mxu0 0
        %2469 = vmatprep.subr.bf16.mxu0 0
        %2470 = vmatpush2.bf16.msra.mxu0 0
        %2471 = vmatprep.subr.bf16.mxu0 0
        %2472 = vmatpush2.bf16.msra.mxu0 0
        %2473 = vmatprep.subr.bf16.mxu0 0
        %2474 = vmatpush2.bf16.msra.mxu0 0
        %2475 = vmatprep.mubr.bf16.mxu0 0
        %2476 = vmatmul.mubr.bf16.gmra.mxu0 %v2375
        %v2477 = vpop.f32.mrf.mxu0
        %v2478 = vadd.f32 %v2429, %v2477
        %v2479 = vpop.f32.mrf.mxu0
        %v2480 = vpop.f32.mrf.mxu0
        %v2481 = vadd.f32 %v2429, %v2480
        %v2482 = vpop.f32.mrf.mxu0
        %2483 = vdwg.mxu0
        %s2484 = scalar_lea.vmem %s995, 16
        %v2485 = vld [vmem:[%s2484] sm:$0xf]
        %v2486 = vld [vmem:[%s2484 + $0x4] sm:$0xf]
        %v2487 = vld [vmem:[%s2484 + $0x8] sm:$0xf]
        %v2488 = vld [vmem:[%s2484 + $0xc] sm:$0xf]
        %s2489 = scalar_lea.vmem %s999, 1
        %v2490 = vld [vmem:[%s2489] sm:$0x1]
        %v2492 = vlaneseq
        %v2493 = vshrl.u32 %v2492, 7
        %v2494 = vsub.s32 0, %v2493
        %v2495 = vrot.slane %v2490, %v2494
        %v2501 = vunpack.c.l.b16 %v2485
        %v2502 = vunpack.c.l.b16 %v2486
        %v2503 = vunpack.c.l.b16 %v2487
        %v2504 = vunpack.c.l.b16 %v2488
        %v2505 = vpack.c.b16 %v2502, %v2501
        %v2506 = vpack.c.b16 %v2504, %v2503
        %2509 = vmatprep.subr.bf16.mxu0 0
        %2510 = vmatpush1.bf16.msra.mxu0 0
        %2511 = vmatprep.subr.bf16.mxu0 0
        %2512 = vmatpush1.bf16.msra.mxu0 0
        %2513 = vmatprep.subr.bf16.mxu0 0
        %2514 = vmatpush1.bf16.msra.mxu0 0
        %2515 = vmatprep.subr.bf16.mxu0 0
        %2516 = vmatpush1.bf16.msra.mxu0 0
        %2517 = vmatprep.subr.bf16.mxu0 0
        %2518 = vmatpush1.bf16.msra.mxu0 0
        %2519 = vmatprep.subr.bf16.mxu0 0
        %2520 = vmatpush1.bf16.msra.mxu0 0
        %2521 = vmatprep.subr.bf16.mxu0 0
        %2522 = vmatpush1.bf16.msra.mxu0 %v2506
        %2523 = vmatprep.subr.bf16.mxu0 0
        %2524 = vmatpush1.bf16.msra.mxu0 %v2505
        %2525 = vmatprep.subr.bf16.mxu0 0
        %2526 = vmatpush2.bf16.msra.mxu0 0
        %2527 = vmatprep.subr.bf16.mxu0 0
        %2528 = vmatpush2.bf16.msra.mxu0 0
        %2529 = vmatprep.subr.bf16.mxu0 0
        %2530 = vmatpush2.bf16.msra.mxu0 0
        %2531 = vmatprep.subr.bf16.mxu0 0
        %2532 = vmatpush2.bf16.msra.mxu0 0
        %2533 = vmatprep.subr.bf16.mxu0 0
        %2534 = vmatpush2.bf16.msra.mxu0 0
        %2535 = vmatprep.subr.bf16.mxu0 0
        %2536 = vmatpush2.bf16.msra.mxu0 0
        %2537 = vmatprep.subr.bf16.mxu0 0
        %2538 = vmatpush2.bf16.msra.mxu0 0
        %2539 = vmatprep.subr.bf16.mxu0 0
        %2540 = vmatpush2.bf16.msra.mxu0 0
        %2541 = vmatprep.mubr.bf16.mxu0 0
        %2542 = vmatmul.mubr.bf16.gmra.mxu0 %v2375
        %v2543 = vpop.f32.mrf.mxu0
        %v2544 = vadd.f32 %v2495, %v2543
        %v2545 = vpop.f32.mrf.mxu0
        %v2546 = vpop.f32.mrf.mxu0
        %v2547 = vadd.f32 %v2495, %v2546
        %v2548 = vpop.f32.mrf.mxu0
        %2549 = vdwg.mxu0
        %v2550 = vpack.c.bf16 %v2415, %v2412
        %v2551 = vpack.c.bf16 %v2481, %v2478
        %v2552 = vpack.c.bf16 %v2547, %v2544
        %v2554 = vsel %vm1377, %v2550, 0
        %v2557 = vsel %vm1377, %v2551, 0
        %2559 = vmatprep.subr.bf16.mxu0 0
        %2560 = vmatpush1.bf16.xpose.msra.mxu0 0
        %2561 = vmatprep.subr.bf16.mxu0 0
        %2562 = vmatpush1.bf16.xpose.msra.mxu0 0
        %2563 = vmatprep.subr.bf16.mxu0 0
        %2564 = vmatpush1.bf16.xpose.msra.mxu0 0
        %2565 = vmatprep.subr.bf16.mxu0 0
        %2566 = vmatpush1.bf16.xpose.msra.mxu0 0
        %2567 = vmatprep.subr.bf16.mxu0 0
        %2568 = vmatpush1.bf16.xpose.msra.mxu0 0
        %2569 = vmatprep.subr.bf16.mxu0 0
        %2570 = vmatpush1.bf16.xpose.msra.mxu0 0
        %2571 = vmatprep.subr.bf16.mxu0 0
        %2572 = vmatpush1.bf16.xpose.msra.mxu0 0
        %2573 = vmatprep.subr.bf16.mxu0 0
        %2574 = vmatpush1.bf16.xpose.msra.mxu0 %v2557
        %2575 = vmatprep.subr.bf16.mxu0 0
        %2576 = vmatpush2.bf16.xpose.msra.mxu0 0
        %2577 = vmatprep.subr.bf16.mxu0 0
        %2578 = vmatpush2.bf16.xpose.msra.mxu0 0
        %2579 = vmatprep.subr.bf16.mxu0 0
        %2580 = vmatpush2.bf16.xpose.msra.mxu0 0
        %2581 = vmatprep.subr.bf16.mxu0 0
        %2582 = vmatpush2.bf16.xpose.msra.mxu0 0
        %2583 = vmatprep.subr.bf16.mxu0 0
        %2584 = vmatpush2.bf16.xpose.msra.mxu0 0
        %2585 = vmatprep.subr.bf16.mxu0 0
        %2586 = vmatpush2.bf16.xpose.msra.mxu0 0
        %2587 = vmatprep.subr.bf16.mxu0 0
        %2588 = vmatpush2.bf16.xpose.msra.mxu0 0
        %2589 = vmatprep.subr.bf16.mxu0 0
        %2590 = vmatpush2.bf16.xpose.msra.mxu0 0
        %2591 = vmatprep.mubr.bf16.mxu0 0
        %2592 = vmatmul.mubr.bf16.gmra.mxu0 %v2554
        %v2593 = vpop.f32.mrf.mxu0
        %v2594 = vadd.f32 0.0, %v2593
        %v2595 = vpop.f32.mrf.mxu0
        %v2596 = vpop.f32.mrf.mxu0
        %v2597 = vadd.f32 0.0, %v2596
        %v2598 = vpop.f32.mrf.mxu0
        %2599 = vdwg.mxu0
        %v2600 = vmul.f32 %v2594, 0.35355338
        %v2601 = vmul.f32 %v2597, 0.35355338
        %v2602 = vadd.f32 %v2600, %v1044
        %v2603 = vadd.f32 %v2601, %v1045
        %v2604 = vsel %vm1429, %v2602, -inf
        %2605 = vmax.xlane.f32.xlu0 %v2604
        %v2606 = vpop.xlane.xlu0 %2605
        %v2607 = vsel %vm1429, %v2603, -inf
        %2608 = vmax.xlane.f32.xlu0 %v2607
        %v2609 = vpop.xlane.xlu0 %2608
        %v2610 = vsub.f32 %v2602, %v2606
        %v2611 = vsub.f32 %v2603, %v2609
        %v2612 = vmul.f32 %v2610, 1.442695
        %v2613 = vpow.pop %v2612
        %v2614 = vmul.f32 %v2611, 1.442695
        %v2615 = vpow.pop %v2614
        %v2616 = vsel %vm1429, %v2613, 0.0
        %2617 = vadd.xlane.f32.xlu0 %v2616
        %v2618 = vpop.xlane.xlu0 %2617
        %v2619 = vsel %vm1429, %v2615, 0.0
        %2620 = vadd.xlane.f32.xlu0 %v2619
        %v2621 = vpop.xlane.xlu0 %2620
        %v2622 = vrcp.pop %v2618
        %v2623 = vrcp.pop %v2621
        %v2624 = vmul.f32 %v2613, %v2622
        %v2625 = vmul.f32 %v2615, %v2623
        %v2626 = vpack.c.bf16 %v2625, %v2624
        %v2628 = vsel %vm1429, %v2626, 0
        %2630 = vmatprep.subr.bf16.mxu0 0
        %2631 = vmatpush1.bf16.msra.mxu0 0
        %2632 = vmatprep.subr.bf16.mxu0 0
        %2633 = vmatpush1.bf16.msra.mxu0 0
        %2634 = vmatprep.subr.bf16.mxu0 0
        %2635 = vmatpush1.bf16.msra.mxu0 0
        %2636 = vmatprep.subr.bf16.mxu0 0
        %2637 = vmatpush1.bf16.msra.mxu0 0
        %2638 = vmatprep.subr.bf16.mxu0 0
        %2639 = vmatpush1.bf16.msra.mxu0 0
        %2640 = vmatprep.subr.bf16.mxu0 0
        %2641 = vmatpush1.bf16.msra.mxu0 0
        %2642 = vmatprep.subr.bf16.mxu0 0
        %2643 = vmatpush1.bf16.msra.mxu0 0
        %2644 = vmatprep.subr.bf16.mxu0 0
        %2645 = vmatpush1.bf16.msra.mxu0 %v2552
        %2646 = vmatprep.subr.bf16.mxu0 0
        %2647 = vmatpush2.bf16.msra.mxu0 0
        %2648 = vmatprep.subr.bf16.mxu0 0
        %2649 = vmatpush2.bf16.msra.mxu0 0
        %2650 = vmatprep.subr.bf16.mxu0 0
        %2651 = vmatpush2.bf16.msra.mxu0 0
        %2652 = vmatprep.subr.bf16.mxu0 0
        %2653 = vmatpush2.bf16.msra.mxu0 0
        %2654 = vmatprep.subr.bf16.mxu0 0
        %2655 = vmatpush2.bf16.msra.mxu0 0
        %2656 = vmatprep.subr.bf16.mxu0 0
        %2657 = vmatpush2.bf16.msra.mxu0 0
        %2658 = vmatprep.subr.bf16.mxu0 0
        %2659 = vmatpush2.bf16.msra.mxu0 0
        %2660 = vmatprep.subr.bf16.mxu0 0
        %2661 = vmatpush2.bf16.msra.mxu0 0
        %2662 = vmatprep.mubr.bf16.mxu0 0
        %2663 = vmatmul.mubr.bf16.gmra.mxu0 %v2628
        %v2664 = vpop.f32.mrf.mxu0
        %v2665 = vadd.f32 0.0, %v2664
        %v2666 = vpop.f32.mrf.mxu0
        %v2667 = vpop.f32.mrf.mxu0
        %v2668 = vadd.f32 0.0, %v2667
        %v2669 = vpop.f32.mrf.mxu0
        %2670 = vdwg.mxu0
        %v2671 = vpack.c.bf16 %v2668, %v2665
        %s2672 = scalar_lea.vmem %s1004, 16
        %v2673 = vld [vmem:[%s2672] sm:$0xf]
        %2675 = vrot.lane.b32.xlu0 %v2550, 120
        %v2676 = vpop.permute.xlu0 %2675
        %2678 = vrot.lane.b32.xlu0 %v2551, 120
        %v2679 = vpop.permute.xlu0 %2678
        %v2681 = vsel %vm1377, %v2676, 0
        %v2684 = vsel %vm1377, %v2679, 0
        %2686 = vmatprep.subr.bf16.mxu0 0
        %2687 = vmatpush1.bf16.xpose.msra.mxu0 0
        %2688 = vmatprep.subr.bf16.mxu0 0
        %2689 = vmatpush1.bf16.xpose.msra.mxu0 0
        %2690 = vmatprep.subr.bf16.mxu0 0
        %2691 = vmatpush1.bf16.xpose.msra.mxu0 0
        %2692 = vmatprep.subr.bf16.mxu0 0
        %2693 = vmatpush1.bf16.xpose.msra.mxu0 0
        %2694 = vmatprep.subr.bf16.mxu0 0
        %2695 = vmatpush1.bf16.xpose.msra.mxu0 0
        %2696 = vmatprep.subr.bf16.mxu0 0
        %2697 = vmatpush1.bf16.xpose.msra.mxu0 0
        %2698 = vmatprep.subr.bf16.mxu0 0
        %2699 = vmatpush1.bf16.xpose.msra.mxu0 0
        %2700 = vmatprep.subr.bf16.mxu0 0
        %2701 = vmatpush1.bf16.xpose.msra.mxu0 %v2684
        %2702 = vmatprep.subr.bf16.mxu0 0
        %2703 = vmatpush2.bf16.xpose.msra.mxu0 0
        %2704 = vmatprep.subr.bf16.mxu0 0
        %2705 = vmatpush2.bf16.xpose.msra.mxu0 0
        %2706 = vmatprep.subr.bf16.mxu0 0
        %2707 = vmatpush2.bf16.xpose.msra.mxu0 0
        %2708 = vmatprep.subr.bf16.mxu0 0
        %2709 = vmatpush2.bf16.xpose.msra.mxu0 0
        %2710 = vmatprep.subr.bf16.mxu0 0
        %2711 = vmatpush2.bf16.xpose.msra.mxu0 0
        %2712 = vmatprep.subr.bf16.mxu0 0
        %2713 = vmatpush2.bf16.xpose.msra.mxu0 0
        %2714 = vmatprep.subr.bf16.mxu0 0
        %2715 = vmatpush2.bf16.xpose.msra.mxu0 0
        %2716 = vmatprep.subr.bf16.mxu0 0
        %2717 = vmatpush2.bf16.xpose.msra.mxu0 0
        %2718 = vmatprep.mubr.bf16.mxu0 0
        %2719 = vmatmul.mubr.bf16.gmra.mxu0 %v2681
        %v2720 = vpop.f32.mrf.mxu0
        %v2721 = vadd.f32 0.0, %v2720
        %v2722 = vpop.f32.mrf.mxu0
        %v2723 = vpop.f32.mrf.mxu0
        %v2724 = vadd.f32 0.0, %v2723
        %v2725 = vpop.f32.mrf.mxu0
        %2726 = vdwg.mxu0
        %v2727 = vmul.f32 %v2721, 0.35355338
        %v2728 = vmul.f32 %v2724, 0.35355338
        %v2729 = vadd.f32 %v2727, %v1044
        %v2730 = vadd.f32 %v2728, %v1045
        %v2731 = vsel %vm1429, %v2729, -inf
        %2732 = vmax.xlane.f32.xlu0 %v2731
        %v2733 = vpop.xlane.xlu0 %2732
        %v2734 = vsel %vm1429, %v2730, -inf
        %2735 = vmax.xlane.f32.xlu0 %v2734
        %v2736 = vpop.xlane.xlu0 %2735
        %v2737 = vsub.f32 %v2729, %v2733
        %v2738 = vsub.f32 %v2730, %v2736
        %v2739 = vmul.f32 %v2737, 1.442695
        %v2740 = vpow.pop %v2739
        %v2741 = vmul.f32 %v2738, 1.442695
        %v2742 = vpow.pop %v2741
        %v2743 = vsel %vm1429, %v2740, 0.0
        %2744 = vadd.xlane.f32.xlu0 %v2743
        %v2745 = vpop.xlane.xlu0 %2744
        %v2746 = vsel %vm1429, %v2742, 0.0
        %2747 = vadd.xlane.f32.xlu0 %v2746
        %v2748 = vpop.xlane.xlu0 %2747
        %v2749 = vrcp.pop %v2745
        %v2750 = vrcp.pop %v2748
        %v2751 = vmul.f32 %v2740, %v2749
        %v2752 = vmul.f32 %v2742, %v2750
        %v2753 = vpack.c.bf16 %v2752, %v2751
        %2755 = vrot.lane.b32.xlu0 %v2552, 120
        %v2756 = vpop.permute.xlu0 %2755
        %v2759 = vsel %vm1429, %v2753, 0
        %2761 = vmatprep.subr.bf16.mxu0 0
        %2762 = vmatpush1.bf16.msra.mxu0 0
        %2763 = vmatprep.subr.bf16.mxu0 0
        %2764 = vmatpush1.bf16.msra.mxu0 0
        %2765 = vmatprep.subr.bf16.mxu0 0
        %2766 = vmatpush1.bf16.msra.mxu0 0
        %2767 = vmatprep.subr.bf16.mxu0 0
        %2768 = vmatpush1.bf16.msra.mxu0 0
        %2769 = vmatprep.subr.bf16.mxu0 0
        %2770 = vmatpush1.bf16.msra.mxu0 0
        %2771 = vmatprep.subr.bf16.mxu0 0
        %2772 = vmatpush1.bf16.msra.mxu0 0
        %2773 = vmatprep.subr.bf16.mxu0 0
        %2774 = vmatpush1.bf16.msra.mxu0 0
        %2775 = vmatprep.subr.bf16.mxu0 0
        %2776 = vmatpush1.bf16.msra.mxu0 %v2756
        %2777 = vmatprep.subr.bf16.mxu0 0
        %2778 = vmatpush2.bf16.msra.mxu0 0
        %2779 = vmatprep.subr.bf16.mxu0 0
        %2780 = vmatpush2.bf16.msra.mxu0 0
        %2781 = vmatprep.subr.bf16.mxu0 0
        %2782 = vmatpush2.bf16.msra.mxu0 0
        %2783 = vmatprep.subr.bf16.mxu0 0
        %2784 = vmatpush2.bf16.msra.mxu0 0
        %2785 = vmatprep.subr.bf16.mxu0 0
        %2786 = vmatpush2.bf16.msra.mxu0 0
        %2787 = vmatprep.subr.bf16.mxu0 0
        %2788 = vmatpush2.bf16.msra.mxu0 0
        %2789 = vmatprep.subr.bf16.mxu0 0
        %2790 = vmatpush2.bf16.msra.mxu0 0
        %2791 = vmatprep.subr.bf16.mxu0 0
        %2792 = vmatpush2.bf16.msra.mxu0 0
        %2793 = vmatprep.mubr.bf16.mxu0 0
        %2794 = vmatmul.mubr.bf16.gmra.mxu0 %v2759
        %v2795 = vpop.f32.mrf.mxu0
        %v2796 = vadd.f32 0.0, %v2795
        %v2797 = vpop.f32.mrf.mxu0
        %v2798 = vpop.f32.mrf.mxu0
        %v2799 = vadd.f32 0.0, %v2798
        %v2800 = vpop.f32.mrf.mxu0
        %2801 = vdwg.mxu0
        %v2802 = vpack.c.bf16 %v2799, %v2796
        %v2803 = vld [vmem:[%s2672 + $0x4] sm:$0xf]
        %v2805 = vsel %vm1377, %v2802, 0
        %v2808 = vsel %vm1632, %v2803, 0
        %2810 = vmatprep.subr.bf16.mxu0 0
        %2811 = vmatpush1.bf16.msra.mxu0 0
        %2812 = vmatprep.subr.bf16.mxu0 0
        %2813 = vmatpush1.bf16.msra.mxu0 0
        %2814 = vmatprep.subr.bf16.mxu0 0
        %2815 = vmatpush1.bf16.msra.mxu0 0
        %2816 = vmatprep.subr.bf16.mxu0 0
        %2817 = vmatpush1.bf16.msra.mxu0 0
        %2818 = vmatprep.subr.bf16.mxu0 0
        %2819 = vmatpush1.bf16.msra.mxu0 0
        %2820 = vmatprep.subr.bf16.mxu0 0
        %2821 = vmatpush1.bf16.msra.mxu0 0
        %2822 = vmatprep.subr.bf16.mxu0 0
        %2823 = vmatpush1.bf16.msra.mxu0 0
        %2824 = vmatprep.subr.bf16.mxu0 0
        %2825 = vmatpush1.bf16.msra.mxu0 %v2808
        %2826 = vmatprep.subr.bf16.mxu0 0
        %2827 = vmatpush2.bf16.msra.mxu0 0
        %2828 = vmatprep.subr.bf16.mxu0 0
        %2829 = vmatpush2.bf16.msra.mxu0 0
        %2830 = vmatprep.subr.bf16.mxu0 0
        %2831 = vmatpush2.bf16.msra.mxu0 0
        %2832 = vmatprep.subr.bf16.mxu0 0
        %2833 = vmatpush2.bf16.msra.mxu0 0
        %2834 = vmatprep.subr.bf16.mxu0 0
        %2835 = vmatpush2.bf16.msra.mxu0 0
        %2836 = vmatprep.subr.bf16.mxu0 0
        %2837 = vmatpush2.bf16.msra.mxu0 0
        %2838 = vmatprep.subr.bf16.mxu0 0
        %2839 = vmatpush2.bf16.msra.mxu0 0
        %2840 = vmatprep.subr.bf16.mxu0 0
        %2841 = vmatpush2.bf16.msra.mxu0 0
        %2842 = vmatprep.mubr.bf16.mxu0 0
        %2843 = vmatmul.mubr.bf16.gmra.mxu0 %v2805
        %v2844 = vpop.f32.mrf.mxu0
        %v2845 = vadd.f32 0.0, %v2844
        %v2846 = vpop.f32.mrf.mxu0
        %v2847 = vpop.f32.mrf.mxu0
        %v2848 = vadd.f32 0.0, %v2847
        %v2849 = vpop.f32.mrf.mxu0
        %2850 = vdwg.mxu0
        %v2852 = vsel %vm1377, %v2671, 0
        %v2855 = vsel %vm1632, %v2673, 0
        %2857 = vmatprep.subr.bf16.mxu0 0
        %2858 = vmatpush1.bf16.msra.mxu0 0
        %2859 = vmatprep.subr.bf16.mxu0 0
        %2860 = vmatpush1.bf16.msra.mxu0 0
        %2861 = vmatprep.subr.bf16.mxu0 0
        %2862 = vmatpush1.bf16.msra.mxu0 0
        %2863 = vmatprep.subr.bf16.mxu0 0
        %2864 = vmatpush1.bf16.msra.mxu0 0
        %2865 = vmatprep.subr.bf16.mxu0 0
        %2866 = vmatpush1.bf16.msra.mxu0 0
        %2867 = vmatprep.subr.bf16.mxu0 0
        %2868 = vmatpush1.bf16.msra.mxu0 0
        %2869 = vmatprep.subr.bf16.mxu0 0
        %2870 = vmatpush1.bf16.msra.mxu0 0
        %2871 = vmatprep.subr.bf16.mxu0 0
        %2872 = vmatpush1.bf16.msra.mxu0 %v2855
        %2873 = vmatprep.subr.bf16.mxu0 0
        %2874 = vmatpush2.bf16.msra.mxu0 0
        %2875 = vmatprep.subr.bf16.mxu0 0
        %2876 = vmatpush2.bf16.msra.mxu0 0
        %2877 = vmatprep.subr.bf16.mxu0 0
        %2878 = vmatpush2.bf16.msra.mxu0 0
        %2879 = vmatprep.subr.bf16.mxu0 0
        %2880 = vmatpush2.bf16.msra.mxu0 0
        %2881 = vmatprep.subr.bf16.mxu0 0
        %2882 = vmatpush2.bf16.msra.mxu0 0
        %2883 = vmatprep.subr.bf16.mxu0 0
        %2884 = vmatpush2.bf16.msra.mxu0 0
        %2885 = vmatprep.subr.bf16.mxu0 0
        %2886 = vmatpush2.bf16.msra.mxu0 0
        %2887 = vmatprep.subr.bf16.mxu0 0
        %2888 = vmatpush2.bf16.msra.mxu0 0
        %2889 = vmatprep.mubr.bf16.mxu0 0
        %2890 = vmatmul.mubr.bf16.gmra.mxu0 %v2852
        %v2891 = vpop.f32.mrf.mxu0
        %v2892 = vadd.f32 %v2845, %v2891
        %v2893 = vpop.f32.mrf.mxu0
        %v2894 = vpop.f32.mrf.mxu0
        %v2895 = vadd.f32 %v2848, %v2894
        %v2896 = vpop.f32.mrf.mxu0
        %2897 = vdwg.mxu0
        %2898 = vrot.lane.b32.xlu0 %v2550, 112
        %v2899 = vpop.permute.xlu0 %2898
        %2900 = vrot.lane.b32.xlu0 %v2551, 112
        %v2901 = vpop.permute.xlu0 %2900
        %v2903 = vsel %vm1377, %v2899, 0
        %v2906 = vsel %vm1377, %v2901, 0
        %2908 = vmatprep.subr.bf16.mxu0 0
        %2909 = vmatpush1.bf16.xpose.msra.mxu0 0
        %2910 = vmatprep.subr.bf16.mxu0 0
        %2911 = vmatpush1.bf16.xpose.msra.mxu0 0
        %2912 = vmatprep.subr.bf16.mxu0 0
        %2913 = vmatpush1.bf16.xpose.msra.mxu0 0
        %2914 = vmatprep.subr.bf16.mxu0 0
        %2915 = vmatpush1.bf16.xpose.msra.mxu0 0
        %2916 = vmatprep.subr.bf16.mxu0 0
        %2917 = vmatpush1.bf16.xpose.msra.mxu0 0
        %2918 = vmatprep.subr.bf16.mxu0 0
        %2919 = vmatpush1.bf16.xpose.msra.mxu0 0
        %2920 = vmatprep.subr.bf16.mxu0 0
        %2921 = vmatpush1.bf16.xpose.msra.mxu0 0
        %2922 = vmatprep.subr.bf16.mxu0 0
        %2923 = vmatpush1.bf16.xpose.msra.mxu0 %v2906
        %2924 = vmatprep.subr.bf16.mxu0 0
        %2925 = vmatpush2.bf16.xpose.msra.mxu0 0
        %2926 = vmatprep.subr.bf16.mxu0 0
        %2927 = vmatpush2.bf16.xpose.msra.mxu0 0
        %2928 = vmatprep.subr.bf16.mxu0 0
        %2929 = vmatpush2.bf16.xpose.msra.mxu0 0
        %2930 = vmatprep.subr.bf16.mxu0 0
        %2931 = vmatpush2.bf16.xpose.msra.mxu0 0
        %2932 = vmatprep.subr.bf16.mxu0 0
        %2933 = vmatpush2.bf16.xpose.msra.mxu0 0
        %2934 = vmatprep.subr.bf16.mxu0 0
        %2935 = vmatpush2.bf16.xpose.msra.mxu0 0
        %2936 = vmatprep.subr.bf16.mxu0 0
        %2937 = vmatpush2.bf16.xpose.msra.mxu0 0
        %2938 = vmatprep.subr.bf16.mxu0 0
        %2939 = vmatpush2.bf16.xpose.msra.mxu0 0
        %2940 = vmatprep.mubr.bf16.mxu0 0
        %2941 = vmatmul.mubr.bf16.gmra.mxu0 %v2903
        %v2942 = vpop.f32.mrf.mxu0
        %v2943 = vadd.f32 0.0, %v2942
        %v2944 = vpop.f32.mrf.mxu0
        %v2945 = vpop.f32.mrf.mxu0
        %v2946 = vadd.f32 0.0, %v2945
        %v2947 = vpop.f32.mrf.mxu0
        %2948 = vdwg.mxu0
        %v2949 = vmul.f32 %v2943, 0.35355338
        %v2950 = vmul.f32 %v2946, 0.35355338
        %v2951 = vadd.f32 %v2949, %v1044
        %v2952 = vadd.f32 %v2950, %v1045
        %v2953 = vsel %vm1429, %v2951, -inf
        %2954 = vmax.xlane.f32.xlu0 %v2953
        %v2955 = vpop.xlane.xlu0 %2954
        %v2956 = vsel %vm1429, %v2952, -inf
        %2957 = vmax.xlane.f32.xlu0 %v2956
        %v2958 = vpop.xlane.xlu0 %2957
        %v2959 = vsub.f32 %v2951, %v2955
        %v2960 = vsub.f32 %v2952, %v2958
        %v2961 = vmul.f32 %v2959, 1.442695
        %v2962 = vpow.pop %v2961
        %v2963 = vmul.f32 %v2960, 1.442695
        %v2964 = vpow.pop %v2963
        %v2965 = vsel %vm1429, %v2962, 0.0
        %2966 = vadd.xlane.f32.xlu0 %v2965
        %v2967 = vpop.xlane.xlu0 %2966
        %v2968 = vsel %vm1429, %v2964, 0.0
        %2969 = vadd.xlane.f32.xlu0 %v2968
        %v2970 = vpop.xlane.xlu0 %2969
        %v2971 = vrcp.pop %v2967
        %v2972 = vrcp.pop %v2970
        %v2973 = vmul.f32 %v2962, %v2971
        %v2974 = vmul.f32 %v2964, %v2972
        %v2975 = vpack.c.bf16 %v2974, %v2973
        %2976 = vrot.lane.b32.xlu0 %v2552, 112
        %v2977 = vpop.permute.xlu0 %2976
        %v2980 = vsel %vm1429, %v2975, 0
        %2982 = vmatprep.subr.bf16.mxu0 0
        %2983 = vmatpush1.bf16.msra.mxu0 0
        %2984 = vmatprep.subr.bf16.mxu0 0
        %2985 = vmatpush1.bf16.msra.mxu0 0
        %2986 = vmatprep.subr.bf16.mxu0 0
        %2987 = vmatpush1.bf16.msra.mxu0 0
        %2988 = vmatprep.subr.bf16.mxu0 0
        %2989 = vmatpush1.bf16.msra.mxu0 0
        %2990 = vmatprep.subr.bf16.mxu0 0
        %2991 = vmatpush1.bf16.msra.mxu0 0
        %2992 = vmatprep.subr.bf16.mxu0 0
        %2993 = vmatpush1.bf16.msra.mxu0 0
        %2994 = vmatprep.subr.bf16.mxu0 0
        %2995 = vmatpush1.bf16.msra.mxu0 0
        %2996 = vmatprep.subr.bf16.mxu0 0
        %2997 = vmatpush1.bf16.msra.mxu0 %v2977
        %2998 = vmatprep.subr.bf16.mxu0 0
        %2999 = vmatpush2.bf16.msra.mxu0 0
        %3000 = vmatprep.subr.bf16.mxu0 0
        %3001 = vmatpush2.bf16.msra.mxu0 0
        %3002 = vmatprep.subr.bf16.mxu0 0
        %3003 = vmatpush2.bf16.msra.mxu0 0
        %3004 = vmatprep.subr.bf16.mxu0 0
        %3005 = vmatpush2.bf16.msra.mxu0 0
        %3006 = vmatprep.subr.bf16.mxu0 0
        %3007 = vmatpush2.bf16.msra.mxu0 0
        %3008 = vmatprep.subr.bf16.mxu0 0
        %3009 = vmatpush2.bf16.msra.mxu0 0
        %3010 = vmatprep.subr.bf16.mxu0 0
        %3011 = vmatpush2.bf16.msra.mxu0 0
        %3012 = vmatprep.subr.bf16.mxu0 0
        %3013 = vmatpush2.bf16.msra.mxu0 0
        %3014 = vmatprep.mubr.bf16.mxu0 0
        %3015 = vmatmul.mubr.bf16.gmra.mxu0 %v2980
        %v3016 = vpop.f32.mrf.mxu0
        %v3017 = vadd.f32 0.0, %v3016
        %v3018 = vpop.f32.mrf.mxu0
        %v3019 = vpop.f32.mrf.mxu0
        %v3020 = vadd.f32 0.0, %v3019
        %v3021 = vpop.f32.mrf.mxu0
        %3022 = vdwg.mxu0
        %v3023 = vpack.c.bf16 %v3020, %v3017
        %v3024 = vld [vmem:[%s2672 + $0x8] sm:$0xf]
        %v3026 = vsel %vm1377, %v3023, 0
        %v3029 = vsel %vm1632, %v3024, 0
        %3031 = vmatprep.subr.bf16.mxu0 0
        %3032 = vmatpush1.bf16.msra.mxu0 0
        %3033 = vmatprep.subr.bf16.mxu0 0
        %3034 = vmatpush1.bf16.msra.mxu0 0
        %3035 = vmatprep.subr.bf16.mxu0 0
        %3036 = vmatpush1.bf16.msra.mxu0 0
        %3037 = vmatprep.subr.bf16.mxu0 0
        %3038 = vmatpush1.bf16.msra.mxu0 0
        %3039 = vmatprep.subr.bf16.mxu0 0
        %3040 = vmatpush1.bf16.msra.mxu0 0
        %3041 = vmatprep.subr.bf16.mxu0 0
        %3042 = vmatpush1.bf16.msra.mxu0 0
        %3043 = vmatprep.subr.bf16.mxu0 0
        %3044 = vmatpush1.bf16.msra.mxu0 0
        %3045 = vmatprep.subr.bf16.mxu0 0
        %3046 = vmatpush1.bf16.msra.mxu0 %v3029
        %3047 = vmatprep.subr.bf16.mxu0 0
        %3048 = vmatpush2.bf16.msra.mxu0 0
        %3049 = vmatprep.subr.bf16.mxu0 0
        %3050 = vmatpush2.bf16.msra.mxu0 0
        %3051 = vmatprep.subr.bf16.mxu0 0
        %3052 = vmatpush2.bf16.msra.mxu0 0
        %3053 = vmatprep.subr.bf16.mxu0 0
        %3054 = vmatpush2.bf16.msra.mxu0 0
        %3055 = vmatprep.subr.bf16.mxu0 0
        %3056 = vmatpush2.bf16.msra.mxu0 0
        %3057 = vmatprep.subr.bf16.mxu0 0
        %3058 = vmatpush2.bf16.msra.mxu0 0
        %3059 = vmatprep.subr.bf16.mxu0 0
        %3060 = vmatpush2.bf16.msra.mxu0 0
        %3061 = vmatprep.subr.bf16.mxu0 0
        %3062 = vmatpush2.bf16.msra.mxu0 0
        %3063 = vmatprep.mubr.bf16.mxu0 0
        %3064 = vmatmul.mubr.bf16.gmra.mxu0 %v3026
        %v3065 = vpop.f32.mrf.mxu0
        %v3066 = vadd.f32 0.0, %v3065
        %v3067 = vpop.f32.mrf.mxu0
        %v3068 = vpop.f32.mrf.mxu0
        %v3069 = vadd.f32 0.0, %v3068
        %v3070 = vpop.f32.mrf.mxu0
        %3071 = vdwg.mxu0
        %v3072 = vadd.f32 %v2892, %v3066
        %v3073 = vadd.f32 %v2895, %v3069
        %3074 = vrot.lane.b32.xlu0 %v2550, 104
        %v3075 = vpop.permute.xlu0 %3074
        %3076 = vrot.lane.b32.xlu0 %v2551, 104
        %v3077 = vpop.permute.xlu0 %3076
        %v3079 = vsel %vm1377, %v3075, 0
        %v3082 = vsel %vm1377, %v3077, 0
        %3084 = vmatprep.subr.bf16.mxu0 0
        %3085 = vmatpush1.bf16.xpose.msra.mxu0 0
        %3086 = vmatprep.subr.bf16.mxu0 0
        %3087 = vmatpush1.bf16.xpose.msra.mxu0 0
        %3088 = vmatprep.subr.bf16.mxu0 0
        %3089 = vmatpush1.bf16.xpose.msra.mxu0 0
        %3090 = vmatprep.subr.bf16.mxu0 0
        %3091 = vmatpush1.bf16.xpose.msra.mxu0 0
        %3092 = vmatprep.subr.bf16.mxu0 0
        %3093 = vmatpush1.bf16.xpose.msra.mxu0 0
        %3094 = vmatprep.subr.bf16.mxu0 0
        %3095 = vmatpush1.bf16.xpose.msra.mxu0 0
        %3096 = vmatprep.subr.bf16.mxu0 0
        %3097 = vmatpush1.bf16.xpose.msra.mxu0 0
        %3098 = vmatprep.subr.bf16.mxu0 0
        %3099 = vmatpush1.bf16.xpose.msra.mxu0 %v3082
        %3100 = vmatprep.subr.bf16.mxu0 0
        %3101 = vmatpush2.bf16.xpose.msra.mxu0 0
        %3102 = vmatprep.subr.bf16.mxu0 0
        %3103 = vmatpush2.bf16.xpose.msra.mxu0 0
        %3104 = vmatprep.subr.bf16.mxu0 0
        %3105 = vmatpush2.bf16.xpose.msra.mxu0 0
        %3106 = vmatprep.subr.bf16.mxu0 0
        %3107 = vmatpush2.bf16.xpose.msra.mxu0 0
        %3108 = vmatprep.subr.bf16.mxu0 0
        %3109 = vmatpush2.bf16.xpose.msra.mxu0 0
        %3110 = vmatprep.subr.bf16.mxu0 0
        %3111 = vmatpush2.bf16.xpose.msra.mxu0 0
        %3112 = vmatprep.subr.bf16.mxu0 0
        %3113 = vmatpush2.bf16.xpose.msra.mxu0 0
        %3114 = vmatprep.subr.bf16.mxu0 0
        %3115 = vmatpush2.bf16.xpose.msra.mxu0 0
        %3116 = vmatprep.mubr.bf16.mxu0 0
        %3117 = vmatmul.mubr.bf16.gmra.mxu0 %v3079
        %v3118 = vpop.f32.mrf.mxu0
        %v3119 = vadd.f32 0.0, %v3118
        %v3120 = vpop.f32.mrf.mxu0
        %v3121 = vpop.f32.mrf.mxu0
        %v3122 = vadd.f32 0.0, %v3121
        %v3123 = vpop.f32.mrf.mxu0
        %3124 = vdwg.mxu0
        %v3125 = vmul.f32 %v3119, 0.35355338
        %v3126 = vmul.f32 %v3122, 0.35355338
        %v3127 = vadd.f32 %v3125, %v1044
        %v3128 = vadd.f32 %v3126, %v1045
        %v3129 = vsel %vm1429, %v3127, -inf
        %3130 = vmax.xlane.f32.xlu0 %v3129
        %v3131 = vpop.xlane.xlu0 %3130
        %v3132 = vsel %vm1429, %v3128, -inf
        %3133 = vmax.xlane.f32.xlu0 %v3132
        %v3134 = vpop.xlane.xlu0 %3133
        %v3135 = vsub.f32 %v3127, %v3131
        %v3136 = vsub.f32 %v3128, %v3134
        %v3137 = vmul.f32 %v3135, 1.442695
        %v3138 = vpow.pop %v3137
        %v3139 = vmul.f32 %v3136, 1.442695
        %v3140 = vpow.pop %v3139
        %v3141 = vsel %vm1429, %v3138, 0.0
        %3142 = vadd.xlane.f32.xlu0 %v3141
        %v3143 = vpop.xlane.xlu0 %3142
        %v3144 = vsel %vm1429, %v3140, 0.0
        %3145 = vadd.xlane.f32.xlu0 %v3144
        %v3146 = vpop.xlane.xlu0 %3145
        %v3147 = vrcp.pop %v3143
        %v3148 = vrcp.pop %v3146
        %v3149 = vmul.f32 %v3138, %v3147
        %v3150 = vmul.f32 %v3140, %v3148
        %v3151 = vpack.c.bf16 %v3150, %v3149
        %3152 = vrot.lane.b32.xlu0 %v2552, 104
        %v3153 = vpop.permute.xlu0 %3152
        %v3156 = vsel %vm1429, %v3151, 0
        %3158 = vmatprep.subr.bf16.mxu0 0
        %3159 = vmatpush1.bf16.msra.mxu0 0
        %3160 = vmatprep.subr.bf16.mxu0 0
        %3161 = vmatpush1.bf16.msra.mxu0 0
        %3162 = vmatprep.subr.bf16.mxu0 0
        %3163 = vmatpush1.bf16.msra.mxu0 0
        %3164 = vmatprep.subr.bf16.mxu0 0
        %3165 = vmatpush1.bf16.msra.mxu0 0
        %3166 = vmatprep.subr.bf16.mxu0 0
        %3167 = vmatpush1.bf16.msra.mxu0 0
        %3168 = vmatprep.subr.bf16.mxu0 0
        %3169 = vmatpush1.bf16.msra.mxu0 0
        %3170 = vmatprep.subr.bf16.mxu0 0
        %3171 = vmatpush1.bf16.msra.mxu0 0
        %3172 = vmatprep.subr.bf16.mxu0 0
        %3173 = vmatpush1.bf16.msra.mxu0 %v3153
        %3174 = vmatprep.subr.bf16.mxu0 0
        %3175 = vmatpush2.bf16.msra.mxu0 0
        %3176 = vmatprep.subr.bf16.mxu0 0
        %3177 = vmatpush2.bf16.msra.mxu0 0
        %3178 = vmatprep.subr.bf16.mxu0 0
        %3179 = vmatpush2.bf16.msra.mxu0 0
        %3180 = vmatprep.subr.bf16.mxu0 0
        %3181 = vmatpush2.bf16.msra.mxu0 0
        %3182 = vmatprep.subr.bf16.mxu0 0
        %3183 = vmatpush2.bf16.msra.mxu0 0
        %3184 = vmatprep.subr.bf16.mxu0 0
        %3185 = vmatpush2.bf16.msra.mxu0 0
        %3186 = vmatprep.subr.bf16.mxu0 0
        %3187 = vmatpush2.bf16.msra.mxu0 0
        %3188 = vmatprep.subr.bf16.mxu0 0
        %3189 = vmatpush2.bf16.msra.mxu0 0
        %3190 = vmatprep.mubr.bf16.mxu0 0
        %3191 = vmatmul.mubr.bf16.gmra.mxu0 %v3156
        %v3192 = vpop.f32.mrf.mxu0
        %v3193 = vadd.f32 0.0, %v3192
        %v3194 = vpop.f32.mrf.mxu0
        %v3195 = vpop.f32.mrf.mxu0
        %v3196 = vadd.f32 0.0, %v3195
        %v3197 = vpop.f32.mrf.mxu0
        %3198 = vdwg.mxu0
        %v3199 = vpack.c.bf16 %v3196, %v3193
        %v3200 = vld [vmem:[%s2672 + $0xc] sm:$0xf]
        %v3202 = vsel %vm1377, %v3199, 0
        %v3205 = vsel %vm1632, %v3200, 0
        %3207 = vmatprep.subr.bf16.mxu0 0
        %3208 = vmatpush1.bf16.msra.mxu0 0
        %3209 = vmatprep.subr.bf16.mxu0 0
        %3210 = vmatpush1.bf16.msra.mxu0 0
        %3211 = vmatprep.subr.bf16.mxu0 0
        %3212 = vmatpush1.bf16.msra.mxu0 0
        %3213 = vmatprep.subr.bf16.mxu0 0
        %3214 = vmatpush1.bf16.msra.mxu0 0
        %3215 = vmatprep.subr.bf16.mxu0 0
        %3216 = vmatpush1.bf16.msra.mxu0 0
        %3217 = vmatprep.subr.bf16.mxu0 0
        %3218 = vmatpush1.bf16.msra.mxu0 0
        %3219 = vmatprep.subr.bf16.mxu0 0
        %3220 = vmatpush1.bf16.msra.mxu0 0
        %3221 = vmatprep.subr.bf16.mxu0 0
        %3222 = vmatpush1.bf16.msra.mxu0 %v3205
        %3223 = vmatprep.subr.bf16.mxu0 0
        %3224 = vmatpush2.bf16.msra.mxu0 0
        %3225 = vmatprep.subr.bf16.mxu0 0
        %3226 = vmatpush2.bf16.msra.mxu0 0
        %3227 = vmatprep.subr.bf16.mxu0 0
        %3228 = vmatpush2.bf16.msra.mxu0 0
        %3229 = vmatprep.subr.bf16.mxu0 0
        %3230 = vmatpush2.bf16.msra.mxu0 0
        %3231 = vmatprep.subr.bf16.mxu0 0
        %3232 = vmatpush2.bf16.msra.mxu0 0
        %3233 = vmatprep.subr.bf16.mxu0 0
        %3234 = vmatpush2.bf16.msra.mxu0 0
        %3235 = vmatprep.subr.bf16.mxu0 0
        %3236 = vmatpush2.bf16.msra.mxu0 0
        %3237 = vmatprep.subr.bf16.mxu0 0
        %3238 = vmatpush2.bf16.msra.mxu0 0
        %3239 = vmatprep.mubr.bf16.mxu0 0
        %3240 = vmatmul.mubr.bf16.gmra.mxu0 %v3202
        %v3241 = vpop.f32.mrf.mxu0
        %v3242 = vadd.f32 0.0, %v3241
        %v3243 = vpop.f32.mrf.mxu0
        %v3244 = vpop.f32.mrf.mxu0
        %v3245 = vadd.f32 0.0, %v3244
        %v3246 = vpop.f32.mrf.mxu0
        %3247 = vdwg.mxu0
        %v3248 = vadd.f32 %v3072, %v3242
        %v3249 = vadd.f32 %v3073, %v3245
        %s3250 = scalar_lea.vmem %s1008, 1
        %v3251 = vld [vmem:[%s3250] sm:$0x1]
        %v3253 = vlaneseq
        %v3254 = vshrl.u32 %v3253, 7
        %v3255 = vsub.s32 0, %v3254
        %v3256 = vrot.slane %v3251, %v3255
        %v3258 = vadd.f32 %v3248, %v3256
        %v3259 = vadd.f32 %v3249, %v3256
        %v3260 = vadd.f32 %v2346, %v3258
        %v3261 = vadd.f32 %v2347, %v3259
        %s3262 = scalar_lea.vmem %s1012, 1
        %v3263 = vld [vmem:[%s3262] sm:$0x1]
        %s3264 = scalar_lea.vmem %s1016, 1
        %v3265 = vld [vmem:[%s3264] sm:$0x1]
        %v3266 = vsel %vm1134, %v3260, 0.0
        %3267 = vadd.xlane.f32.xlu0 %v3266
        %v3268 = vpop.xlane.xlu0 %3267
        %v3269 = vsel %vm1134, %v3261, 0.0
        %3270 = vadd.xlane.f32.xlu0 %v3269
        %v3271 = vpop.xlane.xlu0 %3270
        %v3272 = vmul.f32 %v3268, %v1141
        %v3273 = vmul.f32 %v3271, %v1141
        %v3274 = vsub.f32 %v3260, %v3272
        %v3275 = vsub.f32 %v3261, %v3273
        %v3276 = vmul.f32 %v3274, %v3274
        %v3277 = vmul.f32 %v3275, %v3275
        %v3278 = vsel %vm1134, %v3276, 0.0
        %3279 = vadd.xlane.f32.xlu0 %v3278
        %v3280 = vpop.xlane.xlu0 %3279
        %v3281 = vsel %vm1134, %v3277, 0.0
        %3282 = vadd.xlane.f32.xlu0 %v3281
        %v3283 = vpop.xlane.xlu0 %3282
        %v3284 = vmul.f32 %v3280, %v1141
        %v3285 = vmul.f32 %v3283, %v1141
        %v3286 = vadd.f32 %v3284, 1e-12
        %v3287 = vadd.f32 %v3285, 1e-12
        %v3288 = vrsqrt.pop %v3286
        %v3289 = vrsqrt.pop %v3287
        %v3290 = vmul.f32 %v3274, %v3288
        %v3291 = vmul.f32 %v3275, %v3289
        %v3293 = vlaneseq
        %v3294 = vshrl.u32 %v3293, 7
        %v3295 = vsub.s32 0, %v3294
        %v3296 = vrot.slane %v3263, %v3295
        %v3298 = vmul.f32 %v3290, %v3296
        %v3299 = vmul.f32 %v3291, %v3296
        %v3301 = vlaneseq
        %v3302 = vshrl.u32 %v3301, 7
        %v3303 = vsub.s32 0, %v3302
        %v3304 = vrot.slane %v3265, %v3303
        %v3306 = vadd.f32 %v3298, %v3304
        %v3307 = vadd.f32 %v3299, %v3304
        %v3308 = vpack.c.bf16 %v3307, %v3306
        %s3309 = scalar_lea.vmem %s1021, 16
        %v3310 = vld [vmem:[%s3309] sm:$0xf]
        %v3311 = vld [vmem:[%s3309 + $0x4] sm:$0xf]
        %v3312 = vld [vmem:[%s3309 + $0x8] sm:$0xf]
        %v3313 = vld [vmem:[%s3309 + $0xc] sm:$0xf]
        %s3314 = scalar_lea.vmem %s1025, 1
        %v3315 = vld [vmem:[%s3314] sm:$0x1]
        %v3317 = vlaneseq
        %v3318 = vshrl.u32 %v3317, 7
        %v3319 = vsub.s32 0, %v3318
        %v3320 = vrot.slane %v3315, %v3319
        %v3326 = vunpack.c.l.b16 %v3310
        %v3327 = vunpack.c.l.b16 %v3311
        %v3328 = vunpack.c.l.b16 %v3312
        %v3329 = vunpack.c.l.b16 %v3313
        %v3330 = vpack.c.b16 %v3327, %v3326
        %v3331 = vpack.c.b16 %v3329, %v3328
        %v3335 = vsel %vm1134, %v3308, 0
        %3337 = vmatprep.subr.bf16.mxu0 0
        %3338 = vmatpush1.bf16.msra.mxu0 0
        %3339 = vmatprep.subr.bf16.mxu0 0
        %3340 = vmatpush1.bf16.msra.mxu0 0
        %3341 = vmatprep.subr.bf16.mxu0 0
        %3342 = vmatpush1.bf16.msra.mxu0 0
        %3343 = vmatprep.subr.bf16.mxu0 0
        %3344 = vmatpush1.bf16.msra.mxu0 0
        %3345 = vmatprep.subr.bf16.mxu0 0
        %3346 = vmatpush1.bf16.msra.mxu0 0
        %3347 = vmatprep.subr.bf16.mxu0 0
        %3348 = vmatpush1.bf16.msra.mxu0 0
        %3349 = vmatprep.subr.bf16.mxu0 0
        %3350 = vmatpush1.bf16.msra.mxu0 %v3331
        %3351 = vmatprep.subr.bf16.mxu0 0
        %3352 = vmatpush1.bf16.msra.mxu0 %v3330
        %3353 = vmatprep.subr.bf16.mxu0 0
        %3354 = vmatpush2.bf16.msra.mxu0 0
        %3355 = vmatprep.subr.bf16.mxu0 0
        %3356 = vmatpush2.bf16.msra.mxu0 0
        %3357 = vmatprep.subr.bf16.mxu0 0
        %3358 = vmatpush2.bf16.msra.mxu0 0
        %3359 = vmatprep.subr.bf16.mxu0 0
        %3360 = vmatpush2.bf16.msra.mxu0 0
        %3361 = vmatprep.subr.bf16.mxu0 0
        %3362 = vmatpush2.bf16.msra.mxu0 0
        %3363 = vmatprep.subr.bf16.mxu0 0
        %3364 = vmatpush2.bf16.msra.mxu0 0
        %3365 = vmatprep.subr.bf16.mxu0 0
        %3366 = vmatpush2.bf16.msra.mxu0 0
        %3367 = vmatprep.subr.bf16.mxu0 0
        %3368 = vmatpush2.bf16.msra.mxu0 0
        %3369 = vmatprep.mubr.bf16.mxu0 0
        %3370 = vmatmul.mubr.bf16.gmra.mxu0 %v3335
        %v3371 = vpop.f32.mrf.mxu0
        %v3372 = vadd.f32 %v3320, %v3371
        %v3373 = vpop.f32.mrf.mxu0
        %v3374 = vpop.f32.mrf.mxu0
        %v3375 = vadd.f32 %v3320, %v3374
        %v3376 = vpop.f32.mrf.mxu0
        %3377 = vdwg.mxu0
        %v3378 = vmul.f32 %v3372, 0.5
        %v3379 = vmul.f32 %v3375, 0.5
        %v3380 = vmul.f32 %v3372, 0.044715
        %v3381 = vmul.f32 %v3375, 0.044715
        %v3382 = vmul.f32 %v3380, %v3372
        %v3383 = vmul.f32 %v3381, %v3375
        %v3384 = vmul.f32 %v3382, %v3372
        %v3385 = vmul.f32 %v3383, %v3375
        %v3386 = vadd.f32 %v3372, %v3384
        %v3387 = vadd.f32 %v3375, %v3385
        %v3388 = vmul.f32 %v3386, 0.7978846
        %v3389 = vmul.f32 %v3387, 0.7978846
        %v3390 = vtanh.pop %v3388
        %v3391 = vtanh.pop %v3389
        %v3392 = vadd.f32 %v3390, 1.0
        %v3393 = vadd.f32 %v3391, 1.0
        %v3394 = vmul.f32 %v3378, %v3392
        %v3395 = vmul.f32 %v3379, %v3393
        %v3396 = vpack.c.bf16 %v3395, %v3394
        %s3397 = scalar_lea.vmem %s1030, 32
        %v3398 = vld [vmem:[%s3397] sm:$0xf]
        %v3399 = vld [vmem:[%s3397 + $0x4] sm:$0xf]
        %v3400 = vld [vmem:[%s3397 + $0x8] sm:$0xf]
        %v3401 = vld [vmem:[%s3397 + $0xc] sm:$0xf]
        %v3402 = vld [vmem:[%s3397 + $0x10] sm:$0xf]
        %v3403 = vld [vmem:[%s3397 + $0x14] sm:$0xf]
        %v3404 = vld [vmem:[%s3397 + $0x18] sm:$0xf]
        %v3405 = vld [vmem:[%s3397 + $0x1c] sm:$0xf]
        %s3406 = scalar_lea.vmem %s1034, 1
        %v3407 = vld [vmem:[%s3406] sm:$0x1]
        %v3409 = vlaneseq
        %v3410 = vshrl.u32 %v3409, 7
        %v3411 = vsub.s32 0, %v3410
        %v3412 = vrot.slane %v3407, %v3411
        %v3422 = vunpack.c.l.b16 %v3398
        %v3423 = vunpack.c.l.b16 %v3399
        %v3424 = vunpack.c.l.b16 %v3400
        %v3425 = vunpack.c.l.b16 %v3401
        %v3426 = vunpack.c.l.b16 %v3402
        %v3427 = vunpack.c.l.b16 %v3403
        %v3428 = vunpack.c.l.b16 %v3404
        %v3429 = vunpack.c.l.b16 %v3405
        %v3430 = vpack.c.b16 %v3423, %v3422
        %v3431 = vpack.c.b16 %v3425, %v3424
        %v3432 = vpack.c.b16 %v3427, %v3426
        %v3433 = vpack.c.b16 %v3429, %v3428
        %v3439 = vsel %vm2257, %v3396, 0
        %3441 = vmatprep.subr.bf16.mxu0 0
        %3442 = vmatpush1.bf16.msra.mxu0 0
        %3443 = vmatprep.subr.bf16.mxu0 0
        %3444 = vmatpush1.bf16.msra.mxu0 0
        %3445 = vmatprep.subr.bf16.mxu0 0
        %3446 = vmatpush1.bf16.msra.mxu0 0
        %3447 = vmatprep.subr.bf16.mxu0 0
        %3448 = vmatpush1.bf16.msra.mxu0 0
        %3449 = vmatprep.subr.bf16.mxu0 0
        %3450 = vmatpush1.bf16.msra.mxu0 %v3433
        %3451 = vmatprep.subr.bf16.mxu0 0
        %3452 = vmatpush1.bf16.msra.mxu0 %v3432
        %3453 = vmatprep.subr.bf16.mxu0 0
        %3454 = vmatpush1.bf16.msra.mxu0 %v3431
        %3455 = vmatprep.subr.bf16.mxu0 0
        %3456 = vmatpush1.bf16.msra.mxu0 %v3430
        %3457 = vmatprep.subr.bf16.mxu0 0
        %3458 = vmatpush2.bf16.msra.mxu0 0
        %3459 = vmatprep.subr.bf16.mxu0 0
        %3460 = vmatpush2.bf16.msra.mxu0 0
        %3461 = vmatprep.subr.bf16.mxu0 0
        %3462 = vmatpush2.bf16.msra.mxu0 0
        %3463 = vmatprep.subr.bf16.mxu0 0
        %3464 = vmatpush2.bf16.msra.mxu0 0
        %3465 = vmatprep.subr.bf16.mxu0 0
        %3466 = vmatpush2.bf16.msra.mxu0 0
        %3467 = vmatprep.subr.bf16.mxu0 0
        %3468 = vmatpush2.bf16.msra.mxu0 0
        %3469 = vmatprep.subr.bf16.mxu0 0
        %3470 = vmatpush2.bf16.msra.mxu0 0
        %3471 = vmatprep.subr.bf16.mxu0 0
        %3472 = vmatpush2.bf16.msra.mxu0 0
        %3473 = vmatprep.mubr.bf16.mxu0 0
        %3474 = vmatmul.mubr.bf16.gmra.mxu0 %v3439
        %v3475 = vpop.f32.mrf.mxu0
        %v3476 = vadd.f32 %v3412, %v3475
        %v3477 = vpop.f32.mrf.mxu0
        %v3478 = vpop.f32.mrf.mxu0
        %v3479 = vadd.f32 %v3412, %v3478
        %v3480 = vpop.f32.mrf.mxu0
        %3481 = vdwg.mxu0
        %v3482 = vadd.f32 %v3306, %v3476
        %v3483 = vadd.f32 %v3307, %v3479
        %s3484 = scalar_lea.vmem %s1038, 1
        %v3485 = vld [vmem:[%s3484] sm:$0x1]
        %s3486 = scalar_lea.vmem %s815, 1 [#allocation2]
        %v3487 = vld [vmem:[%s3486] sm:$0x1]
        %v3488 = vsel %vm1134, %v3482, 0.0
        %3489 = vadd.xlane.f32.xlu0 %v3488
        %v3490 = vpop.xlane.xlu0 %3489
        %v3491 = vsel %vm1134, %v3483, 0.0
        %3492 = vadd.xlane.f32.xlu0 %v3491
        %v3493 = vpop.xlane.xlu0 %3492
        %v3494 = vmul.f32 %v3490, %v1141
        %v3495 = vmul.f32 %v3493, %v1141
        %v3496 = vsub.f32 %v3482, %v3494
        %v3497 = vsub.f32 %v3483, %v3495
        %v3498 = vmul.f32 %v3496, %v3496
        %v3499 = vmul.f32 %v3497, %v3497
        %v3500 = vsel %vm1134, %v3498, 0.0
        %3501 = vadd.xlane.f32.xlu0 %v3500
        %v3502 = vpop.xlane.xlu0 %3501
        %v3503 = vsel %vm1134, %v3499, 0.0
        %3504 = vadd.xlane.f32.xlu0 %v3503
        %v3505 = vpop.xlane.xlu0 %3504
        %v3506 = vmul.f32 %v3502, %v1141
        %v3507 = vmul.f32 %v3505, %v1141
        %v3508 = vadd.f32 %v3506, 1e-12
        %v3509 = vadd.f32 %v3507, 1e-12
        %v3510 = vrsqrt.pop %v3508
        %v3511 = vrsqrt.pop %v3509
        %v3512 = vmul.f32 %v3496, %v3510
        %v3513 = vmul.f32 %v3497, %v3511
        %v3515 = vlaneseq
        %v3516 = vshrl.u32 %v3515, 7
        %v3517 = vsub.s32 0, %v3516
        %v3518 = vrot.slane %v3485, %v3517
        %v3520 = vmul.f32 %v3512, %v3518
        %v3521 = vmul.f32 %v3513, %v3518
        %v3523 = vlaneseq
        %v3524 = vshrl.u32 %v3523, 7
        %v3525 = vsub.s32 0, %v3524
        %v3526 = vrot.slane %v3487, %v3525
        %v3528 = vadd.f32 %v3520, %v3526
        %v3529 = vadd.f32 %v3521, %v3526
        %vm3530 = vcmask 253952
        %3531 = vst.msk [vmem:[%s1042] sm:$0x1] %vm3530, %v3528
        %3532 = vst.msk [vmem:[%s1042 + $0x1] sm:$0x1] %vm3530, %v3529
        %p3533 = scmp.lt.s32.totalorder %s36, 1
        %s3534 = scalar_select %p3533, %s36, 1
        %s3535 = smul.addr %s3534, 2
        %s3536 = scalar_lea.vmem %s22, %s3535
        // Predicated region
        $region113: #{bert_multitask_forward_mrpc.2} parent=107 // pred_check
          %p3537 = pneg %p616
        $region114: #{bert_multitask_forward_mrpc.2} parent=107 // pred_check_branch
          %3539 = sbr.rel (%p3537) target = $region116
        $region115: #{bert_multitask_forward_mrpc.2} parent=107 // pred_region
          _
        $region116: #{bert_multitask_forward_mrpc.2} parent=107 // pred_fallthru
          _
      $region108: #{bert_multitask_forward_mrpc.2} parent=5 // pred_fallthru
        _
      %p3540 = scmp.le.s32.totalorder 2, %s31
      // Predicated region
      $region117: #{bert_multitask_forward_mrpc.2} parent=5 // pred_check
        %p3541 = pneg %p3540
      $region118: #{bert_multitask_forward_mrpc.2} parent=5 // pred_check_branch
        %3543 = sbr.rel (%p3541) target = $region120
      $region119: #{bert_multitask_forward_mrpc.2} parent=5 // pred_region
        %s3544 = ssub.s32 %s31, 2
        // Predicated region
        $region121: #{bert_multitask_forward_mrpc.2} parent=119 // pred_check
          %p3545 = pneg %p622
        $region122: #{bert_multitask_forward_mrpc.2} parent=119 // pred_check_branch
          %3547 = sbr.rel (%p3545) target = $region124
        $region123: #{bert_multitask_forward_mrpc.2} parent=119 // pred_region
          %p3548 = scmp.lt.s32.totalorder %s37, 1
          %s3549 = scalar_select %p3548, %s37, 1
          %s3550 = smul.addr %s3549, 2
          %s3551 = scalar_lea.vmem %s22, %s3550
        $region124: #{bert_multitask_forward_mrpc.2} parent=119 // pred_fallthru
          _
      $region120: #{bert_multitask_forward_mrpc.2} parent=5 // pred_fallthru
        _
    $region6: #{bert_multitask_forward_mrpc.2} parent=1 // loop_footer
      %s35 = sadd.s32 1, %s31
    $region7: #{bert_multitask_forward_mrpc.2} parent=1 // loop_footer_branch
      %30 = sbr.rel target = $region3
    $region8: #{bert_multitask_forward_mrpc.2} parent=1 // loop_exit
      _
    %3552 = vsyncpa [#allocation3], 1
    %s3553 = scalar_lea.sflag [#allocation3], 1
    %3554 = vsyncpa %s3553, 1

</llo_original>
